<compile_context>
chip_gen: v7x
topology: tpu7x:2x2x1
jax: 0.10.0
libtpu: 0.0.40
codegen_flags: <defaults>
</compile_context>

<pallas_src>
import functools

import jax
import jax.numpy as jnp
from jax.experimental import pallas as pl
from jax.experimental.pallas import tpu as pltpu

HEAD_PAD = 128  # lane-dense width for the head MLP / action axis


def actor_kernel(x_ref,       # (T*B, S)        bf16, time-major rows
                 wih0_ref,    # (S, 3H)         bf16  GRU layer-0 input weights
                 wgru_ref,    # (3H, 3H)        bf16  rows: [whh0; wih1; whh1]
                 whead_ref,   # (H+128, 128)    bf16  rows: [fw1_pad; fw2_pad]
                 bias_ref,    # (1, 8H+256)     f32   [bhh0+bih0_rz | bin0 | bhh1+bih1_rz | bin1 | fb1 | fb2]
                 out_ref,     # (B, 128)        f32   softmax probs (cols >= A are 0)
                 gi0_scr,     # (T*B, 3H)       f32   VMEM scratch: hoisted layer-0 input proj
                 *, T, H, A):
    TB = x_ref.shape[0]
    B = TB // T
    HEAD = out_ref.shape[1]

    # ---- hoisted layer-0 input projection (one matmul for all T steps) ----------
    # Stored to VMEM scratch so the (T*B, 3H) result is not a live value across the
    # whole unrolled recurrence (bounds vreg pressure).
    gi0_scr[...] = jnp.dot(x_ref[...], wih0_ref[...],
                           preferred_element_type=jnp.float32)

    # ---- biases broadcast once, outside the recurrence --------------------------
    # r/z input biases were folded into bhh* on the host; only the n-column input
    # bias is applied per step (it sits outside the r*(...) term).
    bhh0 = jnp.broadcast_to(bias_ref[:, 0:3 * H], (B, 3 * H))
    bin0 = jnp.broadcast_to(bias_ref[:, 3 * H:4 * H], (B, H))
    bhh1 = jnp.broadcast_to(bias_ref[:, 4 * H:7 * H], (B, 3 * H))
    bin1 = jnp.broadcast_to(bias_ref[:, 7 * H:8 * H], (B, H))

    h0 = jnp.zeros((B, H), jnp.float32)
    h1 = jnp.zeros((B, H), jnp.float32)
    h0_bf = jnp.zeros((B, H), jnp.bfloat16)
    h1_bf = jnp.zeros((B, H), jnp.bfloat16)

    # T is small & static: full unroll (cross-step overlap handled by the LLO scheduler).
    for t in range(T):
        # layer-1 recurrent half: depends only on h1(t-1) — overlaps layer-0 work.
        gh1 = jnp.dot(h1_bf, wgru_ref[2 * H:3 * H, :],
                      preferred_element_type=jnp.float32) + bhh1

        # ---- layer 0: only the recurrent projection is on the serial chain ----
        gh0 = jnp.dot(h0_bf, wgru_ref[0:H, :],
                      preferred_element_type=jnp.float32) + bhh0
        gi0 = gi0_scr[t * B:(t + 1) * B, :]                 # static, tile-aligned slice
        r0 = jax.nn.sigmoid(gi0[:, 0:H] + gh0[:, 0:H])
        z0 = jax.nn.sigmoid(gi0[:, H:2 * H] + gh0[:, H:2 * H])
        n0 = jnp.tanh(gi0[:, 2 * H:3 * H] + bin0 + r0 * gh0[:, 2 * H:3 * H])
        h0 = (1.0 - z0) * n0 + z0 * h0
        h0_bf = h0.astype(jnp.bfloat16)                     # cast once; reused next step

        # ---- layer 1: input half (only part that waits on the fresh h0) ----
        gi1 = jnp.dot(h0_bf, wgru_ref[H:2 * H, :],
                      preferred_element_type=jnp.float32)
        r1 = jax.nn.sigmoid(gi1[:, 0:H] + gh1[:, 0:H])
        z1 = jax.nn.sigmoid(gi1[:, H:2 * H] + gh1[:, H:2 * H])
        n1 = jnp.tanh(gi1[:, 2 * H:3 * H] + bin1 + r1 * gh1[:, 2 * H:3 * H])
        h1 = (1.0 - z1) * n1 + z1 * h1
        h1_bf = h1.astype(jnp.bfloat16)                     # cast once; reused next step

    # mean over the 2 layers' final hidden states
    h_mean = (0.5 * (h0 + h1)).astype(jnp.bfloat16)

    # head MLP: Linear(H, H//2) -> ReLU -> Linear(H//2, A), lane-padded to 128 cols.
    z = jnp.dot(h_mean, whead_ref[0:H, :],
                preferred_element_type=jnp.float32) + bias_ref[:, 8 * H:8 * H + HEAD]
    z = jnp.maximum(z, 0.0)
    logit = jnp.dot(z.astype(jnp.bfloat16), whead_ref[H:H + HEAD, :],
                    preferred_element_type=jnp.float32) + bias_ref[:, 8 * H + HEAD:8 * H + 2 * HEAD]

    # mask padded action columns, then EXACT softmax (rows sum to 1 over real actions)
    col = jax.lax.broadcasted_iota(jnp.int32, (B, HEAD), 1)
    logit = jnp.where(col < A, logit, jnp.float32(-1e30))
    m = jnp.max(logit, axis=-1, keepdims=True)
    e = jnp.exp(logit - m)
    out_ref[...] = e / jnp.sum(e, axis=-1, keepdims=True)


def prepare_actor_params(params, n_action):
    """One-time, host/device prep of kernel-ready buffers (fusion, padding, bf16 casts).
    Keeps all of this off the per-call path."""
    H = params["whh0"].shape[0]
    bf = lambda a: a.astype(jnp.bfloat16)

    # GRU layer-0 input weights (S, 3H)
    wih0 = bf(params["wih0"])

    # GRU recurrent / layer-1 weights packed: rows [whh0; wih1; whh1] -> (3H, 3H)
    wgru = bf(jnp.concatenate([params["whh0"], params["wih1"], params["whh1"]], axis=0))

    # Head weights padded lane-dense and stacked: rows [fw1_pad; fw2_pad] -> (H+128, 128)
    fw1_pad = jnp.zeros((H, HEAD_PAD), jnp.float32).at[:, :H // 2].set(params["fw1"])
    fw2_pad = jnp.zeros((HEAD_PAD, HEAD_PAD), jnp.float32).at[:H // 2, :n_action].set(params["fw2"])
    whead = bf(jnp.concatenate([fw1_pad, fw2_pad], axis=0))

    # Biases packed into one lane-dense f32 row (all segment starts 128-aligned for H=128):
    #   [bhh0 + bih0(r,z) | bih0(n) | bhh1 + bih1(r,z) | bih1(n) | fb1_pad | fb2_pad]
    bih0, bhh0 = params["bih0"], params["bhh0"]
    bih1, bhh1 = params["bih1"], params["bhh1"]
    bhh0_adj = jnp.concatenate([bhh0[:, :2 * H] + bih0[:, :2 * H], bhh0[:, 2 * H:]], axis=1)
    bhh1_adj = jnp.concatenate([bhh1[:, :2 * H] + bih1[:, :2 * H], bhh1[:, 2 * H:]], axis=1)
    bin0 = bih0[:, 2 * H:]
    bin1 = bih1[:, 2 * H:]
    fb1_pad = jnp.zeros((1, HEAD_PAD), jnp.float32).at[:, :H // 2].set(params["fb1"])
    fb2_pad = jnp.zeros((1, HEAD_PAD), jnp.float32).at[:, :n_action].set(params["fb2"])
    bias = jnp.concatenate([bhh0_adj, bin0, bhh1_adj, bin1, fb1_pad, fb2_pad], axis=1)

    return {"wih0": wih0, "wgru": wgru, "whead": whead, "bias": bias}


@functools.partial(jax.jit, static_argnames=("n_action",))
def actor_forward(x, prepped, n_action):
    """x: (B, C, n_stocks, n_time) float32.  Returns (B, n_action) softmax probs."""
    wih0, wgru, whead, bias = prepped["wih0"], prepped["wgru"], prepped["whead"], prepped["bias"]
    H = wgru.shape[0] // 3
    S = wih0.shape[0]
    HEAD = whead.shape[1]

    # Glue: slicing / permutes / packing outside the kernel (unavoidable per-call work).
    x_seq = jnp.transpose(x[:, -2], (0, 2, 1))       # (B, T, S)
    B, T, _ = x_seq.shape
    B_pad = ((B + 7) // 8) * 8                       # pad batch to sublane width
    x_tbs = jnp.transpose(x_seq, (1, 0, 2))          # (T, B, S) time-major
    x_tbs = jnp.pad(x_tbs, ((0, 0), (0, B_pad - B), (0, 0)))
    x_flat = x_tbs.reshape(T * B_pad, S).astype(jnp.bfloat16)

    vmem = pl.BlockSpec(memory_space=pltpu.MemorySpace.VMEM)
    out = pl.pallas_call(
        functools.partial(actor_kernel, T=T, H=H, A=n_action),
        out_shape=jax.ShapeDtypeStruct((B_pad, HEAD), jnp.float32),
        in_specs=[vmem] * 5,
        out_specs=vmem,
        scratch_shapes=[pltpu.VMEM((T * B_pad, 3 * H), jnp.float32)],
    )(x_flat, wih0, wgru, whead, bias)
    return out[:B, :n_action]


def make_params(key, n_stocks, rnn_hidden, n_action):
    """Deterministic synthetic init (uniform, PyTorch-like scales). All f32, (in, out) layout."""
    H = rnn_hidden
    ks = jax.random.split(key, 16)
    u = lambda k, shape, s: jax.random.uniform(k, shape, jnp.float32, -s, s)
    s_gru = 1.0 / jnp.sqrt(H)
    s_fc1 = 1.0 / jnp.sqrt(H)
    s_fc2 = 1.0 / jnp.sqrt(H // 2)
    return {
        # GRU layer 0: input S -> hidden H  (weights stored transposed: (in, 3H), gates [r,z,n])
        "wih0": u(ks[0], (n_stocks, 3 * H), s_gru),
        "whh0": u(ks[1], (H, 3 * H), s_gru),
        "bih0": u(ks[2], (1, 3 * H), s_gru),
        "bhh0": u(ks[3], (1, 3 * H), s_gru),
        # GRU layer 1: input H -> hidden H
        "wih1": u(ks[4], (H, 3 * H), s_gru),
        "whh1": u(ks[5], (H, 3 * H), s_gru),
        "bih1": u(ks[6], (1, 3 * H), s_gru),
        "bhh1": u(ks[7], (1, 3 * H), s_gru),
        # head MLP
        "fw1": u(ks[8], (H, H // 2), s_fc1),
        "fb1": u(ks[9], (1, H // 2), s_fc1),
        "fw2": u(ks[10], (H // 2, n_action), s_fc2),
        "fb2": u(ks[11], (1, n_action), s_fc2),
    }


def actor_reference(x, params, n_action):
    """Pure-JAX reference of the same forward pass, mirroring the kernel's mixed precision
    (bf16 matmul operands, f32 accumulation/elementwise), split-form GRU cells."""
    x_seq = jnp.transpose(x[:, -2], (0, 2, 1))      # (B, T, S)
    B, T, _ = x_seq.shape
    H = params["whh0"].shape[0]

    def mm(a, w):
        return jnp.dot(a.astype(jnp.bfloat16), w.astype(jnp.bfloat16),
                       preferred_element_type=jnp.float32)

    def cell(x_t, h, wih, whh, bih, bhh):
        gi = mm(x_t, wih) + bih
        gh = mm(h, whh) + bhh
        r = jax.nn.sigmoid(gi[:, :H] + gh[:, :H])
        z = jax.nn.sigmoid(gi[:, H:2 * H] + gh[:, H:2 * H])
        n = jnp.tanh(gi[:, 2 * H:] + r * gh[:, 2 * H:])
        return (1.0 - z) * n + z * h

    h0 = jnp.zeros((B, H), jnp.float32)
    h1 = jnp.zeros((B, H), jnp.float32)
    for t in range(T):
        h0 = cell(x_seq[:, t], h0, params["wih0"], params["whh0"],
                  params["bih0"], params["bhh0"])
        h1 = cell(h0, h1, params["wih1"], params["whh1"],
                  params["bih1"], params["bhh1"])
    h_mean = 0.5 * (h0 + h1)
    z = jnp.maximum(mm(h_mean, params["fw1"]) + params["fb1"], 0.0)
    logit = mm(z, params["fw2"]) + params["fb2"]
    return jax.nn.softmax(logit, axis=-1)


if __name__ == "__main__":
    # Small shapes consistent with the module: nb_states = (C, n_stocks, n_time)
    B, C, S, T = 2, 3, 4, 8          # batch, channels, n_stocks, n_time
    H = 128                          # rnn_hidden_size (default)
    A = 4                            # nb_actions[0]

    key = jax.random.PRNGKey(0)
    kx, kp = jax.random.split(key)
    x = jax.random.normal(kx, (B, C, S, T), jnp.float32)
    params = make_params(kp, S, H, A)

    # One-time weight prep (fusion / padding / bf16) — hoisted off the per-call path.
    prepped = prepare_actor_params(params, A)
    prepped = jax.tree_util.tree_map(jax.block_until_ready, prepped)

    action = actor_forward(x, prepped, A)
    action = jax.block_until_ready(action)

    ref = actor_reference(x, params, A)
    assert action.shape == (B, A)
    assert bool(jnp.allclose(jnp.sum(action, axis=-1), 1.0, atol=1e-5))
    assert bool(jnp.allclose(action, ref, atol=2e-3, rtol=2e-3))

    print("KERNEL_OK")
</pallas_src>

<mosaic_0001>
module attributes {stable_mosaic.version = 11 : i64} {
  func.func @actor_kernel(%arg0: memref<64x4xbf16, #tpu.memory_space<vmem>>, %arg1: memref<4x384xbf16, #tpu.memory_space<vmem>>, %arg2: memref<384x384xbf16, #tpu.memory_space<vmem>>, %arg3: memref<256x128xbf16, #tpu.memory_space<vmem>>, %arg4: memref<1x1280xf32, #tpu.memory_space<vmem>>, %arg5: memref<8x128xf32, #tpu.memory_space<vmem>>, %arg6: memref<64x384xf32, #tpu.memory_space<vmem>>) attributes {dimension_semantics = [], scalar_prefetch = 0 : i64, scratch_operands = 1 : i64, tpu.core_type = #tpu.core_type<tc>} {
    %c0 = arith.constant 0 : index
    %c0_0 = arith.constant 0 : index
    %0 = vector.load %arg0[%c0, %c0_0] : memref<64x4xbf16, #tpu.memory_space<vmem>>, vector<64x4xbf16>
    %c0_1 = arith.constant 0 : index
    %c0_2 = arith.constant 0 : index
    %1 = vector.load %arg1[%c0_1, %c0_2] : memref<4x384xbf16, #tpu.memory_space<vmem>>, vector<4x384xbf16>
    %cst = arith.constant dense<0.000000e+00> : vector<64x384xf32>
    %2 = tpu.matmul %0, %1, %cst {dimension_numbers = #tpu.dot_dimension_numbers<[1], [0], [0], [1], [0, 0, 1, 1], [], []>} : vector<64x4xbf16>, vector<4x384xbf16>, vector<64x384xf32> -> vector<64x384xf32>
    %c0_3 = arith.constant 0 : index
    %c0_4 = arith.constant 0 : index
    %3 = vector.load %arg6[%c0_3, %c0_4] : memref<64x384xf32, #tpu.memory_space<vmem>>, vector<64x384xf32>
    tpu.vector_store %arg6[%c0_3, %c0_4], %2 {strides = array<i32>} : memref<64x384xf32, #tpu.memory_space<vmem>>, vector<64x384xf32>,
    %c0_5 = arith.constant 0 : index
    %c0_6 = arith.constant 0 : index
    %4 = vector.load %arg4[%c0_5, %c0_6] : memref<1x1280xf32, #tpu.memory_space<vmem>>, vector<1x384xf32>
    %5 = vector.shape_cast %4 : vector<1x384xf32> to vector<1x384xf32>
    %6 = vector.broadcast %5 : vector<1x384xf32> to vector<8x384xf32>
    %c0_7 = arith.constant 0 : index
    %c384 = arith.constant 384 : index
    %7 = vector.load %arg4[%c0_7, %c384] : memref<1x1280xf32, #tpu.memory_space<vmem>>, vector<1x128xf32>
    %8 = vector.shape_cast %7 : vector<1x128xf32> to vector<1x128xf32>
    %9 = vector.broadcast %8 : vector<1x128xf32> to vector<8x128xf32>
    %c0_8 = arith.constant 0 : index
    %c512 = arith.constant 512 : index
    %10 = vector.load %arg4[%c0_8, %c512] : memref<1x1280xf32, #tpu.memory_space<vmem>>, vector<1x384xf32>
    %11 = vector.shape_cast %10 : vector<1x384xf32> to vector<1x384xf32>
    %12 = vector.broadcast %11 : vector<1x384xf32> to vector<8x384xf32>
    %c0_9 = arith.constant 0 : index
    %c896 = arith.constant 896 : index
    %13 = vector.load %arg4[%c0_9, %c896] : memref<1x1280xf32, #tpu.memory_space<vmem>>, vector<1x128xf32>
    %14 = vector.shape_cast %13 : vector<1x128xf32> to vector<1x128xf32>
    %15 = vector.broadcast %14 : vector<1x128xf32> to vector<8x128xf32>
    %cst_10 = arith.constant 0.000000e+00 : f32
    %16 = vector.broadcast %cst_10 : f32 to vector<8x128xf32>
    %cst_11 = arith.constant 0.000000e+00 : f32
    %17 = vector.broadcast %cst_11 : f32 to vector<8x128xf32>
    %cst_12 = arith.constant 0.000000e+00 : bf16
    %18 = vector.broadcast %cst_12 : bf16 to vector<8x128xbf16>
    %cst_13 = arith.constant 0.000000e+00 : bf16
    %19 = vector.broadcast %cst_13 : bf16 to vector<8x128xbf16>
    %c256 = arith.constant 256 : index
    %c0_14 = arith.constant 0 : index
    %20 = vector.load %arg2[%c256, %c0_14] : memref<384x384xbf16, #tpu.memory_space<vmem>>, vector<128x384xbf16>
    %cst_15 = arith.constant dense<0.000000e+00> : vector<8x384xf32>
    %21 = tpu.matmul %19, %20, %cst_15 {dimension_numbers = #tpu.dot_dimension_numbers<[1], [0], [0], [1], [0, 0, 1, 1], [], []>} : vector<8x128xbf16>, vector<128x384xbf16>, vector<8x384xf32> -> vector<8x384xf32>
    %22 = arith.addf %21, %12 : vector<8x384xf32>
    %c0_16 = arith.constant 0 : index
    %c0_17 = arith.constant 0 : index
    %23 = vector.load %arg2[%c0_16, %c0_17] : memref<384x384xbf16, #tpu.memory_space<vmem>>, vector<128x384xbf16>
    %cst_18 = arith.constant dense<0.000000e+00> : vector<8x384xf32>
    %24 = tpu.matmul %18, %23, %cst_18 {dimension_numbers = #tpu.dot_dimension_numbers<[1], [0], [0], [1], [0, 0, 1, 1], [], []>} : vector<8x128xbf16>, vector<128x384xbf16>, vector<8x384xf32> -> vector<8x384xf32>
    %25 = arith.addf %24, %6 : vector<8x384xf32>
    %c0_19 = arith.constant 0 : index
    %c0_20 = arith.constant 0 : index
    %26 = vector.load %arg6[%c0_19, %c0_20] : memref<64x384xf32, #tpu.memory_space<vmem>>, vector<8x384xf32>
    %27 = vector.extract_strided_slice %26 {offsets = [0, 0], sizes = [8, 128], strides = [1, 1]} : vector<8x384xf32> to vector<8x128xf32>
    %28 = vector.extract_strided_slice %25 {offsets = [0, 0], sizes = [8, 128], strides = [1, 1]} : vector<8x384xf32> to vector<8x128xf32>
    %29 = arith.addf %27, %28 : vector<8x128xf32>
    %30 = arith.negf %29 : vector<8x128xf32>
    %31 = math.exp %30 : vector<8x128xf32>
    %cst_21 = arith.constant 1.000000e+00 : f32
    %32 = vector.broadcast %cst_21 : f32 to vector<8x128xf32>
    %33 = arith.addf %32, %31 : vector<8x128xf32>
    %34 = arith.divf %32, %33 : vector<8x128xf32>
    %35 = vector.extract_strided_slice %26 {offsets = [0, 128], sizes = [8, 128], strides = [1, 1]} : vector<8x384xf32> to vector<8x128xf32>
    %36 = vector.extract_strided_slice %25 {offsets = [0, 128], sizes = [8, 128], strides = [1, 1]} : vector<8x384xf32> to vector<8x128xf32>
    %37 = arith.addf %35, %36 : vector<8x128xf32>
    %38 = arith.negf %37 : vector<8x128xf32>
    %39 = math.exp %38 : vector<8x128xf32>
    %cst_22 = arith.constant 1.000000e+00 : f32
    %40 = vector.broadcast %cst_22 : f32 to vector<8x128xf32>
    %41 = arith.addf %40, %39 : vector<8x128xf32>
    %42 = arith.divf %40, %41 : vector<8x128xf32>
    %43 = vector.extract_strided_slice %26 {offsets = [0, 256], sizes = [8, 128], strides = [1, 1]} : vector<8x384xf32> to vector<8x128xf32>
    %44 = arith.addf %43, %9 : vector<8x128xf32>
    %45 = vector.extract_strided_slice %25 {offsets = [0, 256], sizes = [8, 128], strides = [1, 1]} : vector<8x384xf32> to vector<8x128xf32>
    %46 = arith.mulf %34, %45 : vector<8x128xf32>
    %47 = arith.addf %44, %46 : vector<8x128xf32>
    %48 = math.tanh %47 : vector<8x128xf32>
    %cst_23 = arith.constant 1.000000e+00 : f32
    %49 = vector.broadcast %cst_23 : f32 to vector<8x128xf32>
    %50 = arith.subf %49, %42 : vector<8x128xf32>
    %51 = arith.mulf %50, %48 : vector<8x128xf32>
    %52 = arith.mulf %42, %16 : vector<8x128xf32>
    %53 = arith.addf %51, %52 : vector<8x128xf32>
    %54 = arith.truncf %53 : vector<8x128xf32> to vector<8x128xbf16>
    %c128 = arith.constant 128 : index
    %c0_24 = arith.constant 0 : index
    %55 = vector.load %arg2[%c128, %c0_24] : memref<384x384xbf16, #tpu.memory_space<vmem>>, vector<128x384xbf16>
    %cst_25 = arith.constant dense<0.000000e+00> : vector<8x384xf32>
    %56 = tpu.matmul %54, %55, %cst_25 {dimension_numbers = #tpu.dot_dimension_numbers<[1], [0], [0], [1], [0, 0, 1, 1], [], []>} : vector<8x128xbf16>, vector<128x384xbf16>, vector<8x384xf32> -> vector<8x384xf32>
    %57 = vector.extract_strided_slice %56 {offsets = [0, 0], sizes = [8, 128], strides = [1, 1]} : vector<8x384xf32> to vector<8x128xf32>
    %58 = vector.extract_strided_slice %22 {offsets = [0, 0], sizes = [8, 128], strides = [1, 1]} : vector<8x384xf32> to vector<8x128xf32>
    %59 = arith.addf %57, %58 : vector<8x128xf32>
    %60 = arith.negf %59 : vector<8x128xf32>
    %61 = math.exp %60 : vector<8x128xf32>
    %cst_26 = arith.constant 1.000000e+00 : f32
    %62 = vector.broadcast %cst_26 : f32 to vector<8x128xf32>
    %63 = arith.addf %62, %61 : vector<8x128xf32>
    %64 = arith.divf %62, %63 : vector<8x128xf32>
    %65 = vector.extract_strided_slice %56 {offsets = [0, 128], sizes = [8, 128], strides = [1, 1]} : vector<8x384xf32> to vector<8x128xf32>
    %66 = vector.extract_strided_slice %22 {offsets = [0, 128], sizes = [8, 128], strides = [1, 1]} : vector<8x384xf32> to vector<8x128xf32>
    %67 = arith.addf %65, %66 : vector<8x128xf32>
    %68 = arith.negf %67 : vector<8x128xf32>
    %69 = math.exp %68 : vector<8x128xf32>
    %cst_27 = arith.constant 1.000000e+00 : f32
    %70 = vector.broadcast %cst_27 : f32 to vector<8x128xf32>
    %71 = arith.addf %70, %69 : vector<8x128xf32>
    %72 = arith.divf %70, %71 : vector<8x128xf32>
    %73 = vector.extract_strided_slice %56 {offsets = [0, 256], sizes = [8, 128], strides = [1, 1]} : vector<8x384xf32> to vector<8x128xf32>
    %74 = arith.addf %73, %15 : vector<8x128xf32>
    %75 = vector.extract_strided_slice %22 {offsets = [0, 256], sizes = [8, 128], strides = [1, 1]} : vector<8x384xf32> to vector<8x128xf32>
    %76 = arith.mulf %64, %75 : vector<8x128xf32>
    %77 = arith.addf %74, %76 : vector<8x128xf32>
    %78 = math.tanh %77 : vector<8x128xf32>
    %cst_28 = arith.constant 1.000000e+00 : f32
    %79 = vector.broadcast %cst_28 : f32 to vector<8x128xf32>
    %80 = arith.subf %79, %72 : vector<8x128xf32>
    %81 = arith.mulf %80, %78 : vector<8x128xf32>
    %82 = arith.mulf %72, %17 : vector<8x128xf32>
    %83 = arith.addf %81, %82 : vector<8x128xf32>
    %84 = arith.truncf %83 : vector<8x128xf32> to vector<8x128xbf16>
    %c256_29 = arith.constant 256 : index
    %c0_30 = arith.constant 0 : index
    %85 = vector.load %arg2[%c256_29, %c0_30] : memref<384x384xbf16, #tpu.memory_space<vmem>>, vector<128x384xbf16>
    %cst_31 = arith.constant dense<0.000000e+00> : vector<8x384xf32>
    %86 = tpu.matmul %84, %85, %cst_31 {dimension_numbers = #tpu.dot_dimension_numbers<[1], [0], [0], [1], [0, 0, 1, 1], [], []>} : vector<8x128xbf16>, vector<128x384xbf16>, vector<8x384xf32> -> vector<8x384xf32>
    %87 = arith.addf %86, %12 : vector<8x384xf32>
    %c0_32 = arith.constant 0 : index
    %c0_33 = arith.constant 0 : index
    %88 = vector.load %arg2[%c0_32, %c0_33] : memref<384x384xbf16, #tpu.memory_space<vmem>>, vector<128x384xbf16>
    %cst_34 = arith.constant dense<0.000000e+00> : vector<8x384xf32>
    %89 = tpu.matmul %54, %88, %cst_34 {dimension_numbers = #tpu.dot_dimension_numbers<[1], [0], [0], [1], [0, 0, 1, 1], [], []>} : vector<8x128xbf16>, vector<128x384xbf16>, vector<8x384xf32> -> vector<8x384xf32>
    %90 = arith.addf %89, %6 : vector<8x384xf32>
    %c8 = arith.constant 8 : index
    %c0_35 = arith.constant 0 : index
    %91 = vector.load %arg6[%c8, %c0_35] : memref<64x384xf32, #tpu.memory_space<vmem>>, vector<8x384xf32>
    %92 = vector.extract_strided_slice %91 {offsets = [0, 0], sizes = [8, 128], strides = [1, 1]} : vector<8x384xf32> to vector<8x128xf32>
    %93 = vector.extract_strided_slice %90 {offsets = [0, 0], sizes = [8, 128], strides = [1, 1]} : vector<8x384xf32> to vector<8x128xf32>
    %94 = arith.addf %92, %93 : vector<8x128xf32>
    %95 = arith.negf %94 : vector<8x128xf32>
    %96 = math.exp %95 : vector<8x128xf32>
    %cst_36 = arith.constant 1.000000e+00 : f32
    %97 = vector.broadcast %cst_36 : f32 to vector<8x128xf32>
    %98 = arith.addf %97, %96 : vector<8x128xf32>
    %99 = arith.divf %97, %98 : vector<8x128xf32>
    %100 = vector.extract_strided_slice %91 {offsets = [0, 128], sizes = [8, 128], strides = [1, 1]} : vector<8x384xf32> to vector<8x128xf32>
    %101 = vector.extract_strided_slice %90 {offsets = [0, 128], sizes = [8, 128], strides = [1, 1]} : vector<8x384xf32> to vector<8x128xf32>
    %102 = arith.addf %100, %101 : vector<8x128xf32>
    %103 = arith.negf %102 : vector<8x128xf32>
    %104 = math.exp %103 : vector<8x128xf32>
    %cst_37 = arith.constant 1.000000e+00 : f32
    %105 = vector.broadcast %cst_37 : f32 to vector<8x128xf32>
    %106 = arith.addf %105, %104 : vector<8x128xf32>
    %107 = arith.divf %105, %106 : vector<8x128xf32>
    %108 = vector.extract_strided_slice %91 {offsets = [0, 256], sizes = [8, 128], strides = [1, 1]} : vector<8x384xf32> to vector<8x128xf32>
    %109 = arith.addf %108, %9 : vector<8x128xf32>
    %110 = vector.extract_strided_slice %90 {offsets = [0, 256], sizes = [8, 128], strides = [1, 1]} : vector<8x384xf32> to vector<8x128xf32>
    %111 = arith.mulf %99, %110 : vector<8x128xf32>
    %112 = arith.addf %109, %111 : vector<8x128xf32>
    %113 = math.tanh %112 : vector<8x128xf32>
    %cst_38 = arith.constant 1.000000e+00 : f32
    %114 = vector.broadcast %cst_38 : f32 to vector<8x128xf32>
    %115 = arith.subf %114, %107 : vector<8x128xf32>
    %116 = arith.mulf %115, %113 : vector<8x128xf32>
    %117 = arith.mulf %107, %53 : vector<8x128xf32>
    %118 = arith.addf %116, %117 : vector<8x128xf32>
    %119 = arith.truncf %118 : vector<8x128xf32> to vector<8x128xbf16>
    %c128_39 = arith.constant 128 : index
    %c0_40 = arith.constant 0 : index
    %120 = vector.load %arg2[%c128_39, %c0_40] : memref<384x384xbf16, #tpu.memory_space<vmem>>, vector<128x384xbf16>
    %cst_41 = arith.constant dense<0.000000e+00> : vector<8x384xf32>
    %121 = tpu.matmul %119, %120, %cst_41 {dimension_numbers = #tpu.dot_dimension_numbers<[1], [0], [0], [1], [0, 0, 1, 1], [], []>} : vector<8x128xbf16>, vector<128x384xbf16>, vector<8x384xf32> -> vector<8x384xf32>
    %122 = vector.extract_strided_slice %121 {offsets = [0, 0], sizes = [8, 128], strides = [1, 1]} : vector<8x384xf32> to vector<8x128xf32>
    %123 = vector.extract_strided_slice %87 {offsets = [0, 0], sizes = [8, 128], strides = [1, 1]} : vector<8x384xf32> to vector<8x128xf32>
    %124 = arith.addf %122, %123 : vector<8x128xf32>
    %125 = arith.negf %124 : vector<8x128xf32>
    %126 = math.exp %125 : vector<8x128xf32>
    %cst_42 = arith.constant 1.000000e+00 : f32
    %127 = vector.broadcast %cst_42 : f32 to vector<8x128xf32>
    %128 = arith.addf %127, %126 : vector<8x128xf32>
    %129 = arith.divf %127, %128 : vector<8x128xf32>
    %130 = vector.extract_strided_slice %121 {offsets = [0, 128], sizes = [8, 128], strides = [1, 1]} : vector<8x384xf32> to vector<8x128xf32>
    %131 = vector.extract_strided_slice %87 {offsets = [0, 128], sizes = [8, 128], strides = [1, 1]} : vector<8x384xf32> to vector<8x128xf32>
    %132 = arith.addf %130, %131 : vector<8x128xf32>
    %133 = arith.negf %132 : vector<8x128xf32>
    %134 = math.exp %133 : vector<8x128xf32>
    %cst_43 = arith.constant 1.000000e+00 : f32
    %135 = vector.broadcast %cst_43 : f32 to vector<8x128xf32>
    %136 = arith.addf %135, %134 : vector<8x128xf32>
    %137 = arith.divf %135, %136 : vector<8x128xf32>
    %138 = vector.extract_strided_slice %121 {offsets = [0, 256], sizes = [8, 128], strides = [1, 1]} : vector<8x384xf32> to vector<8x128xf32>
    %139 = arith.addf %138, %15 : vector<8x128xf32>
    %140 = vector.extract_strided_slice %87 {offsets = [0, 256], sizes = [8, 128], strides = [1, 1]} : vector<8x384xf32> to vector<8x128xf32>
    %141 = arith.mulf %129, %140 : vector<8x128xf32>
    %142 = arith.addf %139, %141 : vector<8x128xf32>
    %143 = math.tanh %142 : vector<8x128xf32>
    %cst_44 = arith.constant 1.000000e+00 : f32
    %144 = vector.broadcast %cst_44 : f32 to vector<8x128xf32>
    %145 = arith.subf %144, %137 : vector<8x128xf32>
    %146 = arith.mulf %145, %143 : vector<8x128xf32>
    %147 = arith.mulf %137, %83 : vector<8x128xf32>
    %148 = arith.addf %146, %147 : vector<8x128xf32>
    %149 = arith.truncf %148 : vector<8x128xf32> to vector<8x128xbf16>
    %c256_45 = arith.constant 256 : index
    %c0_46 = arith.constant 0 : index
    %150 = vector.load %arg2[%c256_45, %c0_46] : memref<384x384xbf16, #tpu.memory_space<vmem>>, vector<128x384xbf16>
    %cst_47 = arith.constant dense<0.000000e+00> : vector<8x384xf32>
    %151 = tpu.matmul %149, %150, %cst_47 {dimension_numbers = #tpu.dot_dimension_numbers<[1], [0], [0], [1], [0, 0, 1, 1], [], []>} : vector<8x128xbf16>, vector<128x384xbf16>, vector<8x384xf32> -> vector<8x384xf32>
    %152 = arith.addf %151, %12 : vector<8x384xf32>
    %c0_48 = arith.constant 0 : index
    %c0_49 = arith.constant 0 : index
    %153 = vector.load %arg2[%c0_48, %c0_49] : memref<384x384xbf16, #tpu.memory_space<vmem>>, vector<128x384xbf16>
    %cst_50 = arith.constant dense<0.000000e+00> : vector<8x384xf32>
    %154 = tpu.matmul %119, %153, %cst_50 {dimension_numbers = #tpu.dot_dimension_numbers<[1], [0], [0], [1], [0, 0, 1, 1], [], []>} : vector<8x128xbf16>, vector<128x384xbf16>, vector<8x384xf32> -> vector<8x384xf32>
    %155 = arith.addf %154, %6 : vector<8x384xf32>
    %c16 = arith.constant 16 : index
    %c0_51 = arith.constant 0 : index
    %156 = vector.load %arg6[%c16, %c0_51] : memref<64x384xf32, #tpu.memory_space<vmem>>, vector<8x384xf32>
    %157 = vector.extract_strided_slice %156 {offsets = [0, 0], sizes = [8, 128], strides = [1, 1]} : vector<8x384xf32> to vector<8x128xf32>
    %158 = vector.extract_strided_slice %155 {offsets = [0, 0], sizes = [8, 128], strides = [1, 1]} : vector<8x384xf32> to vector<8x128xf32>
    %159 = arith.addf %157, %158 : vector<8x128xf32>
    %160 = arith.negf %159 : vector<8x128xf32>
    %161 = math.exp %160 : vector<8x128xf32>
    %cst_52 = arith.constant 1.000000e+00 : f32
    %162 = vector.broadcast %cst_52 : f32 to vector<8x128xf32>
    %163 = arith.addf %162, %161 : vector<8x128xf32>
    %164 = arith.divf %162, %163 : vector<8x128xf32>
    %165 = vector.extract_strided_slice %156 {offsets = [0, 128], sizes = [8, 128], strides = [1, 1]} : vector<8x384xf32> to vector<8x128xf32>
    %166 = vector.extract_strided_slice %155 {offsets = [0, 128], sizes = [8, 128], strides = [1, 1]} : vector<8x384xf32> to vector<8x128xf32>
    %167 = arith.addf %165, %166 : vector<8x128xf32>
    %168 = arith.negf %167 : vector<8x128xf32>
    %169 = math.exp %168 : vector<8x128xf32>
    %cst_53 = arith.constant 1.000000e+00 : f32
    %170 = vector.broadcast %cst_53 : f32 to vector<8x128xf32>
    %171 = arith.addf %170, %169 : vector<8x128xf32>
    %172 = arith.divf %170, %171 : vector<8x128xf32>
    %173 = vector.extract_strided_slice %156 {offsets = [0, 256], sizes = [8, 128], strides = [1, 1]} : vector<8x384xf32> to vector<8x128xf32>
    %174 = arith.addf %173, %9 : vector<8x128xf32>
    %175 = vector.extract_strided_slice %155 {offsets = [0, 256], sizes = [8, 128], strides = [1, 1]} : vector<8x384xf32> to vector<8x128xf32>
    %176 = arith.mulf %164, %175 : vector<8x128xf32>
    %177 = arith.addf %174, %176 : vector<8x128xf32>
    %178 = math.tanh %177 : vector<8x128xf32>
    %cst_54 = arith.constant 1.000000e+00 : f32
    %179 = vector.broadcast %cst_54 : f32 to vector<8x128xf32>
    %180 = arith.subf %179, %172 : vector<8x128xf32>
    %181 = arith.mulf %180, %178 : vector<8x128xf32>
    %182 = arith.mulf %172, %118 : vector<8x128xf32>
    %183 = arith.addf %181, %182 : vector<8x128xf32>
    %184 = arith.truncf %183 : vector<8x128xf32> to vector<8x128xbf16>
    %c128_55 = arith.constant 128 : index
    %c0_56 = arith.constant 0 : index
    %185 = vector.load %arg2[%c128_55, %c0_56] : memref<384x384xbf16, #tpu.memory_space<vmem>>, vector<128x384xbf16>
    %cst_57 = arith.constant dense<0.000000e+00> : vector<8x384xf32>
    %186 = tpu.matmul %184, %185, %cst_57 {dimension_numbers = #tpu.dot_dimension_numbers<[1], [0], [0], [1], [0, 0, 1, 1], [], []>} : vector<8x128xbf16>, vector<128x384xbf16>, vector<8x384xf32> -> vector<8x384xf32>
    %187 = vector.extract_strided_slice %186 {offsets = [0, 0], sizes = [8, 128], strides = [1, 1]} : vector<8x384xf32> to vector<8x128xf32>
    %188 = vector.extract_strided_slice %152 {offsets = [0, 0], sizes = [8, 128], strides = [1, 1]} : vector<8x384xf32> to vector<8x128xf32>
    %189 = arith.addf %187, %188 : vector<8x128xf32>
    %190 = arith.negf %189 : vector<8x128xf32>
    %191 = math.exp %190 : vector<8x128xf32>
    %cst_58 = arith.constant 1.000000e+00 : f32
    %192 = vector.broadcast %cst_58 : f32 to vector<8x128xf32>
    %193 = arith.addf %192, %191 : vector<8x128xf32>
    %194 = arith.divf %192, %193 : vector<8x128xf32>
    %195 = vector.extract_strided_slice %186 {offsets = [0, 128], sizes = [8, 128], strides = [1, 1]} : vector<8x384xf32> to vector<8x128xf32>
    %196 = vector.extract_strided_slice %152 {offsets = [0, 128], sizes = [8, 128], strides = [1, 1]} : vector<8x384xf32> to vector<8x128xf32>
    %197 = arith.addf %195, %196 : vector<8x128xf32>
    %198 = arith.negf %197 : vector<8x128xf32>
    %199 = math.exp %198 : vector<8x128xf32>
    %cst_59 = arith.constant 1.000000e+00 : f32
    %200 = vector.broadcast %cst_59 : f32 to vector<8x128xf32>
    %201 = arith.addf %200, %199 : vector<8x128xf32>
    %202 = arith.divf %200, %201 : vector<8x128xf32>
    %203 = vector.extract_strided_slice %186 {offsets = [0, 256], sizes = [8, 128], strides = [1, 1]} : vector<8x384xf32> to vector<8x128xf32>
    %204 = arith.addf %203, %15 : vector<8x128xf32>
    %205 = vector.extract_strided_slice %152 {offsets = [0, 256], sizes = [8, 128], strides = [1, 1]} : vector<8x384xf32> to vector<8x128xf32>
    %206 = arith.mulf %194, %205 : vector<8x128xf32>
    %207 = arith.addf %204, %206 : vector<8x128xf32>
    %208 = math.tanh %207 : vector<8x128xf32>
    %cst_60 = arith.constant 1.000000e+00 : f32
    %209 = vector.broadcast %cst_60 : f32 to vector<8x128xf32>
    %210 = arith.subf %209, %202 : vector<8x128xf32>
    %211 = arith.mulf %210, %208 : vector<8x128xf32>
    %212 = arith.mulf %202, %148 : vector<8x128xf32>
    %213 = arith.addf %211, %212 : vector<8x128xf32>
    %214 = arith.truncf %213 : vector<8x128xf32> to vector<8x128xbf16>
    %c256_61 = arith.constant 256 : index
    %c0_62 = arith.constant 0 : index
    %215 = vector.load %arg2[%c256_61, %c0_62] : memref<384x384xbf16, #tpu.memory_space<vmem>>, vector<128x384xbf16>
    %cst_63 = arith.constant dense<0.000000e+00> : vector<8x384xf32>
    %216 = tpu.matmul %214, %215, %cst_63 {dimension_numbers = #tpu.dot_dimension_numbers<[1], [0], [0], [1], [0, 0, 1, 1], [], []>} : vector<8x128xbf16>, vector<128x384xbf16>, vector<8x384xf32> -> vector<8x384xf32>
    %217 = arith.addf %216, %12 : vector<8x384xf32>
    %c0_64 = arith.constant 0 : index
    %c0_65 = arith.constant 0 : index
    %218 = vector.load %arg2[%c0_64, %c0_65] : memref<384x384xbf16, #tpu.memory_space<vmem>>, vector<128x384xbf16>
    %cst_66 = arith.constant dense<0.000000e+00> : vector<8x384xf32>
    %219 = tpu.matmul %184, %218, %cst_66 {dimension_numbers = #tpu.dot_dimension_numbers<[1], [0], [0], [1], [0, 0, 1, 1], [], []>} : vector<8x128xbf16>, vector<128x384xbf16>, vector<8x384xf32> -> vector<8x384xf32>
    %220 = arith.addf %219, %6 : vector<8x384xf32>
    %c24 = arith.constant 24 : index
    %c0_67 = arith.constant 0 : index
    %221 = vector.load %arg6[%c24, %c0_67] : memref<64x384xf32, #tpu.memory_space<vmem>>, vector<8x384xf32>
    %222 = vector.extract_strided_slice %221 {offsets = [0, 0], sizes = [8, 128], strides = [1, 1]} : vector<8x384xf32> to vector<8x128xf32>
    %223 = vector.extract_strided_slice %220 {offsets = [0, 0], sizes = [8, 128], strides = [1, 1]} : vector<8x384xf32> to vector<8x128xf32>
    %224 = arith.addf %222, %223 : vector<8x128xf32>
    %225 = arith.negf %224 : vector<8x128xf32>
    %226 = math.exp %225 : vector<8x128xf32>
    %cst_68 = arith.constant 1.000000e+00 : f32
    %227 = vector.broadcast %cst_68 : f32 to vector<8x128xf32>
    %228 = arith.addf %227, %226 : vector<8x128xf32>
    %229 = arith.divf %227, %228 : vector<8x128xf32>
    %230 = vector.extract_strided_slice %221 {offsets = [0, 128], sizes = [8, 128], strides = [1, 1]} : vector<8x384xf32> to vector<8x128xf32>
    %231 = vector.extract_strided_slice %220 {offsets = [0, 128], sizes = [8, 128], strides = [1, 1]} : vector<8x384xf32> to vector<8x128xf32>
    %232 = arith.addf %230, %231 : vector<8x128xf32>
    %233 = arith.negf %232 : vector<8x128xf32>
    %234 = math.exp %233 : vector<8x128xf32>
    %cst_69 = arith.constant 1.000000e+00 : f32
    %235 = vector.broadcast %cst_69 : f32 to vector<8x128xf32>
    %236 = arith.addf %235, %234 : vector<8x128xf32>
    %237 = arith.divf %235, %236 : vector<8x128xf32>
    %238 = vector.extract_strided_slice %221 {offsets = [0, 256], sizes = [8, 128], strides = [1, 1]} : vector<8x384xf32> to vector<8x128xf32>
    %239 = arith.addf %238, %9 : vector<8x128xf32>
    %240 = vector.extract_strided_slice %220 {offsets = [0, 256], sizes = [8, 128], strides = [1, 1]} : vector<8x384xf32> to vector<8x128xf32>
    %241 = arith.mulf %229, %240 : vector<8x128xf32>
    %242 = arith.addf %239, %241 : vector<8x128xf32>
    %243 = math.tanh %242 : vector<8x128xf32>
    %cst_70 = arith.constant 1.000000e+00 : f32
    %244 = vector.broadcast %cst_70 : f32 to vector<8x128xf32>
    %245 = arith.subf %244, %237 : vector<8x128xf32>
    %246 = arith.mulf %245, %243 : vector<8x128xf32>
    %247 = arith.mulf %237, %183 : vector<8x128xf32>
    %248 = arith.addf %246, %247 : vector<8x128xf32>
    %249 = arith.truncf %248 : vector<8x128xf32> to vector<8x128xbf16>
    %c128_71 = arith.constant 128 : index
    %c0_72 = arith.constant 0 : index
    %250 = vector.load %arg2[%c128_71, %c0_72] : memref<384x384xbf16, #tpu.memory_space<vmem>>, vector<128x384xbf16>
    %cst_73 = arith.constant dense<0.000000e+00> : vector<8x384xf32>
    %251 = tpu.matmul %249, %250, %cst_73 {dimension_numbers = #tpu.dot_dimension_numbers<[1], [0], [0], [1], [0, 0, 1, 1], [], []>} : vector<8x128xbf16>, vector<128x384xbf16>, vector<8x384xf32> -> vector<8x384xf32>
    %252 = vector.extract_strided_slice %251 {offsets = [0, 0], sizes = [8, 128], strides = [1, 1]} : vector<8x384xf32> to vector<8x128xf32>
    %253 = vector.extract_strided_slice %217 {offsets = [0, 0], sizes = [8, 128], strides = [1, 1]} : vector<8x384xf32> to vector<8x128xf32>
    %254 = arith.addf %252, %253 : vector<8x128xf32>
    %255 = arith.negf %254 : vector<8x128xf32>
    %256 = math.exp %255 : vector<8x128xf32>
    %cst_74 = arith.constant 1.000000e+00 : f32
    %257 = vector.broadcast %cst_74 : f32 to vector<8x128xf32>
    %258 = arith.addf %257, %256 : vector<8x128xf32>
    %259 = arith.divf %257, %258 : vector<8x128xf32>
    %260 = vector.extract_strided_slice %251 {offsets = [0, 128], sizes = [8, 128], strides = [1, 1]} : vector<8x384xf32> to vector<8x128xf32>
    %261 = vector.extract_strided_slice %217 {offsets = [0, 128], sizes = [8, 128], strides = [1, 1]} : vector<8x384xf32> to vector<8x128xf32>
    %262 = arith.addf %260, %261 : vector<8x128xf32>
    %263 = arith.negf %262 : vector<8x128xf32>
    %264 = math.exp %263 : vector<8x128xf32>
    %cst_75 = arith.constant 1.000000e+00 : f32
    %265 = vector.broadcast %cst_75 : f32 to vector<8x128xf32>
    %266 = arith.addf %265, %264 : vector<8x128xf32>
    %267 = arith.divf %265, %266 : vector<8x128xf32>
    %268 = vector.extract_strided_slice %251 {offsets = [0, 256], sizes = [8, 128], strides = [1, 1]} : vector<8x384xf32> to vector<8x128xf32>
    %269 = arith.addf %268, %15 : vector<8x128xf32>
    %270 = vector.extract_strided_slice %217 {offsets = [0, 256], sizes = [8, 128], strides = [1, 1]} : vector<8x384xf32> to vector<8x128xf32>
    %271 = arith.mulf %259, %270 : vector<8x128xf32>
    %272 = arith.addf %269, %271 : vector<8x128xf32>
    %273 = math.tanh %272 : vector<8x128xf32>
    %cst_76 = arith.constant 1.000000e+00 : f32
    %274 = vector.broadcast %cst_76 : f32 to vector<8x128xf32>
    %275 = arith.subf %274, %267 : vector<8x128xf32>
    %276 = arith.mulf %275, %273 : vector<8x128xf32>
    %277 = arith.mulf %267, %213 : vector<8x128xf32>
    %278 = arith.addf %276, %277 : vector<8x128xf32>
    %279 = arith.truncf %278 : vector<8x128xf32> to vector<8x128xbf16>
    %c256_77 = arith.constant 256 : index
    %c0_78 = arith.constant 0 : index
    %280 = vector.load %arg2[%c256_77, %c0_78] : memref<384x384xbf16, #tpu.memory_space<vmem>>, vector<128x384xbf16>
    %cst_79 = arith.constant dense<0.000000e+00> : vector<8x384xf32>
    %281 = tpu.matmul %279, %280, %cst_79 {dimension_numbers = #tpu.dot_dimension_numbers<[1], [0], [0], [1], [0, 0, 1, 1], [], []>} : vector<8x128xbf16>, vector<128x384xbf16>, vector<8x384xf32> -> vector<8x384xf32>
    %282 = arith.addf %281, %12 : vector<8x384xf32>
    %c0_80 = arith.constant 0 : index
    %c0_81 = arith.constant 0 : index
    %283 = vector.load %arg2[%c0_80, %c0_81] : memref<384x384xbf16, #tpu.memory_space<vmem>>, vector<128x384xbf16>
    %cst_82 = arith.constant dense<0.000000e+00> : vector<8x384xf32>
    %284 = tpu.matmul %249, %283, %cst_82 {dimension_numbers = #tpu.dot_dimension_numbers<[1], [0], [0], [1], [0, 0, 1, 1], [], []>} : vector<8x128xbf16>, vector<128x384xbf16>, vector<8x384xf32> -> vector<8x384xf32>
    %285 = arith.addf %284, %6 : vector<8x384xf32>
    %c32 = arith.constant 32 : index
    %c0_83 = arith.constant 0 : index
    %286 = vector.load %arg6[%c32, %c0_83] : memref<64x384xf32, #tpu.memory_space<vmem>>, vector<8x384xf32>
    %287 = vector.extract_strided_slice %286 {offsets = [0, 0], sizes = [8, 128], strides = [1, 1]} : vector<8x384xf32> to vector<8x128xf32>
    %288 = vector.extract_strided_slice %285 {offsets = [0, 0], sizes = [8, 128], strides = [1, 1]} : vector<8x384xf32> to vector<8x128xf32>
    %289 = arith.addf %287, %288 : vector<8x128xf32>
    %290 = arith.negf %289 : vector<8x128xf32>
    %291 = math.exp %290 : vector<8x128xf32>
    %cst_84 = arith.constant 1.000000e+00 : f32
    %292 = vector.broadcast %cst_84 : f32 to vector<8x128xf32>
    %293 = arith.addf %292, %291 : vector<8x128xf32>
    %294 = arith.divf %292, %293 : vector<8x128xf32>
    %295 = vector.extract_strided_slice %286 {offsets = [0, 128], sizes = [8, 128], strides = [1, 1]} : vector<8x384xf32> to vector<8x128xf32>
    %296 = vector.extract_strided_slice %285 {offsets = [0, 128], sizes = [8, 128], strides = [1, 1]} : vector<8x384xf32> to vector<8x128xf32>
    %297 = arith.addf %295, %296 : vector<8x128xf32>
    %298 = arith.negf %297 : vector<8x128xf32>
    %299 = math.exp %298 : vector<8x128xf32>
    %cst_85 = arith.constant 1.000000e+00 : f32
    %300 = vector.broadcast %cst_85 : f32 to vector<8x128xf32>
    %301 = arith.addf %300, %299 : vector<8x128xf32>
    %302 = arith.divf %300, %301 : vector<8x128xf32>
    %303 = vector.extract_strided_slice %286 {offsets = [0, 256], sizes = [8, 128], strides = [1, 1]} : vector<8x384xf32> to vector<8x128xf32>
    %304 = arith.addf %303, %9 : vector<8x128xf32>
    %305 = vector.extract_strided_slice %285 {offsets = [0, 256], sizes = [8, 128], strides = [1, 1]} : vector<8x384xf32> to vector<8x128xf32>
    %306 = arith.mulf %294, %305 : vector<8x128xf32>
    %307 = arith.addf %304, %306 : vector<8x128xf32>
    %308 = math.tanh %307 : vector<8x128xf32>
    %cst_86 = arith.constant 1.000000e+00 : f32
    %309 = vector.broadcast %cst_86 : f32 to vector<8x128xf32>
    %310 = arith.subf %309, %302 : vector<8x128xf32>
    %311 = arith.mulf %310, %308 : vector<8x128xf32>
    %312 = arith.mulf %302, %248 : vector<8x128xf32>
    %313 = arith.addf %311, %312 : vector<8x128xf32>
    %314 = arith.truncf %313 : vector<8x128xf32> to vector<8x128xbf16>
    %c128_87 = arith.constant 128 : index
    %c0_88 = arith.constant 0 : index
    %315 = vector.load %arg2[%c128_87, %c0_88] : memref<384x384xbf16, #tpu.memory_space<vmem>>, vector<128x384xbf16>
    %cst_89 = arith.constant dense<0.000000e+00> : vector<8x384xf32>
    %316 = tpu.matmul %314, %315, %cst_89 {dimension_numbers = #tpu.dot_dimension_numbers<[1], [0], [0], [1], [0, 0, 1, 1], [], []>} : vector<8x128xbf16>, vector<128x384xbf16>, vector<8x384xf32> -> vector<8x384xf32>
    %317 = vector.extract_strided_slice %316 {offsets = [0, 0], sizes = [8, 128], strides = [1, 1]} : vector<8x384xf32> to vector<8x128xf32>
    %318 = vector.extract_strided_slice %282 {offsets = [0, 0], sizes = [8, 128], strides = [1, 1]} : vector<8x384xf32> to vector<8x128xf32>
    %319 = arith.addf %317, %318 : vector<8x128xf32>
    %320 = arith.negf %319 : vector<8x128xf32>
    %321 = math.exp %320 : vector<8x128xf32>
    %cst_90 = arith.constant 1.000000e+00 : f32
    %322 = vector.broadcast %cst_90 : f32 to vector<8x128xf32>
    %323 = arith.addf %322, %321 : vector<8x128xf32>
    %324 = arith.divf %322, %323 : vector<8x128xf32>
    %325 = vector.extract_strided_slice %316 {offsets = [0, 128], sizes = [8, 128], strides = [1, 1]} : vector<8x384xf32> to vector<8x128xf32>
    %326 = vector.extract_strided_slice %282 {offsets = [0, 128], sizes = [8, 128], strides = [1, 1]} : vector<8x384xf32> to vector<8x128xf32>
    %327 = arith.addf %325, %326 : vector<8x128xf32>
    %328 = arith.negf %327 : vector<8x128xf32>
    %329 = math.exp %328 : vector<8x128xf32>
    %cst_91 = arith.constant 1.000000e+00 : f32
    %330 = vector.broadcast %cst_91 : f32 to vector<8x128xf32>
    %331 = arith.addf %330, %329 : vector<8x128xf32>
    %332 = arith.divf %330, %331 : vector<8x128xf32>
    %333 = vector.extract_strided_slice %316 {offsets = [0, 256], sizes = [8, 128], strides = [1, 1]} : vector<8x384xf32> to vector<8x128xf32>
    %334 = arith.addf %333, %15 : vector<8x128xf32>
    %335 = vector.extract_strided_slice %282 {offsets = [0, 256], sizes = [8, 128], strides = [1, 1]} : vector<8x384xf32> to vector<8x128xf32>
    %336 = arith.mulf %324, %335 : vector<8x128xf32>
    %337 = arith.addf %334, %336 : vector<8x128xf32>
    %338 = math.tanh %337 : vector<8x128xf32>
    %cst_92 = arith.constant 1.000000e+00 : f32
    %339 = vector.broadcast %cst_92 : f32 to vector<8x128xf32>
    %340 = arith.subf %339, %332 : vector<8x128xf32>
    %341 = arith.mulf %340, %338 : vector<8x128xf32>
    %342 = arith.mulf %332, %278 : vector<8x128xf32>
    %343 = arith.addf %341, %342 : vector<8x128xf32>
    %344 = arith.truncf %343 : vector<8x128xf32> to vector<8x128xbf16>
    %c256_93 = arith.constant 256 : index
    %c0_94 = arith.constant 0 : index
    %345 = vector.load %arg2[%c256_93, %c0_94] : memref<384x384xbf16, #tpu.memory_space<vmem>>, vector<128x384xbf16>
    %cst_95 = arith.constant dense<0.000000e+00> : vector<8x384xf32>
    %346 = tpu.matmul %344, %345, %cst_95 {dimension_numbers = #tpu.dot_dimension_numbers<[1], [0], [0], [1], [0, 0, 1, 1], [], []>} : vector<8x128xbf16>, vector<128x384xbf16>, vector<8x384xf32> -> vector<8x384xf32>
    %347 = arith.addf %346, %12 : vector<8x384xf32>
    %c0_96 = arith.constant 0 : index
    %c0_97 = arith.constant 0 : index
    %348 = vector.load %arg2[%c0_96, %c0_97] : memref<384x384xbf16, #tpu.memory_space<vmem>>, vector<128x384xbf16>
    %cst_98 = arith.constant dense<0.000000e+00> : vector<8x384xf32>
    %349 = tpu.matmul %314, %348, %cst_98 {dimension_numbers = #tpu.dot_dimension_numbers<[1], [0], [0], [1], [0, 0, 1, 1], [], []>} : vector<8x128xbf16>, vector<128x384xbf16>, vector<8x384xf32> -> vector<8x384xf32>
    %350 = arith.addf %349, %6 : vector<8x384xf32>
    %c40 = arith.constant 40 : index
    %c0_99 = arith.constant 0 : index
    %351 = vector.load %arg6[%c40, %c0_99] : memref<64x384xf32, #tpu.memory_space<vmem>>, vector<8x384xf32>
    %352 = vector.extract_strided_slice %351 {offsets = [0, 0], sizes = [8, 128], strides = [1, 1]} : vector<8x384xf32> to vector<8x128xf32>
    %353 = vector.extract_strided_slice %350 {offsets = [0, 0], sizes = [8, 128], strides = [1, 1]} : vector<8x384xf32> to vector<8x128xf32>
    %354 = arith.addf %352, %353 : vector<8x128xf32>
    %355 = arith.negf %354 : vector<8x128xf32>
    %356 = math.exp %355 : vector<8x128xf32>
    %cst_100 = arith.constant 1.000000e+00 : f32
    %357 = vector.broadcast %cst_100 : f32 to vector<8x128xf32>
    %358 = arith.addf %357, %356 : vector<8x128xf32>
    %359 = arith.divf %357, %358 : vector<8x128xf32>
    %360 = vector.extract_strided_slice %351 {offsets = [0, 128], sizes = [8, 128], strides = [1, 1]} : vector<8x384xf32> to vector<8x128xf32>
    %361 = vector.extract_strided_slice %350 {offsets = [0, 128], sizes = [8, 128], strides = [1, 1]} : vector<8x384xf32> to vector<8x128xf32>
    %362 = arith.addf %360, %361 : vector<8x128xf32>
    %363 = arith.negf %362 : vector<8x128xf32>
    %364 = math.exp %363 : vector<8x128xf32>
    %cst_101 = arith.constant 1.000000e+00 : f32
    %365 = vector.broadcast %cst_101 : f32 to vector<8x128xf32>
    %366 = arith.addf %365, %364 : vector<8x128xf32>
    %367 = arith.divf %365, %366 : vector<8x128xf32>
    %368 = vector.extract_strided_slice %351 {offsets = [0, 256], sizes = [8, 128], strides = [1, 1]} : vector<8x384xf32> to vector<8x128xf32>
    %369 = arith.addf %368, %9 : vector<8x128xf32>
    %370 = vector.extract_strided_slice %350 {offsets = [0, 256], sizes = [8, 128], strides = [1, 1]} : vector<8x384xf32> to vector<8x128xf32>
    %371 = arith.mulf %359, %370 : vector<8x128xf32>
    %372 = arith.addf %369, %371 : vector<8x128xf32>
    %373 = math.tanh %372 : vector<8x128xf32>
    %cst_102 = arith.constant 1.000000e+00 : f32
    %374 = vector.broadcast %cst_102 : f32 to vector<8x128xf32>
    %375 = arith.subf %374, %367 : vector<8x128xf32>
    %376 = arith.mulf %375, %373 : vector<8x128xf32>
    %377 = arith.mulf %367, %313 : vector<8x128xf32>
    %378 = arith.addf %376, %377 : vector<8x128xf32>
    %379 = arith.truncf %378 : vector<8x128xf32> to vector<8x128xbf16>
    %c128_103 = arith.constant 128 : index
    %c0_104 = arith.constant 0 : index
    %380 = vector.load %arg2[%c128_103, %c0_104] : memref<384x384xbf16, #tpu.memory_space<vmem>>, vector<128x384xbf16>
    %cst_105 = arith.constant dense<0.000000e+00> : vector<8x384xf32>
    %381 = tpu.matmul %379, %380, %cst_105 {dimension_numbers = #tpu.dot_dimension_numbers<[1], [0], [0], [1], [0, 0, 1, 1], [], []>} : vector<8x128xbf16>, vector<128x384xbf16>, vector<8x384xf32> -> vector<8x384xf32>
    %382 = vector.extract_strided_slice %381 {offsets = [0, 0], sizes = [8, 128], strides = [1, 1]} : vector<8x384xf32> to vector<8x128xf32>
    %383 = vector.extract_strided_slice %347 {offsets = [0, 0], sizes = [8, 128], strides = [1, 1]} : vector<8x384xf32> to vector<8x128xf32>
    %384 = arith.addf %382, %383 : vector<8x128xf32>
    %385 = arith.negf %384 : vector<8x128xf32>
    %386 = math.exp %385 : vector<8x128xf32>
    %cst_106 = arith.constant 1.000000e+00 : f32
    %387 = vector.broadcast %cst_106 : f32 to vector<8x128xf32>
    %388 = arith.addf %387, %386 : vector<8x128xf32>
    %389 = arith.divf %387, %388 : vector<8x128xf32>
    %390 = vector.extract_strided_slice %381 {offsets = [0, 128], sizes = [8, 128], strides = [1, 1]} : vector<8x384xf32> to vector<8x128xf32>
    %391 = vector.extract_strided_slice %347 {offsets = [0, 128], sizes = [8, 128], strides = [1, 1]} : vector<8x384xf32> to vector<8x128xf32>
    %392 = arith.addf %390, %391 : vector<8x128xf32>
    %393 = arith.negf %392 : vector<8x128xf32>
    %394 = math.exp %393 : vector<8x128xf32>
    %cst_107 = arith.constant 1.000000e+00 : f32
    %395 = vector.broadcast %cst_107 : f32 to vector<8x128xf32>
    %396 = arith.addf %395, %394 : vector<8x128xf32>
    %397 = arith.divf %395, %396 : vector<8x128xf32>
    %398 = vector.extract_strided_slice %381 {offsets = [0, 256], sizes = [8, 128], strides = [1, 1]} : vector<8x384xf32> to vector<8x128xf32>
    %399 = arith.addf %398, %15 : vector<8x128xf32>
    %400 = vector.extract_strided_slice %347 {offsets = [0, 256], sizes = [8, 128], strides = [1, 1]} : vector<8x384xf32> to vector<8x128xf32>
    %401 = arith.mulf %389, %400 : vector<8x128xf32>
    %402 = arith.addf %399, %401 : vector<8x128xf32>
    %403 = math.tanh %402 : vector<8x128xf32>
    %cst_108 = arith.constant 1.000000e+00 : f32
    %404 = vector.broadcast %cst_108 : f32 to vector<8x128xf32>
    %405 = arith.subf %404, %397 : vector<8x128xf32>
    %406 = arith.mulf %405, %403 : vector<8x128xf32>
    %407 = arith.mulf %397, %343 : vector<8x128xf32>
    %408 = arith.addf %406, %407 : vector<8x128xf32>
    %409 = arith.truncf %408 : vector<8x128xf32> to vector<8x128xbf16>
    %c256_109 = arith.constant 256 : index
    %c0_110 = arith.constant 0 : index
    %410 = vector.load %arg2[%c256_109, %c0_110] : memref<384x384xbf16, #tpu.memory_space<vmem>>, vector<128x384xbf16>
    %cst_111 = arith.constant dense<0.000000e+00> : vector<8x384xf32>
    %411 = tpu.matmul %409, %410, %cst_111 {dimension_numbers = #tpu.dot_dimension_numbers<[1], [0], [0], [1], [0, 0, 1, 1], [], []>} : vector<8x128xbf16>, vector<128x384xbf16>, vector<8x384xf32> -> vector<8x384xf32>
    %412 = arith.addf %411, %12 : vector<8x384xf32>
    %c0_112 = arith.constant 0 : index
    %c0_113 = arith.constant 0 : index
    %413 = vector.load %arg2[%c0_112, %c0_113] : memref<384x384xbf16, #tpu.memory_space<vmem>>, vector<128x384xbf16>
    %cst_114 = arith.constant dense<0.000000e+00> : vector<8x384xf32>
    %414 = tpu.matmul %379, %413, %cst_114 {dimension_numbers = #tpu.dot_dimension_numbers<[1], [0], [0], [1], [0, 0, 1, 1], [], []>} : vector<8x128xbf16>, vector<128x384xbf16>, vector<8x384xf32> -> vector<8x384xf32>
    %415 = arith.addf %414, %6 : vector<8x384xf32>
    %c48 = arith.constant 48 : index
    %c0_115 = arith.constant 0 : index
    %416 = vector.load %arg6[%c48, %c0_115] : memref<64x384xf32, #tpu.memory_space<vmem>>, vector<8x384xf32>
    %417 = vector.extract_strided_slice %416 {offsets = [0, 0], sizes = [8, 128], strides = [1, 1]} : vector<8x384xf32> to vector<8x128xf32>
    %418 = vector.extract_strided_slice %415 {offsets = [0, 0], sizes = [8, 128], strides = [1, 1]} : vector<8x384xf32> to vector<8x128xf32>
    %419 = arith.addf %417, %418 : vector<8x128xf32>
    %420 = arith.negf %419 : vector<8x128xf32>
    %421 = math.exp %420 : vector<8x128xf32>
    %cst_116 = arith.constant 1.000000e+00 : f32
    %422 = vector.broadcast %cst_116 : f32 to vector<8x128xf32>
    %423 = arith.addf %422, %421 : vector<8x128xf32>
    %424 = arith.divf %422, %423 : vector<8x128xf32>
    %425 = vector.extract_strided_slice %416 {offsets = [0, 128], sizes = [8, 128], strides = [1, 1]} : vector<8x384xf32> to vector<8x128xf32>
    %426 = vector.extract_strided_slice %415 {offsets = [0, 128], sizes = [8, 128], strides = [1, 1]} : vector<8x384xf32> to vector<8x128xf32>
    %427 = arith.addf %425, %426 : vector<8x128xf32>
    %428 = arith.negf %427 : vector<8x128xf32>
    %429 = math.exp %428 : vector<8x128xf32>
    %cst_117 = arith.constant 1.000000e+00 : f32
    %430 = vector.broadcast %cst_117 : f32 to vector<8x128xf32>
    %431 = arith.addf %430, %429 : vector<8x128xf32>
    %432 = arith.divf %430, %431 : vector<8x128xf32>
    %433 = vector.extract_strided_slice %416 {offsets = [0, 256], sizes = [8, 128], strides = [1, 1]} : vector<8x384xf32> to vector<8x128xf32>
    %434 = arith.addf %433, %9 : vector<8x128xf32>
    %435 = vector.extract_strided_slice %415 {offsets = [0, 256], sizes = [8, 128], strides = [1, 1]} : vector<8x384xf32> to vector<8x128xf32>
    %436 = arith.mulf %424, %435 : vector<8x128xf32>
    %437 = arith.addf %434, %436 : vector<8x128xf32>
    %438 = math.tanh %437 : vector<8x128xf32>
    %cst_118 = arith.constant 1.000000e+00 : f32
    %439 = vector.broadcast %cst_118 : f32 to vector<8x128xf32>
    %440 = arith.subf %439, %432 : vector<8x128xf32>
    %441 = arith.mulf %440, %438 : vector<8x128xf32>
    %442 = arith.mulf %432, %378 : vector<8x128xf32>
    %443 = arith.addf %441, %442 : vector<8x128xf32>
    %444 = arith.truncf %443 : vector<8x128xf32> to vector<8x128xbf16>
    %c128_119 = arith.constant 128 : index
    %c0_120 = arith.constant 0 : index
    %445 = vector.load %arg2[%c128_119, %c0_120] : memref<384x384xbf16, #tpu.memory_space<vmem>>, vector<128x384xbf16>
    %cst_121 = arith.constant dense<0.000000e+00> : vector<8x384xf32>
    %446 = tpu.matmul %444, %445, %cst_121 {dimension_numbers = #tpu.dot_dimension_numbers<[1], [0], [0], [1], [0, 0, 1, 1], [], []>} : vector<8x128xbf16>, vector<128x384xbf16>, vector<8x384xf32> -> vector<8x384xf32>
    %447 = vector.extract_strided_slice %446 {offsets = [0, 0], sizes = [8, 128], strides = [1, 1]} : vector<8x384xf32> to vector<8x128xf32>
    %448 = vector.extract_strided_slice %412 {offsets = [0, 0], sizes = [8, 128], strides = [1, 1]} : vector<8x384xf32> to vector<8x128xf32>
    %449 = arith.addf %447, %448 : vector<8x128xf32>
    %450 = arith.negf %449 : vector<8x128xf32>
    %451 = math.exp %450 : vector<8x128xf32>
    %cst_122 = arith.constant 1.000000e+00 : f32
    %452 = vector.broadcast %cst_122 : f32 to vector<8x128xf32>
    %453 = arith.addf %452, %451 : vector<8x128xf32>
    %454 = arith.divf %452, %453 : vector<8x128xf32>
    %455 = vector.extract_strided_slice %446 {offsets = [0, 128], sizes = [8, 128], strides = [1, 1]} : vector<8x384xf32> to vector<8x128xf32>
    %456 = vector.extract_strided_slice %412 {offsets = [0, 128], sizes = [8, 128], strides = [1, 1]} : vector<8x384xf32> to vector<8x128xf32>
    %457 = arith.addf %455, %456 : vector<8x128xf32>
    %458 = arith.negf %457 : vector<8x128xf32>
    %459 = math.exp %458 : vector<8x128xf32>
    %cst_123 = arith.constant 1.000000e+00 : f32
    %460 = vector.broadcast %cst_123 : f32 to vector<8x128xf32>
    %461 = arith.addf %460, %459 : vector<8x128xf32>
    %462 = arith.divf %460, %461 : vector<8x128xf32>
    %463 = vector.extract_strided_slice %446 {offsets = [0, 256], sizes = [8, 128], strides = [1, 1]} : vector<8x384xf32> to vector<8x128xf32>
    %464 = arith.addf %463, %15 : vector<8x128xf32>
    %465 = vector.extract_strided_slice %412 {offsets = [0, 256], sizes = [8, 128], strides = [1, 1]} : vector<8x384xf32> to vector<8x128xf32>
    %466 = arith.mulf %454, %465 : vector<8x128xf32>
    %467 = arith.addf %464, %466 : vector<8x128xf32>
    %468 = math.tanh %467 : vector<8x128xf32>
    %cst_124 = arith.constant 1.000000e+00 : f32
    %469 = vector.broadcast %cst_124 : f32 to vector<8x128xf32>
    %470 = arith.subf %469, %462 : vector<8x128xf32>
    %471 = arith.mulf %470, %468 : vector<8x128xf32>
    %472 = arith.mulf %462, %408 : vector<8x128xf32>
    %473 = arith.addf %471, %472 : vector<8x128xf32>
    %474 = arith.truncf %473 : vector<8x128xf32> to vector<8x128xbf16>
    %c256_125 = arith.constant 256 : index
    %c0_126 = arith.constant 0 : index
    %475 = vector.load %arg2[%c256_125, %c0_126] : memref<384x384xbf16, #tpu.memory_space<vmem>>, vector<128x384xbf16>
    %cst_127 = arith.constant dense<0.000000e+00> : vector<8x384xf32>
    %476 = tpu.matmul %474, %475, %cst_127 {dimension_numbers = #tpu.dot_dimension_numbers<[1], [0], [0], [1], [0, 0, 1, 1], [], []>} : vector<8x128xbf16>, vector<128x384xbf16>, vector<8x384xf32> -> vector<8x384xf32>
    %477 = arith.addf %476, %12 : vector<8x384xf32>
    %c0_128 = arith.constant 0 : index
    %c0_129 = arith.constant 0 : index
    %478 = vector.load %arg2[%c0_128, %c0_129] : memref<384x384xbf16, #tpu.memory_space<vmem>>, vector<128x384xbf16>
    %cst_130 = arith.constant dense<0.000000e+00> : vector<8x384xf32>
    %479 = tpu.matmul %444, %478, %cst_130 {dimension_numbers = #tpu.dot_dimension_numbers<[1], [0], [0], [1], [0, 0, 1, 1], [], []>} : vector<8x128xbf16>, vector<128x384xbf16>, vector<8x384xf32> -> vector<8x384xf32>
    %480 = arith.addf %479, %6 : vector<8x384xf32>
    %c56 = arith.constant 56 : index
    %c0_131 = arith.constant 0 : index
    %481 = vector.load %arg6[%c56, %c0_131] : memref<64x384xf32, #tpu.memory_space<vmem>>, vector<8x384xf32>
    %482 = vector.extract_strided_slice %481 {offsets = [0, 0], sizes = [8, 128], strides = [1, 1]} : vector<8x384xf32> to vector<8x128xf32>
    %483 = vector.extract_strided_slice %480 {offsets = [0, 0], sizes = [8, 128], strides = [1, 1]} : vector<8x384xf32> to vector<8x128xf32>
    %484 = arith.addf %482, %483 : vector<8x128xf32>
    %485 = arith.negf %484 : vector<8x128xf32>
    %486 = math.exp %485 : vector<8x128xf32>
    %cst_132 = arith.constant 1.000000e+00 : f32
    %487 = vector.broadcast %cst_132 : f32 to vector<8x128xf32>
    %488 = arith.addf %487, %486 : vector<8x128xf32>
    %489 = arith.divf %487, %488 : vector<8x128xf32>
    %490 = vector.extract_strided_slice %481 {offsets = [0, 128], sizes = [8, 128], strides = [1, 1]} : vector<8x384xf32> to vector<8x128xf32>
    %491 = vector.extract_strided_slice %480 {offsets = [0, 128], sizes = [8, 128], strides = [1, 1]} : vector<8x384xf32> to vector<8x128xf32>
    %492 = arith.addf %490, %491 : vector<8x128xf32>
    %493 = arith.negf %492 : vector<8x128xf32>
    %494 = math.exp %493 : vector<8x128xf32>
    %cst_133 = arith.constant 1.000000e+00 : f32
    %495 = vector.broadcast %cst_133 : f32 to vector<8x128xf32>
    %496 = arith.addf %495, %494 : vector<8x128xf32>
    %497 = arith.divf %495, %496 : vector<8x128xf32>
    %498 = vector.extract_strided_slice %481 {offsets = [0, 256], sizes = [8, 128], strides = [1, 1]} : vector<8x384xf32> to vector<8x128xf32>
    %499 = arith.addf %498, %9 : vector<8x128xf32>
    %500 = vector.extract_strided_slice %480 {offsets = [0, 256], sizes = [8, 128], strides = [1, 1]} : vector<8x384xf32> to vector<8x128xf32>
    %501 = arith.mulf %489, %500 : vector<8x128xf32>
    %502 = arith.addf %499, %501 : vector<8x128xf32>
    %503 = math.tanh %502 : vector<8x128xf32>
    %cst_134 = arith.constant 1.000000e+00 : f32
    %504 = vector.broadcast %cst_134 : f32 to vector<8x128xf32>
    %505 = arith.subf %504, %497 : vector<8x128xf32>
    %506 = arith.mulf %505, %503 : vector<8x128xf32>
    %507 = arith.mulf %497, %443 : vector<8x128xf32>
    %508 = arith.addf %506, %507 : vector<8x128xf32>
    %509 = arith.truncf %508 : vector<8x128xf32> to vector<8x128xbf16>
    %c128_135 = arith.constant 128 : index
    %c0_136 = arith.constant 0 : index
    %510 = vector.load %arg2[%c128_135, %c0_136] : memref<384x384xbf16, #tpu.memory_space<vmem>>, vector<128x384xbf16>
    %cst_137 = arith.constant dense<0.000000e+00> : vector<8x384xf32>
    %511 = tpu.matmul %509, %510, %cst_137 {dimension_numbers = #tpu.dot_dimension_numbers<[1], [0], [0], [1], [0, 0, 1, 1], [], []>} : vector<8x128xbf16>, vector<128x384xbf16>, vector<8x384xf32> -> vector<8x384xf32>
    %512 = vector.extract_strided_slice %511 {offsets = [0, 0], sizes = [8, 128], strides = [1, 1]} : vector<8x384xf32> to vector<8x128xf32>
    %513 = vector.extract_strided_slice %477 {offsets = [0, 0], sizes = [8, 128], strides = [1, 1]} : vector<8x384xf32> to vector<8x128xf32>
    %514 = arith.addf %512, %513 : vector<8x128xf32>
    %515 = arith.negf %514 : vector<8x128xf32>
    %516 = math.exp %515 : vector<8x128xf32>
    %cst_138 = arith.constant 1.000000e+00 : f32
    %517 = vector.broadcast %cst_138 : f32 to vector<8x128xf32>
    %518 = arith.addf %517, %516 : vector<8x128xf32>
    %519 = arith.divf %517, %518 : vector<8x128xf32>
    %520 = vector.extract_strided_slice %511 {offsets = [0, 128], sizes = [8, 128], strides = [1, 1]} : vector<8x384xf32> to vector<8x128xf32>
    %521 = vector.extract_strided_slice %477 {offsets = [0, 128], sizes = [8, 128], strides = [1, 1]} : vector<8x384xf32> to vector<8x128xf32>
    %522 = arith.addf %520, %521 : vector<8x128xf32>
    %523 = arith.negf %522 : vector<8x128xf32>
    %524 = math.exp %523 : vector<8x128xf32>
    %cst_139 = arith.constant 1.000000e+00 : f32
    %525 = vector.broadcast %cst_139 : f32 to vector<8x128xf32>
    %526 = arith.addf %525, %524 : vector<8x128xf32>
    %527 = arith.divf %525, %526 : vector<8x128xf32>
    %528 = vector.extract_strided_slice %511 {offsets = [0, 256], sizes = [8, 128], strides = [1, 1]} : vector<8x384xf32> to vector<8x128xf32>
    %529 = arith.addf %528, %15 : vector<8x128xf32>
    %530 = vector.extract_strided_slice %477 {offsets = [0, 256], sizes = [8, 128], strides = [1, 1]} : vector<8x384xf32> to vector<8x128xf32>
    %531 = arith.mulf %519, %530 : vector<8x128xf32>
    %532 = arith.addf %529, %531 : vector<8x128xf32>
    %533 = math.tanh %532 : vector<8x128xf32>
    %cst_140 = arith.constant 1.000000e+00 : f32
    %534 = vector.broadcast %cst_140 : f32 to vector<8x128xf32>
    %535 = arith.subf %534, %527 : vector<8x128xf32>
    %536 = arith.mulf %535, %533 : vector<8x128xf32>
    %537 = arith.mulf %527, %473 : vector<8x128xf32>
    %538 = arith.addf %536, %537 : vector<8x128xf32>
    %539 = arith.addf %508, %538 : vector<8x128xf32>
    %cst_141 = arith.constant 5.000000e-01 : f32
    %540 = vector.broadcast %cst_141 : f32 to vector<8x128xf32>
    %541 = arith.mulf %540, %539 : vector<8x128xf32>
    %542 = arith.truncf %541 : vector<8x128xf32> to vector<8x128xbf16>
    %c0_142 = arith.constant 0 : index
    %c0_143 = arith.constant 0 : index
    %543 = vector.load %arg3[%c0_142, %c0_143] : memref<256x128xbf16, #tpu.memory_space<vmem>>, vector<128x128xbf16>
    %cst_144 = arith.constant dense<0.000000e+00> : vector<8x128xf32>
    %544 = tpu.matmul %542, %543, %cst_144 {dimension_numbers = #tpu.dot_dimension_numbers<[1], [0], [0], [1], [0, 0, 1, 1], [], []>} : vector<8x128xbf16>, vector<128x128xbf16>, vector<8x128xf32> -> vector<8x128xf32>
    %c0_145 = arith.constant 0 : index
    %c1024 = arith.constant 1024 : index
    %545 = vector.load %arg4[%c0_145, %c1024] : memref<1x1280xf32, #tpu.memory_space<vmem>>, vector<1x128xf32>
    %546 = vector.broadcast %545 : vector<1x128xf32> to vector<8x128xf32>
    %547 = arith.addf %544, %546 : vector<8x128xf32>
    %cst_146 = arith.constant 0.000000e+00 : f32
    %548 = vector.broadcast %cst_146 : f32 to vector<8x128xf32>
    %549 = arith.maximumf %547, %548 : vector<8x128xf32>
    %550 = arith.truncf %549 : vector<8x128xf32> to vector<8x128xbf16>
    %c128_147 = arith.constant 128 : index
    %c0_148 = arith.constant 0 : index
    %551 = vector.load %arg3[%c128_147, %c0_148] : memref<256x128xbf16, #tpu.memory_space<vmem>>, vector<128x128xbf16>
    %cst_149 = arith.constant dense<0.000000e+00> : vector<8x128xf32>
    %552 = tpu.matmul %550, %551, %cst_149 {dimension_numbers = #tpu.dot_dimension_numbers<[1], [0], [0], [1], [0, 0, 1, 1], [], []>} : vector<8x128xbf16>, vector<128x128xbf16>, vector<8x128xf32> -> vector<8x128xf32>
    %c0_150 = arith.constant 0 : index
    %c1152 = arith.constant 1152 : index
    %553 = vector.load %arg4[%c0_150, %c1152] : memref<1x1280xf32, #tpu.memory_space<vmem>>, vector<1x128xf32>
    %554 = vector.broadcast %553 : vector<1x128xf32> to vector<8x128xf32>
    %555 = arith.addf %552, %554 : vector<8x128xf32>
    %556 = tpu.iota {dimensions = array<i32: 1>} : vector<8x128xi32>
    %c4_i32 = arith.constant 4 : i32
    %557 = vector.broadcast %c4_i32 : i32 to vector<8x128xi32>
    %558 = arith.cmpi slt, %556, %557 : vector<8x128xi32>
    %cst_151 = arith.constant -1.000000e+30 : f32
    %559 = vector.broadcast %cst_151 : f32 to vector<8x128xf32>
    %560 = arith.select %558, %555, %559 : vector<8x128xi1>, vector<8x128xf32>
    %cst_152 = arith.constant dense<0xFF800000> : vector<8xf32>
    %561 = vector.multi_reduction <maximumf>, %560, %cst_152 [1] : vector<8x128xf32> to vector<8xf32>
    %562 = vector.shape_cast %561 : vector<8xf32> to vector<8x1xf32>
    %563 = vector.broadcast %562 : vector<8x1xf32> to vector<8x128xf32>
    %564 = arith.subf %560, %563 : vector<8x128xf32>
    %565 = math.exp %564 : vector<8x128xf32>
    %cst_153 = arith.constant dense<0.000000e+00> : vector<8xf32>
    %566 = vector.multi_reduction <add>, %565, %cst_153 [1] : vector<8x128xf32> to vector<8xf32>
    %567 = vector.shape_cast %566 : vector<8xf32> to vector<8x1xf32>
    %568 = vector.broadcast %567 : vector<8x1xf32> to vector<8x128xf32>
    %569 = arith.divf %565, %568 : vector<8x128xf32>
    %c0_154 = arith.constant 0 : index
    %c0_155 = arith.constant 0 : index
    %570 = vector.load %arg5[%c0_154, %c0_155] : memref<8x128xf32, #tpu.memory_space<vmem>>, vector<8x128xf32>
    tpu.vector_store %arg5[%c0_154, %c0_155], %569 {strides = array<i32>} : memref<8x128xf32, #tpu.memory_space<vmem>>, vector<8x128xf32>,
    return
  }
}

</mosaic_0001>

<llo_original>
// kernel: actor_forward.1
$region0: #{actor_forward.1}
  #allocation0 [shape = 'u32[]', space=smem, size = 0x4, offset = 0x4, fixed_abs, tag = 'smem constant byte address 0x4 - core index']
  #allocation1 [shape = 'u32[144,128]{1,0:T(1,128)}', space=vmem, size = 0x12000, scoped, tag = 'internal scratch']
  #allocation2 [shape = 'f32[64,384]{1,0:T(8,128)}', space=vmem, size = 0x18000, scoped, tag = 'scratch operand']
  %s0 = inlined_call_operand.vmem [shape: bf16[64,4], index: 0, kind: input, shape index: {}]
  %s1 = inlined_call_operand.vmem [shape: bf16[4,384], index: 1, kind: input, shape index: {}]
  %s2 = inlined_call_operand.hbm [shape: bf16[384,384], index: 2, kind: input, shape index: {}]
  %s3 = inlined_call_operand.hbm [shape: bf16[256,128], index: 3, kind: input, shape index: {}]
  %s4 = inlined_call_operand.vmem [shape: f32[1,1280], index: 4, kind: input, shape index: {}]
  %s5 = inlined_call_operand.vmem [shape: f32[8,128], index: 5, kind: output, shape index: {}]
  %s6 = sld [smem:[#allocation0]]
  $region38: #{actor_forward.1} parent=0
    _
  %s8 = ssub.s32 1, %s6
  %s9 = scalar_select 0, %s8, %s6
  $region1: #{actor_forward.1} parent=0
    #allocation3 [shape = 'u8[294912]{0}', space=vmem, size = 0x48000, scoped, tag = 'input window, operand 2, single buffered']
    #allocation4 [shape = 's32[1]{0}', space=sflag, size = 0x4, scoped, tag = 'scoped memory for actor_forward.1']
    #allocation5 [shape = 'u8[65536]{0}', space=vmem, size = 0x10000, scoped, tag = 'input window, operand 3, single buffered']
    #allocation6 [shape = 's32[1]{0}', space=sflag, size = 0x4, scoped, tag = 'scoped memory for actor_forward.1']
    %10 = vsyncpa [#allocation4], 0
    %11 = vsyncpa [#allocation6], 0
    // Predicated region
    $region2: #{actor_forward.1} parent=1 // pred_check
      _
    $region3: #{actor_forward.1} parent=1 // pred_check_branch
      %13 = sbr.rel (0) target = $region5
    $region4: #{actor_forward.1} parent=1 // pred_region
      _
    $region5: #{actor_forward.1} parent=1 // pred_fallthru
      _
    // Predicated region
    $region6: #{actor_forward.1} parent=1 // pred_check
      _
    $region7: #{actor_forward.1} parent=1 // pred_check_branch
      %15 = sbr.rel (0) target = $region9
    $region8: #{actor_forward.1} parent=1 // pred_region
      _
    $region9: #{actor_forward.1} parent=1 // pred_fallthru
      _
    // Predicated region
    $region10: #{actor_forward.1} parent=1 // pred_check
      _
    $region11: #{actor_forward.1} parent=1 // pred_check_branch
      %17 = sbr.rel (0) target = $region13
    $region12: #{actor_forward.1} parent=1 // pred_region
      %s19 = ssub.s32 9216, 9216
      %20 = vsyncadd [#allocation4], %s19
      %s21 = sshll.u32 [#allocation3], 4
      %s22 = int_to_ptr.vmem [resolvable:$true] %s21
      %27 = dma.hbm_to_vmem [thread:$0]  %s2, 9216, %s22, [#allocation4], 192, 192, 12
    $region13: #{actor_forward.1} parent=1 // pred_fallthru
      _
    // Predicated region
    $region14: #{actor_forward.1} parent=1 // pred_check
      _
    $region15: #{actor_forward.1} parent=1 // pred_check_branch
      %29 = sbr.rel (0) target = $region17
    $region16: #{actor_forward.1} parent=1 // pred_region
      %s31 = ssub.s32 2048, 2048
      %32 = vsyncadd [#allocation6], %s31
      %s33 = sshll.u32 [#allocation5], 4
      %s34 = int_to_ptr.vmem [resolvable:$true] %s33
      %39 = dma.hbm_to_vmem [thread:$0]  %s3, 2048, %s34, [#allocation6], 64, 64, 4
    $region17: #{actor_forward.1} parent=1 // pred_fallthru
      _
    // Predicated region
    $region18: #{actor_forward.1} parent=1 // pred_check
      _
    $region19: #{actor_forward.1} parent=1 // pred_check_branch
      %41 = sbr.rel (0) target = $region21
    $region20: #{actor_forward.1} parent=1 // pred_region
      _
    $region21: #{actor_forward.1} parent=1 // pred_fallthru
      _
    // Predicated region
    $region22: #{actor_forward.1} parent=1 // pred_check
      _
    $region23: #{actor_forward.1} parent=1 // pred_check_branch
      %43 = sbr.rel (0) target = $region25
    $region24: #{actor_forward.1} parent=1 // pred_region
      %44 = dma.done [#allocation4], 9216
    $region25: #{actor_forward.1} parent=1 // pred_fallthru
      _
    // Predicated region
    $region26: #{actor_forward.1} parent=1 // pred_check
      _
    $region27: #{actor_forward.1} parent=1 // pred_check_branch
      %46 = sbr.rel (0) target = $region29
    $region28: #{actor_forward.1} parent=1 // pred_region
      %47 = dma.done [#allocation6], 2048
    $region29: #{actor_forward.1} parent=1 // pred_fallthru
      _
    %v49 = vld [vmem:[%s0] sm:$0xf]
    %v50 = vld [vmem:[%s0 + $0x4] sm:$0xf]
    %v51 = vld [vmem:[%s0 + $0x8] sm:$0xf]
    %v52 = vld [vmem:[%s0 + $0xc] sm:$0xf]
    %v53 = vld [vmem:[%s0 + $0x10] sm:$0xf]
    %v54 = vld [vmem:[%s0 + $0x14] sm:$0xf]
    %v55 = vld [vmem:[%s0 + $0x18] sm:$0xf]
    %v56 = vld [vmem:[%s0 + $0x1c] sm:$0xf]
    %v57 = vld [vmem:[%s1] sm:$0x3f]
    %v66 = vunpack.c.l.b16 %v49
    %v67 = vunpack.c.l.b16 %v50
    %v68 = vunpack.c.l.b16 %v51
    %v69 = vunpack.c.l.b16 %v52
    %v70 = vunpack.c.l.b16 %v53
    %v71 = vunpack.c.l.b16 %v54
    %v72 = vunpack.c.l.b16 %v55
    %v73 = vunpack.c.l.b16 %v56
    %v74 = vpack.c.b16 %v67, %v66
    %v75 = vpack.c.b16 %v69, %v68
    %v76 = vpack.c.b16 %v71, %v70
    %v77 = vpack.c.b16 %v73, %v72
    %v79 = vcombine.high %v57, %v57
    %v81 = vunpack.c.l.s4 1983009808
    %v82 = vunpack.c.0.s8 %v81
    %v83 = vlaneseq
    %v84 = vshrl.u32 %v83, 7
    %v85 = vsub.s32 %v82, %v84
    %v86 = vrot.slane %v57, %v85
    %v88 = vunpack.c.l.s4 1983009808
    %v89 = vunpack.c.0.s8 %v88
    %v90 = vlaneseq
    %v91 = vshrl.u32 %v90, 7
    %v92 = vsub.s32 %v89, %v91
    %v93 = vrot.slane %v79, %v92
    %v94 = vcombine.high %v86, %v86
    %vm95 = vcmask 31744
    %v97 = vsel %vm95, %v74, 0
    %v100 = vsel %vm95, %v75, 0
    %v103 = vsel %vm95, %v76, 0
    %v106 = vsel %vm95, %v77, 0
    %vm108 = vcmask 1041408
    %v110 = vsel %vm108, %v86, 0
    %v113 = vsel %vm108, %v94, 0
    %v116 = vsel %vm108, %v93, 0
    %118 = vmatprep.subr.bf16.mxu0 %v113
    %119 = vmatpush1.bf16.msra.mxu0 %v110
    %120 = vmatprep.subr.bf16.mxu0 0
    %121 = vmatpush1.bf16.msra.mxu0 0
    %122 = vmatprep.subr.bf16.mxu0 0
    %123 = vmatpush1.bf16.msra.mxu0 0
    %124 = vmatprep.subr.bf16.mxu0 0
    %125 = vmatpush1.bf16.msra.mxu0 0
    %126 = vmatprep.subr.bf16.mxu0 0
    %127 = vmatpush1.bf16.msra.mxu0 0
    %128 = vmatprep.subr.bf16.mxu0 0
    %129 = vmatpush1.bf16.msra.mxu0 0
    %130 = vmatprep.subr.bf16.mxu0 0
    %131 = vmatpush1.bf16.msra.mxu0 0
    %132 = vmatprep.subr.bf16.mxu0 0
    %133 = vmatpush1.bf16.msra.mxu0 0
    %134 = vmatprep.subr.bf16.mxu0 0
    %135 = vmatpush1.bf16.msra.mxu0 0
    %136 = vmatprep.subr.bf16.mxu0 0
    %137 = vmatpush1.bf16.msra.mxu0 0
    %138 = vmatprep.subr.bf16.mxu0 0
    %139 = vmatpush1.bf16.msra.mxu0 0
    %140 = vmatprep.subr.bf16.mxu0 0
    %141 = vmatpush1.bf16.msra.mxu0 0
    %142 = vmatprep.subr.bf16.mxu0 0
    %143 = vmatpush1.bf16.msra.mxu0 0
    %144 = vmatprep.subr.bf16.mxu0 0
    %145 = vmatpush1.bf16.msra.mxu0 0
    %146 = vmatprep.subr.bf16.mxu0 0
    %147 = vmatpush1.bf16.msra.mxu0 0
    %148 = vmatprep.subr.bf16.mxu0 0
    %149 = vmatpush1.bf16.msra.mxu0 0
    %150 = vmatprep.mubr.bf16.mxu0 0
    %151 = vmatmul.mubr.bf16.gmra.mrb[0].mxu0 %v97
    %v152 = vpop.f32.mrb[0].mxu0
    %v153 = vadd.f32 0.0, %v152
    %v154 = vpop.f32.mrb[0].mxu0
    %v155 = vadd.f32 0.0, %v154
    %v156 = vpop.f32.mrb[0].mxu0
    %v157 = vadd.f32 0.0, %v156
    %v158 = vpop.f32.mrb[0].mxu0
    %v159 = vadd.f32 0.0, %v158
    %160 = vmatprep.mubr.bf16.mxu0 0
    %161 = vmatmul.mubr.bf16.gmra.mrb[0].mxu0 %v100
    %v162 = vpop.f32.mrb[0].mxu0
    %v163 = vadd.f32 0.0, %v162
    %v164 = vpop.f32.mrb[0].mxu0
    %v165 = vadd.f32 0.0, %v164
    %v166 = vpop.f32.mrb[0].mxu0
    %v167 = vadd.f32 0.0, %v166
    %v168 = vpop.f32.mrb[0].mxu0
    %v169 = vadd.f32 0.0, %v168
    %170 = vmatprep.mubr.bf16.mxu0 0
    %171 = vmatmul.mubr.bf16.gmra.mrb[0].mxu0 %v103
    %v172 = vpop.f32.mrb[0].mxu0
    %v173 = vadd.f32 0.0, %v172
    %v174 = vpop.f32.mrb[0].mxu0
    %v175 = vadd.f32 0.0, %v174
    %v176 = vpop.f32.mrb[0].mxu0
    %v177 = vadd.f32 0.0, %v176
    %v178 = vpop.f32.mrb[0].mxu0
    %v179 = vadd.f32 0.0, %v178
    %180 = vmatprep.mubr.bf16.mxu0 0
    %181 = vmatmul.mubr.bf16.gmra.mrb[0].mxu0 %v106
    %v182 = vpop.f32.mrb[0].mxu0
    %v183 = vadd.f32 0.0, %v182
    %v184 = vpop.f32.mrb[0].mxu0
    %v185 = vadd.f32 0.0, %v184
    %v186 = vpop.f32.mrb[0].mxu0
    %v187 = vadd.f32 0.0, %v186
    %v188 = vpop.f32.mrb[0].mxu0
    %v189 = vadd.f32 0.0, %v188
    %190 = vdwg.mxu0
    %191 = vmatprep.subr.bf16.mxu0 0
    %192 = vmatpush1.bf16.msra.mxu0 %v116
    %193 = vmatprep.subr.bf16.mxu0 0
    %194 = vmatpush1.bf16.msra.mxu0 0
    %195 = vmatprep.subr.bf16.mxu0 0
    %196 = vmatpush1.bf16.msra.mxu0 0
    %197 = vmatprep.subr.bf16.mxu0 0
    %198 = vmatpush1.bf16.msra.mxu0 0
    %199 = vmatprep.subr.bf16.mxu0 0
    %200 = vmatpush1.bf16.msra.mxu0 0
    %201 = vmatprep.subr.bf16.mxu0 0
    %202 = vmatpush1.bf16.msra.mxu0 0
    %203 = vmatprep.subr.bf16.mxu0 0
    %204 = vmatpush1.bf16.msra.mxu0 0
    %205 = vmatprep.subr.bf16.mxu0 0
    %206 = vmatpush1.bf16.msra.mxu0 0
    %207 = vmatprep.subr.bf16.mxu0 0
    %208 = vmatpush1.bf16.msra.mxu0 0
    %209 = vmatprep.subr.bf16.mxu0 0
    %210 = vmatpush1.bf16.msra.mxu0 0
    %211 = vmatprep.subr.bf16.mxu0 0
    %212 = vmatpush1.bf16.msra.mxu0 0
    %213 = vmatprep.subr.bf16.mxu0 0
    %214 = vmatpush1.bf16.msra.mxu0 0
    %215 = vmatprep.subr.bf16.mxu0 0
    %216 = vmatpush1.bf16.msra.mxu0 0
    %217 = vmatprep.subr.bf16.mxu0 0
    %218 = vmatpush1.bf16.msra.mxu0 0
    %219 = vmatprep.subr.bf16.mxu0 0
    %220 = vmatpush1.bf16.msra.mxu0 0
    %221 = vmatprep.subr.bf16.mxu0 0
    %222 = vmatpush1.bf16.msra.mxu0 0
    %223 = vmatprep.mubr.bf16.mxu0 0
    %224 = vmatmul.mubr.bf16.gmra.mrb[0].mxu0 %v97
    %v225 = vpop.f32.mrb[0].mxu0
    %v226 = vadd.f32 0.0, %v225
    %v227 = vpop.f32.mrb[0].mxu0
    %v228 = vpop.f32.mrb[0].mxu0
    %v229 = vadd.f32 0.0, %v228
    %v230 = vpop.f32.mrb[0].mxu0
    %231 = vmatprep.mubr.bf16.mxu0 0
    %232 = vmatmul.mubr.bf16.gmra.mrb[0].mxu0 %v100
    %v233 = vpop.f32.mrb[0].mxu0
    %v234 = vadd.f32 0.0, %v233
    %v235 = vpop.f32.mrb[0].mxu0
    %v236 = vpop.f32.mrb[0].mxu0
    %v237 = vadd.f32 0.0, %v236
    %v238 = vpop.f32.mrb[0].mxu0
    %239 = vmatprep.mubr.bf16.mxu0 0
    %240 = vmatmul.mubr.bf16.gmra.mrb[0].mxu0 %v103
    %v241 = vpop.f32.mrb[0].mxu0
    %v242 = vadd.f32 0.0, %v241
    %v243 = vpop.f32.mrb[0].mxu0
    %v244 = vpop.f32.mrb[0].mxu0
    %v245 = vadd.f32 0.0, %v244
    %v246 = vpop.f32.mrb[0].mxu0
    %247 = vmatprep.mubr.bf16.mxu0 0
    %248 = vmatmul.mubr.bf16.gmra.mrb[0].mxu0 %v106
    %v249 = vpop.f32.mrb[0].mxu0
    %v250 = vadd.f32 0.0, %v249
    %v251 = vpop.f32.mrb[0].mxu0
    %v252 = vpop.f32.mrb[0].mxu0
    %v253 = vadd.f32 0.0, %v252
    %v254 = vpop.f32.mrb[0].mxu0
    %255 = vdwg.mxu0
    %256 = vst [vmem:[#allocation2] sm:$0xff] %v153
    %257 = vst [vmem:[#allocation2 + $0x8] sm:$0xff] %v155
    %258 = vst [vmem:[#allocation2 + $0x10] sm:$0xff] %v226
    %259 = vst [vmem:[#allocation2 + $0x18] sm:$0xff] %v157
    %260 = vst [vmem:[#allocation2 + $0x20] sm:$0xff] %v159
    %261 = vst [vmem:[#allocation2 + $0x28] sm:$0xff] %v229
    %262 = vst [vmem:[#allocation2 + $0x30] sm:$0xff] %v163
    %263 = vst [vmem:[#allocation2 + $0x38] sm:$0xff] %v165
    %264 = vst [vmem:[#allocation2 + $0x40] sm:$0xff] %v234
    %265 = vst [vmem:[#allocation2 + $0x48] sm:$0xff] %v167
    %266 = vst [vmem:[#allocation2 + $0x50] sm:$0xff] %v169
    %267 = vst [vmem:[#allocation2 + $0x58] sm:$0xff] %v237
    %268 = vst [vmem:[#allocation2 + $0x60] sm:$0xff] %v173
    %269 = vst [vmem:[#allocation2 + $0x68] sm:$0xff] %v175
    %270 = vst [vmem:[#allocation2 + $0x70] sm:$0xff] %v242
    %271 = vst [vmem:[#allocation2 + $0x78] sm:$0xff] %v177
    %272 = vst [vmem:[#allocation2 + $0x80] sm:$0xff] %v179
    %273 = vst [vmem:[#allocation2 + $0x88] sm:$0xff] %v245
    %274 = vst [vmem:[#allocation2 + $0x90] sm:$0xff] %v183
    %275 = vst [vmem:[#allocation2 + $0x98] sm:$0xff] %v185
    %276 = vst [vmem:[#allocation2 + $0xa0] sm:$0xff] %v250
    %277 = vst [vmem:[#allocation2 + $0xa8] sm:$0xff] %v187
    %278 = vst [vmem:[#allocation2 + $0xb0] sm:$0xff] %v189
    %279 = vst [vmem:[#allocation2 + $0xb8] sm:$0xff] %v253
    %v280 = vld [vmem:[%s4] sm:$0x7]
    %v282 = vlaneseq
    %v283 = vshrl.u32 %v282, 7
    %v284 = vsub.s32 0, %v283
    %v285 = vrot.slane %v280, %v284
    %v286 = vlaneseq
    %v287 = vshrl.u32 %v286, 7
    %v288 = vsub.s32 1, %v287
    %v289 = vrot.slane %v280, %v288
    %v290 = vlaneseq
    %v291 = vshrl.u32 %v290, 7
    %v292 = vsub.s32 2, %v291
    %v293 = vrot.slane %v280, %v292
    %v297 = vld [vmem:[%s4 + $0x3] sm:$0x1]
    %v299 = vlaneseq
    %v300 = vshrl.u32 %v299, 7
    %v301 = vsub.s32 0, %v300
    %v302 = vrot.slane %v297, %v301
    %v304 = vld [vmem:[%s4 + $0x4] sm:$0x7]
    %v306 = vlaneseq
    %v307 = vshrl.u32 %v306, 7
    %v308 = vsub.s32 0, %v307
    %v309 = vrot.slane %v304, %v308
    %v310 = vlaneseq
    %v311 = vshrl.u32 %v310, 7
    %v312 = vsub.s32 1, %v311
    %v313 = vrot.slane %v304, %v312
    %v314 = vlaneseq
    %v315 = vshrl.u32 %v314, 7
    %v316 = vsub.s32 2, %v315
    %v317 = vrot.slane %v304, %v316
    %v321 = vld [vmem:[%s4 + $0x7] sm:$0x1]
    %v323 = vlaneseq
    %v324 = vshrl.u32 %v323, 7
    %v325 = vsub.s32 0, %v324
    %v326 = vrot.slane %v321, %v325
    %v328 = vld [vmem:[#allocation3 + $0x180] sm:$0xff]
    %v329 = vld [vmem:[#allocation3 + $0x188] sm:$0xf]
    %v330 = vld [vmem:[#allocation3 + $0x18c] sm:$0xff]
    %v331 = vld [vmem:[#allocation3 + $0x194] sm:$0xf]
    %v332 = vld [vmem:[#allocation3 + $0x198] sm:$0xff]
    %v333 = vld [vmem:[#allocation3 + $0x1a0] sm:$0xf]
    %v334 = vld [vmem:[#allocation3 + $0x1a4] sm:$0xff]
    %v335 = vld [vmem:[#allocation3 + $0x1ac] sm:$0xf]
    %v336 = vld [vmem:[#allocation3 + $0x1b0] sm:$0xff]
    %v337 = vld [vmem:[#allocation3 + $0x1b8] sm:$0xf]
    %v338 = vld [vmem:[#allocation3 + $0x1bc] sm:$0xff]
    %v339 = vld [vmem:[#allocation3 + $0x1c4] sm:$0xf]
    %v340 = vld [vmem:[#allocation3 + $0x1c8] sm:$0xff]
    %v341 = vld [vmem:[#allocation3 + $0x1d0] sm:$0xf]
    %v342 = vld [vmem:[#allocation3 + $0x1d4] sm:$0xff]
    %v343 = vld [vmem:[#allocation3 + $0x1dc] sm:$0xf]
    %v344 = vld [vmem:[#allocation3 + $0x1e0] sm:$0xff]
    %v345 = vld [vmem:[#allocation3 + $0x1e8] sm:$0xf]
    %v346 = vld [vmem:[#allocation3 + $0x1ec] sm:$0xff]
    %v347 = vld [vmem:[#allocation3 + $0x1f4] sm:$0xf]
    %v348 = vld [vmem:[#allocation3 + $0x1f8] sm:$0xff]
    %v349 = vld [vmem:[#allocation3 + $0x200] sm:$0xf]
    %v350 = vld [vmem:[#allocation3 + $0x204] sm:$0xff]
    %v351 = vld [vmem:[#allocation3 + $0x20c] sm:$0xf]
    %v352 = vld [vmem:[#allocation3 + $0x210] sm:$0xff]
    %v353 = vld [vmem:[#allocation3 + $0x218] sm:$0xf]
    %v354 = vld [vmem:[#allocation3 + $0x21c] sm:$0xff]
    %v355 = vld [vmem:[#allocation3 + $0x224] sm:$0xf]
    %v356 = vld [vmem:[#allocation3 + $0x228] sm:$0xff]
    %v357 = vld [vmem:[#allocation3 + $0x230] sm:$0xf]
    %v358 = vld [vmem:[#allocation3 + $0x234] sm:$0xff]
    %v359 = vld [vmem:[#allocation3 + $0x23c] sm:$0xf]
    %v392 = vunpack.c.l.b16 %v328
    %v393 = vunpack.c.h.b16 %v328
    %v394 = vunpack.c.l.b16 %v329
    %v395 = vunpack.c.l.b16 %v330
    %v396 = vunpack.c.h.b16 %v330
    %v397 = vunpack.c.l.b16 %v331
    %v398 = vunpack.c.l.b16 %v332
    %v399 = vunpack.c.h.b16 %v332
    %v400 = vunpack.c.l.b16 %v333
    %v401 = vunpack.c.l.b16 %v334
    %v402 = vunpack.c.h.b16 %v334
    %v403 = vunpack.c.l.b16 %v335
    %v404 = vunpack.c.l.b16 %v336
    %v405 = vunpack.c.h.b16 %v336
    %v406 = vunpack.c.l.b16 %v337
    %v407 = vunpack.c.l.b16 %v338
    %v408 = vunpack.c.h.b16 %v338
    %v409 = vunpack.c.l.b16 %v339
    %v410 = vunpack.c.l.b16 %v340
    %v411 = vunpack.c.h.b16 %v340
    %v412 = vunpack.c.l.b16 %v341
    %v413 = vunpack.c.l.b16 %v342
    %v414 = vunpack.c.h.b16 %v342
    %v415 = vunpack.c.l.b16 %v343
    %v416 = vunpack.c.l.b16 %v344
    %v417 = vunpack.c.h.b16 %v344
    %v418 = vunpack.c.l.b16 %v345
    %v419 = vunpack.c.l.b16 %v346
    %v420 = vunpack.c.h.b16 %v346
    %v421 = vunpack.c.l.b16 %v347
    %v422 = vunpack.c.l.b16 %v348
    %v423 = vunpack.c.h.b16 %v348
    %v424 = vunpack.c.l.b16 %v349
    %v425 = vunpack.c.l.b16 %v350
    %v426 = vunpack.c.h.b16 %v350
    %v427 = vunpack.c.l.b16 %v351
    %v428 = vunpack.c.l.b16 %v352
    %v429 = vunpack.c.h.b16 %v352
    %v430 = vunpack.c.l.b16 %v353
    %v431 = vunpack.c.l.b16 %v354
    %v432 = vunpack.c.h.b16 %v354
    %v433 = vunpack.c.l.b16 %v355
    %v434 = vunpack.c.l.b16 %v356
    %v435 = vunpack.c.h.b16 %v356
    %v436 = vunpack.c.l.b16 %v357
    %v437 = vunpack.c.l.b16 %v358
    %v438 = vunpack.c.h.b16 %v358
    %v439 = vunpack.c.l.b16 %v359
    %v440 = vpack.c.b16 %v395, %v392
    %v441 = vpack.c.b16 %v396, %v393
    %v442 = vpack.c.b16 %v397, %v394
    %v443 = vpack.c.b16 %v401, %v398
    %v444 = vpack.c.b16 %v402, %v399
    %v445 = vpack.c.b16 %v403, %v400
    %v446 = vpack.c.b16 %v407, %v404
    %v447 = vpack.c.b16 %v408, %v405
    %v448 = vpack.c.b16 %v409, %v406
    %v449 = vpack.c.b16 %v413, %v410
    %v450 = vpack.c.b16 %v414, %v411
    %v451 = vpack.c.b16 %v415, %v412
    %v452 = vpack.c.b16 %v419, %v416
    %v453 = vpack.c.b16 %v420, %v417
    %v454 = vpack.c.b16 %v421, %v418
    %v455 = vpack.c.b16 %v425, %v422
    %v456 = vpack.c.b16 %v426, %v423
    %v457 = vpack.c.b16 %v427, %v424
    %v458 = vpack.c.b16 %v431, %v428
    %v459 = vpack.c.b16 %v432, %v429
    %v460 = vpack.c.b16 %v433, %v430
    %v461 = vpack.c.b16 %v437, %v434
    %v462 = vpack.c.b16 %v438, %v435
    %v463 = vpack.c.b16 %v439, %v436
    %488 = vmatprep.subr.bf16.mxu0 %v441
    %489 = vmatpush1.bf16.msra.mxu0 %v440
    %490 = vmatprep.subr.bf16.mxu0 %v444
    %491 = vmatpush1.bf16.msra.mxu0 %v443
    %492 = vmatprep.subr.bf16.mxu0 %v447
    %493 = vmatpush1.bf16.msra.mxu0 %v446
    %494 = vmatprep.subr.bf16.mxu0 %v450
    %495 = vmatpush1.bf16.msra.mxu0 %v449
    %496 = vmatprep.subr.bf16.mxu0 %v453
    %497 = vmatpush1.bf16.msra.mxu0 %v452
    %498 = vmatprep.subr.bf16.mxu0 %v456
    %499 = vmatpush1.bf16.msra.mxu0 %v455
    %500 = vmatprep.subr.bf16.mxu0 %v459
    %501 = vmatpush1.bf16.msra.mxu0 %v458
    %502 = vmatprep.subr.bf16.mxu0 %v462
    %503 = vmatpush1.bf16.msra.mxu0 %v461
    %504 = vmatprep.subr.bf16.mxu0 0
    %505 = vmatpush1.bf16.msra.mxu0 0
    %506 = vmatprep.subr.bf16.mxu0 0
    %507 = vmatpush1.bf16.msra.mxu0 0
    %508 = vmatprep.subr.bf16.mxu0 0
    %509 = vmatpush1.bf16.msra.mxu0 0
    %510 = vmatprep.subr.bf16.mxu0 0
    %511 = vmatpush1.bf16.msra.mxu0 0
    %512 = vmatprep.subr.bf16.mxu0 0
    %513 = vmatpush1.bf16.msra.mxu0 0
    %514 = vmatprep.subr.bf16.mxu0 0
    %515 = vmatpush1.bf16.msra.mxu0 0
    %516 = vmatprep.subr.bf16.mxu0 0
    %517 = vmatpush1.bf16.msra.mxu0 0
    %518 = vmatprep.subr.bf16.mxu0 0
    %519 = vmatpush1.bf16.msra.mxu0 0
    %520 = vmatprep.mubr.bf16.mxu0 0
    %521 = vmatmul.mubr.bf16.gmra.mrb[0].mxu0 0
    %v522 = vpop.f32.mrb[0].mxu0
    %v523 = vadd.f32 %v309, %v522
    %v524 = vpop.f32.mrb[0].mxu0
    %v525 = vadd.f32 %v313, %v524
    %v526 = vpop.f32.mrb[0].mxu0
    %v527 = vpop.f32.mrb[0].mxu0
    %528 = vdwg.mxu0
    %529 = vmatprep.subr.bf16.mxu0 0
    %530 = vmatpush1.bf16.msra.mxu0 %v442
    %531 = vmatprep.subr.bf16.mxu0 0
    %532 = vmatpush1.bf16.msra.mxu0 %v445
    %533 = vmatprep.subr.bf16.mxu0 0
    %534 = vmatpush1.bf16.msra.mxu0 %v448
    %535 = vmatprep.subr.bf16.mxu0 0
    %536 = vmatpush1.bf16.msra.mxu0 %v451
    %537 = vmatprep.subr.bf16.mxu0 0
    %538 = vmatpush1.bf16.msra.mxu0 %v454
    %539 = vmatprep.subr.bf16.mxu0 0
    %540 = vmatpush1.bf16.msra.mxu0 %v457
    %541 = vmatprep.subr.bf16.mxu0 0
    %542 = vmatpush1.bf16.msra.mxu0 %v460
    %543 = vmatprep.subr.bf16.mxu0 0
    %544 = vmatpush1.bf16.msra.mxu0 %v463
    %545 = vmatprep.subr.bf16.mxu0 0
    %546 = vmatpush1.bf16.msra.mxu0 0
    %547 = vmatprep.subr.bf16.mxu0 0
    %548 = vmatpush1.bf16.msra.mxu0 0
    %549 = vmatprep.subr.bf16.mxu0 0
    %550 = vmatpush1.bf16.msra.mxu0 0
    %551 = vmatprep.subr.bf16.mxu0 0
    %552 = vmatpush1.bf16.msra.mxu0 0
    %553 = vmatprep.subr.bf16.mxu0 0
    %554 = vmatpush1.bf16.msra.mxu0 0
    %555 = vmatprep.subr.bf16.mxu0 0
    %556 = vmatpush1.bf16.msra.mxu0 0
    %557 = vmatprep.subr.bf16.mxu0 0
    %558 = vmatpush1.bf16.msra.mxu0 0
    %559 = vmatprep.subr.bf16.mxu0 0
    %560 = vmatpush1.bf16.msra.mxu0 0
    %561 = vmatprep.mubr.bf16.mxu0 0
    %562 = vmatmul.mubr.bf16.gmra.mrb[0].mxu0 0
    %v563 = vpop.f32.mrb[0].mxu0
    %v564 = vadd.f32 %v317, %v563
    %v565 = vpop.f32.mrb[0].mxu0
    %v566 = vpop.f32.mrb[0].mxu0
    %v567 = vpop.f32.mrb[0].mxu0
    %568 = vdwg.mxu0
    %v569 = vld [vmem:[#allocation3] sm:$0xff]
    %v570 = vld [vmem:[#allocation3 + $0x8] sm:$0xf]
    %v571 = vld [vmem:[#allocation3 + $0xc] sm:$0xff]
    %v572 = vld [vmem:[#allocation3 + $0x14] sm:$0xf]
    %v573 = vld [vmem:[#allocation3 + $0x18] sm:$0xff]
    %v574 = vld [vmem:[#allocation3 + $0x20] sm:$0xf]
    %v575 = vld [vmem:[#allocation3 + $0x24] sm:$0xff]
    %v576 = vld [vmem:[#allocation3 + $0x2c] sm:$0xf]
    %v577 = vld [vmem:[#allocation3 + $0x30] sm:$0xff]
    %v578 = vld [vmem:[#allocation3 + $0x38] sm:$0xf]
    %v579 = vld [vmem:[#allocation3 + $0x3c] sm:$0xff]
    %v580 = vld [vmem:[#allocation3 + $0x44] sm:$0xf]
    %v581 = vld [vmem:[#allocation3 + $0x48] sm:$0xff]
    %v582 = vld [vmem:[#allocation3 + $0x50] sm:$0xf]
    %v583 = vld [vmem:[#allocation3 + $0x54] sm:$0xff]
    %v584 = vld [vmem:[#allocation3 + $0x5c] sm:$0xf]
    %v585 = vld [vmem:[#allocation3 + $0x60] sm:$0xff]
    %v586 = vld [vmem:[#allocation3 + $0x68] sm:$0xf]
    %v587 = vld [vmem:[#allocation3 + $0x6c] sm:$0xff]
    %v588 = vld [vmem:[#allocation3 + $0x74] sm:$0xf]
    %v589 = vld [vmem:[#allocation3 + $0x78] sm:$0xff]
    %v590 = vld [vmem:[#allocation3 + $0x80] sm:$0xf]
    %v591 = vld [vmem:[#allocation3 + $0x84] sm:$0xff]
    %v592 = vld [vmem:[#allocation3 + $0x8c] sm:$0xf]
    %v593 = vld [vmem:[#allocation3 + $0x90] sm:$0xff]
    %v594 = vld [vmem:[#allocation3 + $0x98] sm:$0xf]
    %v595 = vld [vmem:[#allocation3 + $0x9c] sm:$0xff]
    %v596 = vld [vmem:[#allocation3 + $0xa4] sm:$0xf]
    %v597 = vld [vmem:[#allocation3 + $0xa8] sm:$0xff]
    %v598 = vld [vmem:[#allocation3 + $0xb0] sm:$0xf]
    %v599 = vld [vmem:[#allocation3 + $0xb4] sm:$0xff]
    %v600 = vld [vmem:[#allocation3 + $0xbc] sm:$0xf]
    %v633 = vunpack.c.l.b16 %v569
    %v634 = vunpack.c.h.b16 %v569
    %v635 = vunpack.c.l.b16 %v570
    %v636 = vunpack.c.l.b16 %v571
    %v637 = vunpack.c.h.b16 %v571
    %v638 = vunpack.c.l.b16 %v572
    %v639 = vunpack.c.l.b16 %v573
    %v640 = vunpack.c.h.b16 %v573
    %v641 = vunpack.c.l.b16 %v574
    %v642 = vunpack.c.l.b16 %v575
    %v643 = vunpack.c.h.b16 %v575
    %v644 = vunpack.c.l.b16 %v576
    %v645 = vunpack.c.l.b16 %v577
    %v646 = vunpack.c.h.b16 %v577
    %v647 = vunpack.c.l.b16 %v578
    %v648 = vunpack.c.l.b16 %v579
    %v649 = vunpack.c.h.b16 %v579
    %v650 = vunpack.c.l.b16 %v580
    %v651 = vunpack.c.l.b16 %v581
    %v652 = vunpack.c.h.b16 %v581
    %v653 = vunpack.c.l.b16 %v582
    %v654 = vunpack.c.l.b16 %v583
    %v655 = vunpack.c.h.b16 %v583
    %v656 = vunpack.c.l.b16 %v584
    %v657 = vunpack.c.l.b16 %v585
    %v658 = vunpack.c.h.b16 %v585
    %v659 = vunpack.c.l.b16 %v586
    %v660 = vunpack.c.l.b16 %v587
    %v661 = vunpack.c.h.b16 %v587
    %v662 = vunpack.c.l.b16 %v588
    %v663 = vunpack.c.l.b16 %v589
    %v664 = vunpack.c.h.b16 %v589
    %v665 = vunpack.c.l.b16 %v590
    %v666 = vunpack.c.l.b16 %v591
    %v667 = vunpack.c.h.b16 %v591
    %v668 = vunpack.c.l.b16 %v592
    %v669 = vunpack.c.l.b16 %v593
    %v670 = vunpack.c.h.b16 %v593
    %v671 = vunpack.c.l.b16 %v594
    %v672 = vunpack.c.l.b16 %v595
    %v673 = vunpack.c.h.b16 %v595
    %v674 = vunpack.c.l.b16 %v596
    %v675 = vunpack.c.l.b16 %v597
    %v676 = vunpack.c.h.b16 %v597
    %v677 = vunpack.c.l.b16 %v598
    %v678 = vunpack.c.l.b16 %v599
    %v679 = vunpack.c.h.b16 %v599
    %v680 = vunpack.c.l.b16 %v600
    %v681 = vpack.c.b16 %v636, %v633
    %v682 = vpack.c.b16 %v637, %v634
    %v683 = vpack.c.b16 %v638, %v635
    %v684 = vpack.c.b16 %v642, %v639
    %v685 = vpack.c.b16 %v643, %v640
    %v686 = vpack.c.b16 %v644, %v641
    %v687 = vpack.c.b16 %v648, %v645
    %v688 = vpack.c.b16 %v649, %v646
    %v689 = vpack.c.b16 %v650, %v647
    %v690 = vpack.c.b16 %v654, %v651
    %v691 = vpack.c.b16 %v655, %v652
    %v692 = vpack.c.b16 %v656, %v653
    %v693 = vpack.c.b16 %v660, %v657
    %v694 = vpack.c.b16 %v661, %v658
    %v695 = vpack.c.b16 %v662, %v659
    %v696 = vpack.c.b16 %v666, %v663
    %v697 = vpack.c.b16 %v667, %v664
    %v698 = vpack.c.b16 %v668, %v665
    %v699 = vpack.c.b16 %v672, %v669
    %v700 = vpack.c.b16 %v673, %v670
    %v701 = vpack.c.b16 %v674, %v671
    %v702 = vpack.c.b16 %v678, %v675
    %v703 = vpack.c.b16 %v679, %v676
    %v704 = vpack.c.b16 %v680, %v677
    %729 = vmatprep.subr.bf16.mxu0 %v682
    %730 = vmatpush1.bf16.msra.mxu0 %v681
    %731 = vmatprep.subr.bf16.mxu0 %v685
    %732 = vmatpush1.bf16.msra.mxu0 %v684
    %733 = vmatprep.subr.bf16.mxu0 %v688
    %734 = vmatpush1.bf16.msra.mxu0 %v687
    %735 = vmatprep.subr.bf16.mxu0 %v691
    %736 = vmatpush1.bf16.msra.mxu0 %v690
    %737 = vmatprep.subr.bf16.mxu0 %v694
    %738 = vmatpush1.bf16.msra.mxu0 %v693
    %739 = vmatprep.subr.bf16.mxu0 %v697
    %740 = vmatpush1.bf16.msra.mxu0 %v696
    %741 = vmatprep.subr.bf16.mxu0 %v700
    %742 = vmatpush1.bf16.msra.mxu0 %v699
    %743 = vmatprep.subr.bf16.mxu0 %v703
    %744 = vmatpush1.bf16.msra.mxu0 %v702
    %745 = vmatprep.subr.bf16.mxu0 0
    %746 = vmatpush1.bf16.msra.mxu0 0
    %747 = vmatprep.subr.bf16.mxu0 0
    %748 = vmatpush1.bf16.msra.mxu0 0
    %749 = vmatprep.subr.bf16.mxu0 0
    %750 = vmatpush1.bf16.msra.mxu0 0
    %751 = vmatprep.subr.bf16.mxu0 0
    %752 = vmatpush1.bf16.msra.mxu0 0
    %753 = vmatprep.subr.bf16.mxu0 0
    %754 = vmatpush1.bf16.msra.mxu0 0
    %755 = vmatprep.subr.bf16.mxu0 0
    %756 = vmatpush1.bf16.msra.mxu0 0
    %757 = vmatprep.subr.bf16.mxu0 0
    %758 = vmatpush1.bf16.msra.mxu0 0
    %759 = vmatprep.subr.bf16.mxu0 0
    %760 = vmatpush1.bf16.msra.mxu0 0
    %761 = vmatprep.mubr.bf16.mxu0 0
    %762 = vmatmul.mubr.bf16.gmra.mrb[0].mxu0 0
    %v763 = vpop.f32.mrb[0].mxu0
    %v764 = vadd.f32 %v285, %v763
    %v765 = vpop.f32.mrb[0].mxu0
    %v766 = vadd.f32 %v289, %v765
    %v767 = vpop.f32.mrb[0].mxu0
    %v768 = vpop.f32.mrb[0].mxu0
    %769 = vdwg.mxu0
    %770 = vmatprep.subr.bf16.mxu0 0
    %771 = vmatpush1.bf16.msra.mxu0 %v683
    %772 = vmatprep.subr.bf16.mxu0 0
    %773 = vmatpush1.bf16.msra.mxu0 %v686
    %774 = vmatprep.subr.bf16.mxu0 0
    %775 = vmatpush1.bf16.msra.mxu0 %v689
    %776 = vmatprep.subr.bf16.mxu0 0
    %777 = vmatpush1.bf16.msra.mxu0 %v692
    %778 = vmatprep.subr.bf16.mxu0 0
    %779 = vmatpush1.bf16.msra.mxu0 %v695
    %780 = vmatprep.subr.bf16.mxu0 0
    %781 = vmatpush1.bf16.msra.mxu0 %v698
    %782 = vmatprep.subr.bf16.mxu0 0
    %783 = vmatpush1.bf16.msra.mxu0 %v701
    %784 = vmatprep.subr.bf16.mxu0 0
    %785 = vmatpush1.bf16.msra.mxu0 %v704
    %786 = vmatprep.subr.bf16.mxu0 0
    %787 = vmatpush1.bf16.msra.mxu0 0
    %788 = vmatprep.subr.bf16.mxu0 0
    %789 = vmatpush1.bf16.msra.mxu0 0
    %790 = vmatprep.subr.bf16.mxu0 0
    %791 = vmatpush1.bf16.msra.mxu0 0
    %792 = vmatprep.subr.bf16.mxu0 0
    %793 = vmatpush1.bf16.msra.mxu0 0
    %794 = vmatprep.subr.bf16.mxu0 0
    %795 = vmatpush1.bf16.msra.mxu0 0
    %796 = vmatprep.subr.bf16.mxu0 0
    %797 = vmatpush1.bf16.msra.mxu0 0
    %798 = vmatprep.subr.bf16.mxu0 0
    %799 = vmatpush1.bf16.msra.mxu0 0
    %800 = vmatprep.subr.bf16.mxu0 0
    %801 = vmatpush1.bf16.msra.mxu0 0
    %802 = vmatprep.mubr.bf16.mxu0 0
    %803 = vmatmul.mubr.bf16.gmra.mrb[0].mxu0 0
    %v804 = vpop.f32.mrb[0].mxu0
    %v805 = vadd.f32 %v293, %v804
    %v806 = vpop.f32.mrb[0].mxu0
    %v807 = vpop.f32.mrb[0].mxu0
    %v808 = vpop.f32.mrb[0].mxu0
    %809 = vdwg.mxu0
    %v810 = vld [vmem:[#allocation2] sm:$0xff]
    %v811 = vld [vmem:[#allocation2 + $0x8] sm:$0xff]
    %v812 = vld [vmem:[#allocation2 + $0x10] sm:$0xff]
    %v813 = vadd.f32 %v810, %v764
    %v814 = vxor.u32 %v813, 2147483648
    %v815 = vmul.f32 %v814, 1.442695
    %v816 = vpow.pop %v815
    %v817 = vadd.f32 %v816, 1.0
    %v818 = vrcp.pop %v817
    %v819 = vmul.f32 1.0, %v818
    %v820 = vadd.f32 %v811, %v766
    %v821 = vxor.u32 %v820, 2147483648
    %v822 = vmul.f32 %v821, 1.442695
    %v823 = vpow.pop %v822
    %v824 = vadd.f32 %v823, 1.0
    %v825 = vrcp.pop %v824
    %v826 = vmul.f32 1.0, %v825
    %v827 = vadd.f32 %v812, %v302
    %v828 = vmul.f32 %v819, %v805
    %v829 = vadd.f32 %v827, %v828
    %v830 = vtanh.pop %v829
    %v831 = vsub.f32 1.0, %v826
    %v832 = vmul.f32 %v831, %v830
    %v833 = vmul.f32 %v826, 0.0
    %v834 = vadd.f32 %v832, %v833
    %v835 = vpack.c.bf16 %v834, %v834
    %v836 = vld [vmem:[#allocation3 + $0xc0] sm:$0xff]
    %v837 = vld [vmem:[#allocation3 + $0xc8] sm:$0xf]
    %v838 = vld [vmem:[#allocation3 + $0xcc] sm:$0xff]
    %v839 = vld [vmem:[#allocation3 + $0xd4] sm:$0xf]
    %v840 = vld [vmem:[#allocation3 + $0xd8] sm:$0xff]
    %v841 = vld [vmem:[#allocation3 + $0xe0] sm:$0xf]
    %v842 = vld [vmem:[#allocation3 + $0xe4] sm:$0xff]
    %v843 = vld [vmem:[#allocation3 + $0xec] sm:$0xf]
    %v844 = vld [vmem:[#allocation3 + $0xf0] sm:$0xff]
    %v845 = vld [vmem:[#allocation3 + $0xf8] sm:$0xf]
    %v846 = vld [vmem:[#allocation3 + $0xfc] sm:$0xff]
    %v847 = vld [vmem:[#allocation3 + $0x104] sm:$0xf]
    %v848 = vld [vmem:[#allocation3 + $0x108] sm:$0xff]
    %v849 = vld [vmem:[#allocation3 + $0x110] sm:$0xf]
    %v850 = vld [vmem:[#allocation3 + $0x114] sm:$0xff]
    %v851 = vld [vmem:[#allocation3 + $0x11c] sm:$0xf]
    %v852 = vld [vmem:[#allocation3 + $0x120] sm:$0xff]
    %v853 = vld [vmem:[#allocation3 + $0x128] sm:$0xf]
    %v854 = vld [vmem:[#allocation3 + $0x12c] sm:$0xff]
    %v855 = vld [vmem:[#allocation3 + $0x134] sm:$0xf]
    %v856 = vld [vmem:[#allocation3 + $0x138] sm:$0xff]
    %v857 = vld [vmem:[#allocation3 + $0x140] sm:$0xf]
    %v858 = vld [vmem:[#allocation3 + $0x144] sm:$0xff]
    %v859 = vld [vmem:[#allocation3 + $0x14c] sm:$0xf]
    %v860 = vld [vmem:[#allocation3 + $0x150] sm:$0xff]
    %v861 = vld [vmem:[#allocation3 + $0x158] sm:$0xf]
    %v862 = vld [vmem:[#allocation3 + $0x15c] sm:$0xff]
    %v863 = vld [vmem:[#allocation3 + $0x164] sm:$0xf]
    %v864 = vld [vmem:[#allocation3 + $0x168] sm:$0xff]
    %v865 = vld [vmem:[#allocation3 + $0x170] sm:$0xf]
    %v866 = vld [vmem:[#allocation3 + $0x174] sm:$0xff]
    %v867 = vld [vmem:[#allocation3 + $0x17c] sm:$0xf]
    %v900 = vunpack.c.l.b16 %v836
    %v901 = vunpack.c.h.b16 %v836
    %v902 = vunpack.c.l.b16 %v837
    %v903 = vunpack.c.l.b16 %v838
    %v904 = vunpack.c.h.b16 %v838
    %v905 = vunpack.c.l.b16 %v839
    %v906 = vunpack.c.l.b16 %v840
    %v907 = vunpack.c.h.b16 %v840
    %v908 = vunpack.c.l.b16 %v841
    %v909 = vunpack.c.l.b16 %v842
    %v910 = vunpack.c.h.b16 %v842
    %v911 = vunpack.c.l.b16 %v843
    %v912 = vunpack.c.l.b16 %v844
    %v913 = vunpack.c.h.b16 %v844
    %v914 = vunpack.c.l.b16 %v845
    %v915 = vunpack.c.l.b16 %v846
    %v916 = vunpack.c.h.b16 %v846
    %v917 = vunpack.c.l.b16 %v847
    %v918 = vunpack.c.l.b16 %v848
    %v919 = vunpack.c.h.b16 %v848
    %v920 = vunpack.c.l.b16 %v849
    %v921 = vunpack.c.l.b16 %v850
    %v922 = vunpack.c.h.b16 %v850
    %v923 = vunpack.c.l.b16 %v851
    %v924 = vunpack.c.l.b16 %v852
    %v925 = vunpack.c.h.b16 %v852
    %v926 = vunpack.c.l.b16 %v853
    %v927 = vunpack.c.l.b16 %v854
    %v928 = vunpack.c.h.b16 %v854
    %v929 = vunpack.c.l.b16 %v855
    %v930 = vunpack.c.l.b16 %v856
    %v931 = vunpack.c.h.b16 %v856
    %v932 = vunpack.c.l.b16 %v857
    %v933 = vunpack.c.l.b16 %v858
    %v934 = vunpack.c.h.b16 %v858
    %v935 = vunpack.c.l.b16 %v859
    %v936 = vunpack.c.l.b16 %v860
    %v937 = vunpack.c.h.b16 %v860
    %v938 = vunpack.c.l.b16 %v861
    %v939 = vunpack.c.l.b16 %v862
    %v940 = vunpack.c.h.b16 %v862
    %v941 = vunpack.c.l.b16 %v863
    %v942 = vunpack.c.l.b16 %v864
    %v943 = vunpack.c.h.b16 %v864
    %v944 = vunpack.c.l.b16 %v865
    %v945 = vunpack.c.l.b16 %v866
    %v946 = vunpack.c.h.b16 %v866
    %v947 = vunpack.c.l.b16 %v867
    %v948 = vpack.c.b16 %v903, %v900
    %v949 = vpack.c.b16 %v904, %v901
    %v950 = vpack.c.b16 %v905, %v902
    %v951 = vpack.c.b16 %v909, %v906
    %v952 = vpack.c.b16 %v910, %v907
    %v953 = vpack.c.b16 %v911, %v908
    %v954 = vpack.c.b16 %v915, %v912
    %v955 = vpack.c.b16 %v916, %v913
    %v956 = vpack.c.b16 %v917, %v914
    %v957 = vpack.c.b16 %v921, %v918
    %v958 = vpack.c.b16 %v922, %v919
    %v959 = vpack.c.b16 %v923, %v920
    %v960 = vpack.c.b16 %v927, %v924
    %v961 = vpack.c.b16 %v928, %v925
    %v962 = vpack.c.b16 %v929, %v926
    %v963 = vpack.c.b16 %v933, %v930
    %v964 = vpack.c.b16 %v934, %v931
    %v965 = vpack.c.b16 %v935, %v932
    %v966 = vpack.c.b16 %v939, %v936
    %v967 = vpack.c.b16 %v940, %v937
    %v968 = vpack.c.b16 %v941, %v938
    %v969 = vpack.c.b16 %v945, %v942
    %v970 = vpack.c.b16 %v946, %v943
    %v971 = vpack.c.b16 %v947, %v944
    %996 = vmatprep.subr.bf16.mxu0 %v949
    %997 = vmatpush1.bf16.msra.mxu0 %v948
    %998 = vmatprep.subr.bf16.mxu0 %v952
    %999 = vmatpush1.bf16.msra.mxu0 %v951
    %1000 = vmatprep.subr.bf16.mxu0 %v955
    %1001 = vmatpush1.bf16.msra.mxu0 %v954
    %1002 = vmatprep.subr.bf16.mxu0 %v958
    %1003 = vmatpush1.bf16.msra.mxu0 %v957
    %1004 = vmatprep.subr.bf16.mxu0 %v961
    %1005 = vmatpush1.bf16.msra.mxu0 %v960
    %1006 = vmatprep.subr.bf16.mxu0 %v964
    %1007 = vmatpush1.bf16.msra.mxu0 %v963
    %1008 = vmatprep.subr.bf16.mxu0 %v967
    %1009 = vmatpush1.bf16.msra.mxu0 %v966
    %1010 = vmatprep.subr.bf16.mxu0 %v970
    %1011 = vmatpush1.bf16.msra.mxu0 %v969
    %1012 = vmatprep.subr.bf16.mxu0 0
    %1013 = vmatpush1.bf16.msra.mxu0 0
    %1014 = vmatprep.subr.bf16.mxu0 0
    %1015 = vmatpush1.bf16.msra.mxu0 0
    %1016 = vmatprep.subr.bf16.mxu0 0
    %1017 = vmatpush1.bf16.msra.mxu0 0
    %1018 = vmatprep.subr.bf16.mxu0 0
    %1019 = vmatpush1.bf16.msra.mxu0 0
    %1020 = vmatprep.subr.bf16.mxu0 0
    %1021 = vmatpush1.bf16.msra.mxu0 0
    %1022 = vmatprep.subr.bf16.mxu0 0
    %1023 = vmatpush1.bf16.msra.mxu0 0
    %1024 = vmatprep.subr.bf16.mxu0 0
    %1025 = vmatpush1.bf16.msra.mxu0 0
    %1026 = vmatprep.subr.bf16.mxu0 0
    %1027 = vmatpush1.bf16.msra.mxu0 0
    %1028 = vmatprep.mubr.bf16.mxu0 0
    %1029 = vmatmul.mubr.bf16.gmra.mrb[0].mxu0 %v835
    %v1030 = vpop.f32.mrb[0].mxu0
    %v1031 = vadd.f32 0.0, %v1030
    %v1032 = vpop.f32.mrb[0].mxu0
    %v1033 = vadd.f32 0.0, %v1032
    %v1034 = vpop.f32.mrb[0].mxu0
    %v1035 = vpop.f32.mrb[0].mxu0
    %1036 = vdwg.mxu0
    %1037 = vmatprep.subr.bf16.mxu0 0
    %1038 = vmatpush1.bf16.msra.mxu0 %v950
    %1039 = vmatprep.subr.bf16.mxu0 0
    %1040 = vmatpush1.bf16.msra.mxu0 %v953
    %1041 = vmatprep.subr.bf16.mxu0 0
    %1042 = vmatpush1.bf16.msra.mxu0 %v956
    %1043 = vmatprep.subr.bf16.mxu0 0
    %1044 = vmatpush1.bf16.msra.mxu0 %v959
    %1045 = vmatprep.subr.bf16.mxu0 0
    %1046 = vmatpush1.bf16.msra.mxu0 %v962
    %1047 = vmatprep.subr.bf16.mxu0 0
    %1048 = vmatpush1.bf16.msra.mxu0 %v965
    %1049 = vmatprep.subr.bf16.mxu0 0
    %1050 = vmatpush1.bf16.msra.mxu0 %v968
    %1051 = vmatprep.subr.bf16.mxu0 0
    %1052 = vmatpush1.bf16.msra.mxu0 %v971
    %1053 = vmatprep.subr.bf16.mxu0 0
    %1054 = vmatpush1.bf16.msra.mxu0 0
    %1055 = vmatprep.subr.bf16.mxu0 0
    %1056 = vmatpush1.bf16.msra.mxu0 0
    %1057 = vmatprep.subr.bf16.mxu0 0
    %1058 = vmatpush1.bf16.msra.mxu0 0
    %1059 = vmatprep.subr.bf16.mxu0 0
    %1060 = vmatpush1.bf16.msra.mxu0 0
    %1061 = vmatprep.subr.bf16.mxu0 0
    %1062 = vmatpush1.bf16.msra.mxu0 0
    %1063 = vmatprep.subr.bf16.mxu0 0
    %1064 = vmatpush1.bf16.msra.mxu0 0
    %1065 = vmatprep.subr.bf16.mxu0 0
    %1066 = vmatpush1.bf16.msra.mxu0 0
    %1067 = vmatprep.subr.bf16.mxu0 0
    %1068 = vmatpush1.bf16.msra.mxu0 0
    %1069 = vmatprep.mubr.bf16.mxu0 0
    %1070 = vmatmul.mubr.bf16.gmra.mrb[0].mxu0 %v835
    %v1071 = vpop.f32.mrb[0].mxu0
    %v1072 = vadd.f32 0.0, %v1071
    %v1073 = vpop.f32.mrb[0].mxu0
    %v1074 = vpop.f32.mrb[0].mxu0
    %v1075 = vpop.f32.mrb[0].mxu0
    %1076 = vdwg.mxu0
    %v1077 = vadd.f32 %v1031, %v523
    %v1078 = vxor.u32 %v1077, 2147483648
    %v1079 = vmul.f32 %v1078, 1.442695
    %v1080 = vpow.pop %v1079
    %v1081 = vadd.f32 %v1080, 1.0
    %v1082 = vrcp.pop %v1081
    %v1083 = vmul.f32 1.0, %v1082
    %v1084 = vadd.f32 %v1033, %v525
    %v1085 = vxor.u32 %v1084, 2147483648
    %v1086 = vmul.f32 %v1085, 1.442695
    %v1087 = vpow.pop %v1086
    %v1088 = vadd.f32 %v1087, 1.0
    %v1089 = vrcp.pop %v1088
    %v1090 = vmul.f32 1.0, %v1089
    %v1091 = vadd.f32 %v1072, %v326
    %v1092 = vmul.f32 %v1083, %v564
    %v1093 = vadd.f32 %v1091, %v1092
    %v1094 = vtanh.pop %v1093
    %v1095 = vsub.f32 1.0, %v1090
    %v1096 = vmul.f32 %v1095, %v1094
    %v1097 = vmul.f32 %v1090, 0.0
    %v1098 = vadd.f32 %v1096, %v1097
    %v1099 = vpack.c.bf16 %v1098, %v1098
    %1100 = vmatprep.subr.bf16.mxu0 %v441
    %1101 = vmatpush1.bf16.msra.mxu0 %v440
    %1102 = vmatprep.subr.bf16.mxu0 %v444
    %1103 = vmatpush1.bf16.msra.mxu0 %v443
    %1104 = vmatprep.subr.bf16.mxu0 %v447
    %1105 = vmatpush1.bf16.msra.mxu0 %v446
    %1106 = vmatprep.subr.bf16.mxu0 %v450
    %1107 = vmatpush1.bf16.msra.mxu0 %v449
    %1108 = vmatprep.subr.bf16.mxu0 %v453
    %1109 = vmatpush1.bf16.msra.mxu0 %v452
    %1110 = vmatprep.subr.bf16.mxu0 %v456
    %1111 = vmatpush1.bf16.msra.mxu0 %v455
    %1112 = vmatprep.subr.bf16.mxu0 %v459
    %1113 = vmatpush1.bf16.msra.mxu0 %v458
    %1114 = vmatprep.subr.bf16.mxu0 %v462
    %1115 = vmatpush1.bf16.msra.mxu0 %v461
    %1116 = vmatprep.subr.bf16.mxu0 0
    %1117 = vmatpush1.bf16.msra.mxu0 0
    %1118 = vmatprep.subr.bf16.mxu0 0
    %1119 = vmatpush1.bf16.msra.mxu0 0
    %1120 = vmatprep.subr.bf16.mxu0 0
    %1121 = vmatpush1.bf16.msra.mxu0 0
    %1122 = vmatprep.subr.bf16.mxu0 0
    %1123 = vmatpush1.bf16.msra.mxu0 0
    %1124 = vmatprep.subr.bf16.mxu0 0
    %1125 = vmatpush1.bf16.msra.mxu0 0
    %1126 = vmatprep.subr.bf16.mxu0 0
    %1127 = vmatpush1.bf16.msra.mxu0 0
    %1128 = vmatprep.subr.bf16.mxu0 0
    %1129 = vmatpush1.bf16.msra.mxu0 0
    %1130 = vmatprep.subr.bf16.mxu0 0
    %1131 = vmatpush1.bf16.msra.mxu0 0
    %1132 = vmatprep.mubr.bf16.mxu0 0
    %1133 = vmatmul.mubr.bf16.gmra.mrb[0].mxu0 %v1099
    %v1134 = vpop.f32.mrb[0].mxu0
    %v1135 = vadd.f32 %v309, %v1134
    %v1136 = vpop.f32.mrb[0].mxu0
    %v1137 = vadd.f32 %v313, %v1136
    %v1138 = vpop.f32.mrb[0].mxu0
    %v1139 = vpop.f32.mrb[0].mxu0
    %1140 = vdwg.mxu0
    %1141 = vmatprep.subr.bf16.mxu0 0
    %1142 = vmatpush1.bf16.msra.mxu0 %v442
    %1143 = vmatprep.subr.bf16.mxu0 0
    %1144 = vmatpush1.bf16.msra.mxu0 %v445
    %1145 = vmatprep.subr.bf16.mxu0 0
    %1146 = vmatpush1.bf16.msra.mxu0 %v448
    %1147 = vmatprep.subr.bf16.mxu0 0
    %1148 = vmatpush1.bf16.msra.mxu0 %v451
    %1149 = vmatprep.subr.bf16.mxu0 0
    %1150 = vmatpush1.bf16.msra.mxu0 %v454
    %1151 = vmatprep.subr.bf16.mxu0 0
    %1152 = vmatpush1.bf16.msra.mxu0 %v457
    %1153 = vmatprep.subr.bf16.mxu0 0
    %1154 = vmatpush1.bf16.msra.mxu0 %v460
    %1155 = vmatprep.subr.bf16.mxu0 0
    %1156 = vmatpush1.bf16.msra.mxu0 %v463
    %1157 = vmatprep.subr.bf16.mxu0 0
    %1158 = vmatpush1.bf16.msra.mxu0 0
    %1159 = vmatprep.subr.bf16.mxu0 0
    %1160 = vmatpush1.bf16.msra.mxu0 0
    %1161 = vmatprep.subr.bf16.mxu0 0
    %1162 = vmatpush1.bf16.msra.mxu0 0
    %1163 = vmatprep.subr.bf16.mxu0 0
    %1164 = vmatpush1.bf16.msra.mxu0 0
    %1165 = vmatprep.subr.bf16.mxu0 0
    %1166 = vmatpush1.bf16.msra.mxu0 0
    %1167 = vmatprep.subr.bf16.mxu0 0
    %1168 = vmatpush1.bf16.msra.mxu0 0
    %1169 = vmatprep.subr.bf16.mxu0 0
    %1170 = vmatpush1.bf16.msra.mxu0 0
    %1171 = vmatprep.subr.bf16.mxu0 0
    %1172 = vmatpush1.bf16.msra.mxu0 0
    %1173 = vmatprep.mubr.bf16.mxu0 0
    %1174 = vmatmul.mubr.bf16.gmra.mrb[0].mxu0 %v1099
    %v1175 = vpop.f32.mrb[0].mxu0
    %v1176 = vadd.f32 %v317, %v1175
    %v1177 = vpop.f32.mrb[0].mxu0
    %v1178 = vpop.f32.mrb[0].mxu0
    %v1179 = vpop.f32.mrb[0].mxu0
    %1180 = vdwg.mxu0
    %1181 = vmatprep.subr.bf16.mxu0 %v682
    %1182 = vmatpush1.bf16.msra.mxu0 %v681
    %1183 = vmatprep.subr.bf16.mxu0 %v685
    %1184 = vmatpush1.bf16.msra.mxu0 %v684
    %1185 = vmatprep.subr.bf16.mxu0 %v688
    %1186 = vmatpush1.bf16.msra.mxu0 %v687
    %1187 = vmatprep.subr.bf16.mxu0 %v691
    %1188 = vmatpush1.bf16.msra.mxu0 %v690
    %1189 = vmatprep.subr.bf16.mxu0 %v694
    %1190 = vmatpush1.bf16.msra.mxu0 %v693
    %1191 = vmatprep.subr.bf16.mxu0 %v697
    %1192 = vmatpush1.bf16.msra.mxu0 %v696
    %1193 = vmatprep.subr.bf16.mxu0 %v700
    %1194 = vmatpush1.bf16.msra.mxu0 %v699
    %1195 = vmatprep.subr.bf16.mxu0 %v703
    %1196 = vmatpush1.bf16.msra.mxu0 %v702
    %1197 = vmatprep.subr.bf16.mxu0 0
    %1198 = vmatpush1.bf16.msra.mxu0 0
    %1199 = vmatprep.subr.bf16.mxu0 0
    %1200 = vmatpush1.bf16.msra.mxu0 0
    %1201 = vmatprep.subr.bf16.mxu0 0
    %1202 = vmatpush1.bf16.msra.mxu0 0
    %1203 = vmatprep.subr.bf16.mxu0 0
    %1204 = vmatpush1.bf16.msra.mxu0 0
    %1205 = vmatprep.subr.bf16.mxu0 0
    %1206 = vmatpush1.bf16.msra.mxu0 0
    %1207 = vmatprep.subr.bf16.mxu0 0
    %1208 = vmatpush1.bf16.msra.mxu0 0
    %1209 = vmatprep.subr.bf16.mxu0 0
    %1210 = vmatpush1.bf16.msra.mxu0 0
    %1211 = vmatprep.subr.bf16.mxu0 0
    %1212 = vmatpush1.bf16.msra.mxu0 0
    %1213 = vmatprep.mubr.bf16.mxu0 0
    %1214 = vmatmul.mubr.bf16.gmra.mrb[0].mxu0 %v835
    %v1215 = vpop.f32.mrb[0].mxu0
    %v1216 = vadd.f32 %v285, %v1215
    %v1217 = vpop.f32.mrb[0].mxu0
    %v1218 = vadd.f32 %v289, %v1217
    %v1219 = vpop.f32.mrb[0].mxu0
    %v1220 = vpop.f32.mrb[0].mxu0
    %1221 = vdwg.mxu0
    %1222 = vmatprep.subr.bf16.mxu0 0
    %1223 = vmatpush1.bf16.msra.mxu0 %v683
    %1224 = vmatprep.subr.bf16.mxu0 0
    %1225 = vmatpush1.bf16.msra.mxu0 %v686
    %1226 = vmatprep.subr.bf16.mxu0 0
    %1227 = vmatpush1.bf16.msra.mxu0 %v689
    %1228 = vmatprep.subr.bf16.mxu0 0
    %1229 = vmatpush1.bf16.msra.mxu0 %v692
    %1230 = vmatprep.subr.bf16.mxu0 0
    %1231 = vmatpush1.bf16.msra.mxu0 %v695
    %1232 = vmatprep.subr.bf16.mxu0 0
    %1233 = vmatpush1.bf16.msra.mxu0 %v698
    %1234 = vmatprep.subr.bf16.mxu0 0
    %1235 = vmatpush1.bf16.msra.mxu0 %v701
    %1236 = vmatprep.subr.bf16.mxu0 0
    %1237 = vmatpush1.bf16.msra.mxu0 %v704
    %1238 = vmatprep.subr.bf16.mxu0 0
    %1239 = vmatpush1.bf16.msra.mxu0 0
    %1240 = vmatprep.subr.bf16.mxu0 0
    %1241 = vmatpush1.bf16.msra.mxu0 0
    %1242 = vmatprep.subr.bf16.mxu0 0
    %1243 = vmatpush1.bf16.msra.mxu0 0
    %1244 = vmatprep.subr.bf16.mxu0 0
    %1245 = vmatpush1.bf16.msra.mxu0 0
    %1246 = vmatprep.subr.bf16.mxu0 0
    %1247 = vmatpush1.bf16.msra.mxu0 0
    %1248 = vmatprep.subr.bf16.mxu0 0
    %1249 = vmatpush1.bf16.msra.mxu0 0
    %1250 = vmatprep.subr.bf16.mxu0 0
    %1251 = vmatpush1.bf16.msra.mxu0 0
    %1252 = vmatprep.subr.bf16.mxu0 0
    %1253 = vmatpush1.bf16.msra.mxu0 0
    %1254 = vmatprep.mubr.bf16.mxu0 0
    %1255 = vmatmul.mubr.bf16.gmra.mrb[0].mxu0 %v835
    %v1256 = vpop.f32.mrb[0].mxu0
    %v1257 = vadd.f32 %v293, %v1256
    %v1258 = vpop.f32.mrb[0].mxu0
    %v1259 = vpop.f32.mrb[0].mxu0
    %v1260 = vpop.f32.mrb[0].mxu0
    %1261 = vdwg.mxu0
    %v1262 = vld [vmem:[#allocation2 + $0x18] sm:$0xff]
    %v1263 = vld [vmem:[#allocation2 + $0x20] sm:$0xff]
    %v1264 = vld [vmem:[#allocation2 + $0x28] sm:$0xff]
    %v1265 = vadd.f32 %v1262, %v1216
    %v1266 = vxor.u32 %v1265, 2147483648
    %v1267 = vmul.f32 %v1266, 1.442695
    %v1268 = vpow.pop %v1267
    %v1269 = vadd.f32 %v1268, 1.0
    %v1270 = vrcp.pop %v1269
    %v1271 = vmul.f32 1.0, %v1270
    %v1272 = vadd.f32 %v1263, %v1218
    %v1273 = vxor.u32 %v1272, 2147483648
    %v1274 = vmul.f32 %v1273, 1.442695
    %v1275 = vpow.pop %v1274
    %v1276 = vadd.f32 %v1275, 1.0
    %v1277 = vrcp.pop %v1276
    %v1278 = vmul.f32 1.0, %v1277
    %v1279 = vadd.f32 %v1264, %v302
    %v1280 = vmul.f32 %v1271, %v1257
    %v1281 = vadd.f32 %v1279, %v1280
    %v1282 = vtanh.pop %v1281
    %v1283 = vsub.f32 1.0, %v1278
    %v1284 = vmul.f32 %v1283, %v1282
    %v1285 = vmul.f32 %v1278, %v834
    %v1286 = vadd.f32 %v1284, %v1285
    %v1287 = vpack.c.bf16 %v1286, %v1286
    %1288 = vmatprep.subr.bf16.mxu0 %v949
    %1289 = vmatpush1.bf16.msra.mxu0 %v948
    %1290 = vmatprep.subr.bf16.mxu0 %v952
    %1291 = vmatpush1.bf16.msra.mxu0 %v951
    %1292 = vmatprep.subr.bf16.mxu0 %v955
    %1293 = vmatpush1.bf16.msra.mxu0 %v954
    %1294 = vmatprep.subr.bf16.mxu0 %v958
    %1295 = vmatpush1.bf16.msra.mxu0 %v957
    %1296 = vmatprep.subr.bf16.mxu0 %v961
    %1297 = vmatpush1.bf16.msra.mxu0 %v960
    %1298 = vmatprep.subr.bf16.mxu0 %v964
    %1299 = vmatpush1.bf16.msra.mxu0 %v963
    %1300 = vmatprep.subr.bf16.mxu0 %v967
    %1301 = vmatpush1.bf16.msra.mxu0 %v966
    %1302 = vmatprep.subr.bf16.mxu0 %v970
    %1303 = vmatpush1.bf16.msra.mxu0 %v969
    %1304 = vmatprep.subr.bf16.mxu0 0
    %1305 = vmatpush1.bf16.msra.mxu0 0
    %1306 = vmatprep.subr.bf16.mxu0 0
    %1307 = vmatpush1.bf16.msra.mxu0 0
    %1308 = vmatprep.subr.bf16.mxu0 0
    %1309 = vmatpush1.bf16.msra.mxu0 0
    %1310 = vmatprep.subr.bf16.mxu0 0
    %1311 = vmatpush1.bf16.msra.mxu0 0
    %1312 = vmatprep.subr.bf16.mxu0 0
    %1313 = vmatpush1.bf16.msra.mxu0 0
    %1314 = vmatprep.subr.bf16.mxu0 0
    %1315 = vmatpush1.bf16.msra.mxu0 0
    %1316 = vmatprep.subr.bf16.mxu0 0
    %1317 = vmatpush1.bf16.msra.mxu0 0
    %1318 = vmatprep.subr.bf16.mxu0 0
    %1319 = vmatpush1.bf16.msra.mxu0 0
    %1320 = vmatprep.mubr.bf16.mxu0 0
    %1321 = vmatmul.mubr.bf16.gmra.mrb[0].mxu0 %v1287
    %v1322 = vpop.f32.mrb[0].mxu0
    %v1323 = vadd.f32 0.0, %v1322
    %v1324 = vpop.f32.mrb[0].mxu0
    %v1325 = vadd.f32 0.0, %v1324
    %v1326 = vpop.f32.mrb[0].mxu0
    %v1327 = vpop.f32.mrb[0].mxu0
    %1328 = vdwg.mxu0
    %1329 = vmatprep.subr.bf16.mxu0 0
    %1330 = vmatpush1.bf16.msra.mxu0 %v950
    %1331 = vmatprep.subr.bf16.mxu0 0
    %1332 = vmatpush1.bf16.msra.mxu0 %v953
    %1333 = vmatprep.subr.bf16.mxu0 0
    %1334 = vmatpush1.bf16.msra.mxu0 %v956
    %1335 = vmatprep.subr.bf16.mxu0 0
    %1336 = vmatpush1.bf16.msra.mxu0 %v959
    %1337 = vmatprep.subr.bf16.mxu0 0
    %1338 = vmatpush1.bf16.msra.mxu0 %v962
    %1339 = vmatprep.subr.bf16.mxu0 0
    %1340 = vmatpush1.bf16.msra.mxu0 %v965
    %1341 = vmatprep.subr.bf16.mxu0 0
    %1342 = vmatpush1.bf16.msra.mxu0 %v968
    %1343 = vmatprep.subr.bf16.mxu0 0
    %1344 = vmatpush1.bf16.msra.mxu0 %v971
    %1345 = vmatprep.subr.bf16.mxu0 0
    %1346 = vmatpush1.bf16.msra.mxu0 0
    %1347 = vmatprep.subr.bf16.mxu0 0
    %1348 = vmatpush1.bf16.msra.mxu0 0
    %1349 = vmatprep.subr.bf16.mxu0 0
    %1350 = vmatpush1.bf16.msra.mxu0 0
    %1351 = vmatprep.subr.bf16.mxu0 0
    %1352 = vmatpush1.bf16.msra.mxu0 0
    %1353 = vmatprep.subr.bf16.mxu0 0
    %1354 = vmatpush1.bf16.msra.mxu0 0
    %1355 = vmatprep.subr.bf16.mxu0 0
    %1356 = vmatpush1.bf16.msra.mxu0 0
    %1357 = vmatprep.subr.bf16.mxu0 0
    %1358 = vmatpush1.bf16.msra.mxu0 0
    %1359 = vmatprep.subr.bf16.mxu0 0
    %1360 = vmatpush1.bf16.msra.mxu0 0
    %1361 = vmatprep.mubr.bf16.mxu0 0
    %1362 = vmatmul.mubr.bf16.gmra.mrb[0].mxu0 %v1287
    %v1363 = vpop.f32.mrb[0].mxu0
    %v1364 = vadd.f32 0.0, %v1363
    %v1365 = vpop.f32.mrb[0].mxu0
    %v1366 = vpop.f32.mrb[0].mxu0
    %v1367 = vpop.f32.mrb[0].mxu0
    %1368 = vdwg.mxu0
    %v1369 = vadd.f32 %v1323, %v1135
    %v1370 = vxor.u32 %v1369, 2147483648
    %v1371 = vmul.f32 %v1370, 1.442695
    %v1372 = vpow.pop %v1371
    %v1373 = vadd.f32 %v1372, 1.0
    %v1374 = vrcp.pop %v1373
    %v1375 = vmul.f32 1.0, %v1374
    %v1376 = vadd.f32 %v1325, %v1137
    %v1377 = vxor.u32 %v1376, 2147483648
    %v1378 = vmul.f32 %v1377, 1.442695
    %v1379 = vpow.pop %v1378
    %v1380 = vadd.f32 %v1379, 1.0
    %v1381 = vrcp.pop %v1380
    %v1382 = vmul.f32 1.0, %v1381
    %v1383 = vadd.f32 %v1364, %v326
    %v1384 = vmul.f32 %v1375, %v1176
    %v1385 = vadd.f32 %v1383, %v1384
    %v1386 = vtanh.pop %v1385
    %v1387 = vsub.f32 1.0, %v1382
    %v1388 = vmul.f32 %v1387, %v1386
    %v1389 = vmul.f32 %v1382, %v1098
    %v1390 = vadd.f32 %v1388, %v1389
    %v1391 = vpack.c.bf16 %v1390, %v1390
    %1392 = vmatprep.subr.bf16.mxu0 %v441
    %1393 = vmatpush1.bf16.msra.mxu0 %v440
    %1394 = vmatprep.subr.bf16.mxu0 %v444
    %1395 = vmatpush1.bf16.msra.mxu0 %v443
    %1396 = vmatprep.subr.bf16.mxu0 %v447
    %1397 = vmatpush1.bf16.msra.mxu0 %v446
    %1398 = vmatprep.subr.bf16.mxu0 %v450
    %1399 = vmatpush1.bf16.msra.mxu0 %v449
    %1400 = vmatprep.subr.bf16.mxu0 %v453
    %1401 = vmatpush1.bf16.msra.mxu0 %v452
    %1402 = vmatprep.subr.bf16.mxu0 %v456
    %1403 = vmatpush1.bf16.msra.mxu0 %v455
    %1404 = vmatprep.subr.bf16.mxu0 %v459
    %1405 = vmatpush1.bf16.msra.mxu0 %v458
    %1406 = vmatprep.subr.bf16.mxu0 %v462
    %1407 = vmatpush1.bf16.msra.mxu0 %v461
    %1408 = vmatprep.subr.bf16.mxu0 0
    %1409 = vmatpush1.bf16.msra.mxu0 0
    %1410 = vmatprep.subr.bf16.mxu0 0
    %1411 = vmatpush1.bf16.msra.mxu0 0
    %1412 = vmatprep.subr.bf16.mxu0 0
    %1413 = vmatpush1.bf16.msra.mxu0 0
    %1414 = vmatprep.subr.bf16.mxu0 0
    %1415 = vmatpush1.bf16.msra.mxu0 0
    %1416 = vmatprep.subr.bf16.mxu0 0
    %1417 = vmatpush1.bf16.msra.mxu0 0
    %1418 = vmatprep.subr.bf16.mxu0 0
    %1419 = vmatpush1.bf16.msra.mxu0 0
    %1420 = vmatprep.subr.bf16.mxu0 0
    %1421 = vmatpush1.bf16.msra.mxu0 0
    %1422 = vmatprep.subr.bf16.mxu0 0
    %1423 = vmatpush1.bf16.msra.mxu0 0
    %1424 = vmatprep.mubr.bf16.mxu0 0
    %1425 = vmatmul.mubr.bf16.gmra.mrb[0].mxu0 %v1391
    %v1426 = vpop.f32.mrb[0].mxu0
    %v1427 = vadd.f32 %v309, %v1426
    %v1428 = vpop.f32.mrb[0].mxu0
    %v1429 = vadd.f32 %v313, %v1428
    %v1430 = vpop.f32.mrb[0].mxu0
    %v1431 = vpop.f32.mrb[0].mxu0
    %1432 = vdwg.mxu0
    %1433 = vmatprep.subr.bf16.mxu0 0
    %1434 = vmatpush1.bf16.msra.mxu0 %v442
    %1435 = vmatprep.subr.bf16.mxu0 0
    %1436 = vmatpush1.bf16.msra.mxu0 %v445
    %1437 = vmatprep.subr.bf16.mxu0 0
    %1438 = vmatpush1.bf16.msra.mxu0 %v448
    %1439 = vmatprep.subr.bf16.mxu0 0
    %1440 = vmatpush1.bf16.msra.mxu0 %v451
    %1441 = vmatprep.subr.bf16.mxu0 0
    %1442 = vmatpush1.bf16.msra.mxu0 %v454
    %1443 = vmatprep.subr.bf16.mxu0 0
    %1444 = vmatpush1.bf16.msra.mxu0 %v457
    %1445 = vmatprep.subr.bf16.mxu0 0
    %1446 = vmatpush1.bf16.msra.mxu0 %v460
    %1447 = vmatprep.subr.bf16.mxu0 0
    %1448 = vmatpush1.bf16.msra.mxu0 %v463
    %1449 = vmatprep.subr.bf16.mxu0 0
    %1450 = vmatpush1.bf16.msra.mxu0 0
    %1451 = vmatprep.subr.bf16.mxu0 0
    %1452 = vmatpush1.bf16.msra.mxu0 0
    %1453 = vmatprep.subr.bf16.mxu0 0
    %1454 = vmatpush1.bf16.msra.mxu0 0
    %1455 = vmatprep.subr.bf16.mxu0 0
    %1456 = vmatpush1.bf16.msra.mxu0 0
    %1457 = vmatprep.subr.bf16.mxu0 0
    %1458 = vmatpush1.bf16.msra.mxu0 0
    %1459 = vmatprep.subr.bf16.mxu0 0
    %1460 = vmatpush1.bf16.msra.mxu0 0
    %1461 = vmatprep.subr.bf16.mxu0 0
    %1462 = vmatpush1.bf16.msra.mxu0 0
    %1463 = vmatprep.subr.bf16.mxu0 0
    %1464 = vmatpush1.bf16.msra.mxu0 0
    %1465 = vmatprep.mubr.bf16.mxu0 0
    %1466 = vmatmul.mubr.bf16.gmra.mrb[0].mxu0 %v1391
    %v1467 = vpop.f32.mrb[0].mxu0
    %v1468 = vadd.f32 %v317, %v1467
    %v1469 = vpop.f32.mrb[0].mxu0
    %v1470 = vpop.f32.mrb[0].mxu0
    %v1471 = vpop.f32.mrb[0].mxu0
    %1472 = vdwg.mxu0
    %1473 = vmatprep.subr.bf16.mxu0 %v682
    %1474 = vmatpush1.bf16.msra.mxu0 %v681
    %1475 = vmatprep.subr.bf16.mxu0 %v685
    %1476 = vmatpush1.bf16.msra.mxu0 %v684
    %1477 = vmatprep.subr.bf16.mxu0 %v688
    %1478 = vmatpush1.bf16.msra.mxu0 %v687
    %1479 = vmatprep.subr.bf16.mxu0 %v691
    %1480 = vmatpush1.bf16.msra.mxu0 %v690
    %1481 = vmatprep.subr.bf16.mxu0 %v694
    %1482 = vmatpush1.bf16.msra.mxu0 %v693
    %1483 = vmatprep.subr.bf16.mxu0 %v697
    %1484 = vmatpush1.bf16.msra.mxu0 %v696
    %1485 = vmatprep.subr.bf16.mxu0 %v700
    %1486 = vmatpush1.bf16.msra.mxu0 %v699
    %1487 = vmatprep.subr.bf16.mxu0 %v703
    %1488 = vmatpush1.bf16.msra.mxu0 %v702
    %1489 = vmatprep.subr.bf16.mxu0 0
    %1490 = vmatpush1.bf16.msra.mxu0 0
    %1491 = vmatprep.subr.bf16.mxu0 0
    %1492 = vmatpush1.bf16.msra.mxu0 0
    %1493 = vmatprep.subr.bf16.mxu0 0
    %1494 = vmatpush1.bf16.msra.mxu0 0
    %1495 = vmatprep.subr.bf16.mxu0 0
    %1496 = vmatpush1.bf16.msra.mxu0 0
    %1497 = vmatprep.subr.bf16.mxu0 0
    %1498 = vmatpush1.bf16.msra.mxu0 0
    %1499 = vmatprep.subr.bf16.mxu0 0
    %1500 = vmatpush1.bf16.msra.mxu0 0
    %1501 = vmatprep.subr.bf16.mxu0 0
    %1502 = vmatpush1.bf16.msra.mxu0 0
    %1503 = vmatprep.subr.bf16.mxu0 0
    %1504 = vmatpush1.bf16.msra.mxu0 0
    %1505 = vmatprep.mubr.bf16.mxu0 0
    %1506 = vmatmul.mubr.bf16.gmra.mrb[0].mxu0 %v1287
    %v1507 = vpop.f32.mrb[0].mxu0
    %v1508 = vadd.f32 %v285, %v1507
    %v1509 = vpop.f32.mrb[0].mxu0
    %v1510 = vadd.f32 %v289, %v1509
    %v1511 = vpop.f32.mrb[0].mxu0
    %v1512 = vpop.f32.mrb[0].mxu0
    %1513 = vdwg.mxu0
    %1514 = vmatprep.subr.bf16.mxu0 0
    %1515 = vmatpush1.bf16.msra.mxu0 %v683
    %1516 = vmatprep.subr.bf16.mxu0 0
    %1517 = vmatpush1.bf16.msra.mxu0 %v686
    %1518 = vmatprep.subr.bf16.mxu0 0
    %1519 = vmatpush1.bf16.msra.mxu0 %v689
    %1520 = vmatprep.subr.bf16.mxu0 0
    %1521 = vmatpush1.bf16.msra.mxu0 %v692
    %1522 = vmatprep.subr.bf16.mxu0 0
    %1523 = vmatpush1.bf16.msra.mxu0 %v695
    %1524 = vmatprep.subr.bf16.mxu0 0
    %1525 = vmatpush1.bf16.msra.mxu0 %v698
    %1526 = vmatprep.subr.bf16.mxu0 0
    %1527 = vmatpush1.bf16.msra.mxu0 %v701
    %1528 = vmatprep.subr.bf16.mxu0 0
    %1529 = vmatpush1.bf16.msra.mxu0 %v704
    %1530 = vmatprep.subr.bf16.mxu0 0
    %1531 = vmatpush1.bf16.msra.mxu0 0
    %1532 = vmatprep.subr.bf16.mxu0 0
    %1533 = vmatpush1.bf16.msra.mxu0 0
    %1534 = vmatprep.subr.bf16.mxu0 0
    %1535 = vmatpush1.bf16.msra.mxu0 0
    %1536 = vmatprep.subr.bf16.mxu0 0
    %1537 = vmatpush1.bf16.msra.mxu0 0
    %1538 = vmatprep.subr.bf16.mxu0 0
    %1539 = vmatpush1.bf16.msra.mxu0 0
    %1540 = vmatprep.subr.bf16.mxu0 0
    %1541 = vmatpush1.bf16.msra.mxu0 0
    %1542 = vmatprep.subr.bf16.mxu0 0
    %1543 = vmatpush1.bf16.msra.mxu0 0
    %1544 = vmatprep.subr.bf16.mxu0 0
    %1545 = vmatpush1.bf16.msra.mxu0 0
    %1546 = vmatprep.mubr.bf16.mxu0 0
    %1547 = vmatmul.mubr.bf16.gmra.mrb[0].mxu0 %v1287
    %v1548 = vpop.f32.mrb[0].mxu0
    %v1549 = vadd.f32 %v293, %v1548
    %v1550 = vpop.f32.mrb[0].mxu0
    %v1551 = vpop.f32.mrb[0].mxu0
    %v1552 = vpop.f32.mrb[0].mxu0
    %1553 = vdwg.mxu0
    %v1554 = vld [vmem:[#allocation2 + $0x30] sm:$0xff]
    %v1555 = vld [vmem:[#allocation2 + $0x38] sm:$0xff]
    %v1556 = vld [vmem:[#allocation2 + $0x40] sm:$0xff]
    %v1557 = vadd.f32 %v1554, %v1508
    %v1558 = vxor.u32 %v1557, 2147483648
    %v1559 = vmul.f32 %v1558, 1.442695
    %v1560 = vpow.pop %v1559
    %v1561 = vadd.f32 %v1560, 1.0
    %v1562 = vrcp.pop %v1561
    %v1563 = vmul.f32 1.0, %v1562
    %v1564 = vadd.f32 %v1555, %v1510
    %v1565 = vxor.u32 %v1564, 2147483648
    %v1566 = vmul.f32 %v1565, 1.442695
    %v1567 = vpow.pop %v1566
    %v1568 = vadd.f32 %v1567, 1.0
    %v1569 = vrcp.pop %v1568
    %v1570 = vmul.f32 1.0, %v1569
    %v1571 = vadd.f32 %v1556, %v302
    %v1572 = vmul.f32 %v1563, %v1549
    %v1573 = vadd.f32 %v1571, %v1572
    %v1574 = vtanh.pop %v1573
    %v1575 = vsub.f32 1.0, %v1570
    %v1576 = vmul.f32 %v1575, %v1574
    %v1577 = vmul.f32 %v1570, %v1286
    %v1578 = vadd.f32 %v1576, %v1577
    %v1579 = vpack.c.bf16 %v1578, %v1578
    %1580 = vmatprep.subr.bf16.mxu0 %v949
    %1581 = vmatpush1.bf16.msra.mxu0 %v948
    %1582 = vmatprep.subr.bf16.mxu0 %v952
    %1583 = vmatpush1.bf16.msra.mxu0 %v951
    %1584 = vmatprep.subr.bf16.mxu0 %v955
    %1585 = vmatpush1.bf16.msra.mxu0 %v954
    %1586 = vmatprep.subr.bf16.mxu0 %v958
    %1587 = vmatpush1.bf16.msra.mxu0 %v957
    %1588 = vmatprep.subr.bf16.mxu0 %v961
    %1589 = vmatpush1.bf16.msra.mxu0 %v960
    %1590 = vmatprep.subr.bf16.mxu0 %v964
    %1591 = vmatpush1.bf16.msra.mxu0 %v963
    %1592 = vmatprep.subr.bf16.mxu0 %v967
    %1593 = vmatpush1.bf16.msra.mxu0 %v966
    %1594 = vmatprep.subr.bf16.mxu0 %v970
    %1595 = vmatpush1.bf16.msra.mxu0 %v969
    %1596 = vmatprep.subr.bf16.mxu0 0
    %1597 = vmatpush1.bf16.msra.mxu0 0
    %1598 = vmatprep.subr.bf16.mxu0 0
    %1599 = vmatpush1.bf16.msra.mxu0 0
    %1600 = vmatprep.subr.bf16.mxu0 0
    %1601 = vmatpush1.bf16.msra.mxu0 0
    %1602 = vmatprep.subr.bf16.mxu0 0
    %1603 = vmatpush1.bf16.msra.mxu0 0
    %1604 = vmatprep.subr.bf16.mxu0 0
    %1605 = vmatpush1.bf16.msra.mxu0 0
    %1606 = vmatprep.subr.bf16.mxu0 0
    %1607 = vmatpush1.bf16.msra.mxu0 0
    %1608 = vmatprep.subr.bf16.mxu0 0
    %1609 = vmatpush1.bf16.msra.mxu0 0
    %1610 = vmatprep.subr.bf16.mxu0 0
    %1611 = vmatpush1.bf16.msra.mxu0 0
    %1612 = vmatprep.mubr.bf16.mxu0 0
    %1613 = vmatmul.mubr.bf16.gmra.mrb[0].mxu0 %v1579
    %v1614 = vpop.f32.mrb[0].mxu0
    %v1615 = vadd.f32 0.0, %v1614
    %v1616 = vpop.f32.mrb[0].mxu0
    %v1617 = vadd.f32 0.0, %v1616
    %v1618 = vpop.f32.mrb[0].mxu0
    %v1619 = vpop.f32.mrb[0].mxu0
    %1620 = vdwg.mxu0
    %1621 = vmatprep.subr.bf16.mxu0 0
    %1622 = vmatpush1.bf16.msra.mxu0 %v950
    %1623 = vmatprep.subr.bf16.mxu0 0
    %1624 = vmatpush1.bf16.msra.mxu0 %v953
    %1625 = vmatprep.subr.bf16.mxu0 0
    %1626 = vmatpush1.bf16.msra.mxu0 %v956
    %1627 = vmatprep.subr.bf16.mxu0 0
    %1628 = vmatpush1.bf16.msra.mxu0 %v959
    %1629 = vmatprep.subr.bf16.mxu0 0
    %1630 = vmatpush1.bf16.msra.mxu0 %v962
    %1631 = vmatprep.subr.bf16.mxu0 0
    %1632 = vmatpush1.bf16.msra.mxu0 %v965
    %1633 = vmatprep.subr.bf16.mxu0 0
    %1634 = vmatpush1.bf16.msra.mxu0 %v968
    %1635 = vmatprep.subr.bf16.mxu0 0
    %1636 = vmatpush1.bf16.msra.mxu0 %v971
    %1637 = vmatprep.subr.bf16.mxu0 0
    %1638 = vmatpush1.bf16.msra.mxu0 0
    %1639 = vmatprep.subr.bf16.mxu0 0
    %1640 = vmatpush1.bf16.msra.mxu0 0
    %1641 = vmatprep.subr.bf16.mxu0 0
    %1642 = vmatpush1.bf16.msra.mxu0 0
    %1643 = vmatprep.subr.bf16.mxu0 0
    %1644 = vmatpush1.bf16.msra.mxu0 0
    %1645 = vmatprep.subr.bf16.mxu0 0
    %1646 = vmatpush1.bf16.msra.mxu0 0
    %1647 = vmatprep.subr.bf16.mxu0 0
    %1648 = vmatpush1.bf16.msra.mxu0 0
    %1649 = vmatprep.subr.bf16.mxu0 0
    %1650 = vmatpush1.bf16.msra.mxu0 0
    %1651 = vmatprep.subr.bf16.mxu0 0
    %1652 = vmatpush1.bf16.msra.mxu0 0
    %1653 = vmatprep.mubr.bf16.mxu0 0
    %1654 = vmatmul.mubr.bf16.gmra.mrb[0].mxu0 %v1579
    %v1655 = vpop.f32.mrb[0].mxu0
    %v1656 = vadd.f32 0.0, %v1655
    %v1657 = vpop.f32.mrb[0].mxu0
    %v1658 = vpop.f32.mrb[0].mxu0
    %v1659 = vpop.f32.mrb[0].mxu0
    %1660 = vdwg.mxu0
    %v1661 = vadd.f32 %v1615, %v1427
    %v1662 = vxor.u32 %v1661, 2147483648
    %v1663 = vmul.f32 %v1662, 1.442695
    %v1664 = vpow.pop %v1663
    %v1665 = vadd.f32 %v1664, 1.0
    %v1666 = vrcp.pop %v1665
    %v1667 = vmul.f32 1.0, %v1666
    %v1668 = vadd.f32 %v1617, %v1429
    %v1669 = vxor.u32 %v1668, 2147483648
    %v1670 = vmul.f32 %v1669, 1.442695
    %v1671 = vpow.pop %v1670
    %v1672 = vadd.f32 %v1671, 1.0
    %v1673 = vrcp.pop %v1672
    %v1674 = vmul.f32 1.0, %v1673
    %v1675 = vadd.f32 %v1656, %v326
    %v1676 = vmul.f32 %v1667, %v1468
    %v1677 = vadd.f32 %v1675, %v1676
    %v1678 = vtanh.pop %v1677
    %v1679 = vsub.f32 1.0, %v1674
    %v1680 = vmul.f32 %v1679, %v1678
    %v1681 = vmul.f32 %v1674, %v1390
    %v1682 = vadd.f32 %v1680, %v1681
    %v1683 = vpack.c.bf16 %v1682, %v1682
    %1684 = vmatprep.subr.bf16.mxu0 %v441
    %1685 = vmatpush1.bf16.msra.mxu0 %v440
    %1686 = vmatprep.subr.bf16.mxu0 %v444
    %1687 = vmatpush1.bf16.msra.mxu0 %v443
    %1688 = vmatprep.subr.bf16.mxu0 %v447
    %1689 = vmatpush1.bf16.msra.mxu0 %v446
    %1690 = vmatprep.subr.bf16.mxu0 %v450
    %1691 = vmatpush1.bf16.msra.mxu0 %v449
    %1692 = vmatprep.subr.bf16.mxu0 %v453
    %1693 = vmatpush1.bf16.msra.mxu0 %v452
    %1694 = vmatprep.subr.bf16.mxu0 %v456
    %1695 = vmatpush1.bf16.msra.mxu0 %v455
    %1696 = vmatprep.subr.bf16.mxu0 %v459
    %1697 = vmatpush1.bf16.msra.mxu0 %v458
    %1698 = vmatprep.subr.bf16.mxu0 %v462
    %1699 = vmatpush1.bf16.msra.mxu0 %v461
    %1700 = vmatprep.subr.bf16.mxu0 0
    %1701 = vmatpush1.bf16.msra.mxu0 0
    %1702 = vmatprep.subr.bf16.mxu0 0
    %1703 = vmatpush1.bf16.msra.mxu0 0
    %1704 = vmatprep.subr.bf16.mxu0 0
    %1705 = vmatpush1.bf16.msra.mxu0 0
    %1706 = vmatprep.subr.bf16.mxu0 0
    %1707 = vmatpush1.bf16.msra.mxu0 0
    %1708 = vmatprep.subr.bf16.mxu0 0
    %1709 = vmatpush1.bf16.msra.mxu0 0
    %1710 = vmatprep.subr.bf16.mxu0 0
    %1711 = vmatpush1.bf16.msra.mxu0 0
    %1712 = vmatprep.subr.bf16.mxu0 0
    %1713 = vmatpush1.bf16.msra.mxu0 0
    %1714 = vmatprep.subr.bf16.mxu0 0
    %1715 = vmatpush1.bf16.msra.mxu0 0
    %1716 = vmatprep.mubr.bf16.mxu0 0
    %1717 = vmatmul.mubr.bf16.gmra.mrb[0].mxu0 %v1683
    %v1718 = vpop.f32.mrb[0].mxu0
    %v1719 = vadd.f32 %v309, %v1718
    %v1720 = vpop.f32.mrb[0].mxu0
    %v1721 = vadd.f32 %v313, %v1720
    %v1722 = vpop.f32.mrb[0].mxu0
    %v1723 = vpop.f32.mrb[0].mxu0
    %1724 = vdwg.mxu0
    %1725 = vmatprep.subr.bf16.mxu0 0
    %1726 = vmatpush1.bf16.msra.mxu0 %v442
    %1727 = vmatprep.subr.bf16.mxu0 0
    %1728 = vmatpush1.bf16.msra.mxu0 %v445
    %1729 = vmatprep.subr.bf16.mxu0 0
    %1730 = vmatpush1.bf16.msra.mxu0 %v448
    %1731 = vmatprep.subr.bf16.mxu0 0
    %1732 = vmatpush1.bf16.msra.mxu0 %v451
    %1733 = vmatprep.subr.bf16.mxu0 0
    %1734 = vmatpush1.bf16.msra.mxu0 %v454
    %1735 = vmatprep.subr.bf16.mxu0 0
    %1736 = vmatpush1.bf16.msra.mxu0 %v457
    %1737 = vmatprep.subr.bf16.mxu0 0
    %1738 = vmatpush1.bf16.msra.mxu0 %v460
    %1739 = vmatprep.subr.bf16.mxu0 0
    %1740 = vmatpush1.bf16.msra.mxu0 %v463
    %1741 = vmatprep.subr.bf16.mxu0 0
    %1742 = vmatpush1.bf16.msra.mxu0 0
    %1743 = vmatprep.subr.bf16.mxu0 0
    %1744 = vmatpush1.bf16.msra.mxu0 0
    %1745 = vmatprep.subr.bf16.mxu0 0
    %1746 = vmatpush1.bf16.msra.mxu0 0
    %1747 = vmatprep.subr.bf16.mxu0 0
    %1748 = vmatpush1.bf16.msra.mxu0 0
    %1749 = vmatprep.subr.bf16.mxu0 0
    %1750 = vmatpush1.bf16.msra.mxu0 0
    %1751 = vmatprep.subr.bf16.mxu0 0
    %1752 = vmatpush1.bf16.msra.mxu0 0
    %1753 = vmatprep.subr.bf16.mxu0 0
    %1754 = vmatpush1.bf16.msra.mxu0 0
    %1755 = vmatprep.subr.bf16.mxu0 0
    %1756 = vmatpush1.bf16.msra.mxu0 0
    %1757 = vmatprep.mubr.bf16.mxu0 0
    %1758 = vmatmul.mubr.bf16.gmra.mrb[0].mxu0 %v1683
    %v1759 = vpop.f32.mrb[0].mxu0
    %v1760 = vadd.f32 %v317, %v1759
    %v1761 = vpop.f32.mrb[0].mxu0
    %v1762 = vpop.f32.mrb[0].mxu0
    %v1763 = vpop.f32.mrb[0].mxu0
    %1764 = vdwg.mxu0
    %1765 = vmatprep.subr.bf16.mxu0 %v682
    %1766 = vmatpush1.bf16.msra.mxu0 %v681
    %1767 = vmatprep.subr.bf16.mxu0 %v685
    %1768 = vmatpush1.bf16.msra.mxu0 %v684
    %1769 = vmatprep.subr.bf16.mxu0 %v688
    %1770 = vmatpush1.bf16.msra.mxu0 %v687
    %1771 = vmatprep.subr.bf16.mxu0 %v691
    %1772 = vmatpush1.bf16.msra.mxu0 %v690
    %1773 = vmatprep.subr.bf16.mxu0 %v694
    %1774 = vmatpush1.bf16.msra.mxu0 %v693
    %1775 = vmatprep.subr.bf16.mxu0 %v697
    %1776 = vmatpush1.bf16.msra.mxu0 %v696
    %1777 = vmatprep.subr.bf16.mxu0 %v700
    %1778 = vmatpush1.bf16.msra.mxu0 %v699
    %1779 = vmatprep.subr.bf16.mxu0 %v703
    %1780 = vmatpush1.bf16.msra.mxu0 %v702
    %1781 = vmatprep.subr.bf16.mxu0 0
    %1782 = vmatpush1.bf16.msra.mxu0 0
    %1783 = vmatprep.subr.bf16.mxu0 0
    %1784 = vmatpush1.bf16.msra.mxu0 0
    %1785 = vmatprep.subr.bf16.mxu0 0
    %1786 = vmatpush1.bf16.msra.mxu0 0
    %1787 = vmatprep.subr.bf16.mxu0 0
    %1788 = vmatpush1.bf16.msra.mxu0 0
    %1789 = vmatprep.subr.bf16.mxu0 0
    %1790 = vmatpush1.bf16.msra.mxu0 0
    %1791 = vmatprep.subr.bf16.mxu0 0
    %1792 = vmatpush1.bf16.msra.mxu0 0
    %1793 = vmatprep.subr.bf16.mxu0 0
    %1794 = vmatpush1.bf16.msra.mxu0 0
    %1795 = vmatprep.subr.bf16.mxu0 0
    %1796 = vmatpush1.bf16.msra.mxu0 0
    %1797 = vmatprep.mubr.bf16.mxu0 0
    %1798 = vmatmul.mubr.bf16.gmra.mrb[0].mxu0 %v1579
    %v1799 = vpop.f32.mrb[0].mxu0
    %v1800 = vadd.f32 %v285, %v1799
    %v1801 = vpop.f32.mrb[0].mxu0
    %v1802 = vadd.f32 %v289, %v1801
    %v1803 = vpop.f32.mrb[0].mxu0
    %v1804 = vpop.f32.mrb[0].mxu0
    %1805 = vdwg.mxu0
    %1806 = vmatprep.subr.bf16.mxu0 0
    %1807 = vmatpush1.bf16.msra.mxu0 %v683
    %1808 = vmatprep.subr.bf16.mxu0 0
    %1809 = vmatpush1.bf16.msra.mxu0 %v686
    %1810 = vmatprep.subr.bf16.mxu0 0
    %1811 = vmatpush1.bf16.msra.mxu0 %v689
    %1812 = vmatprep.subr.bf16.mxu0 0
    %1813 = vmatpush1.bf16.msra.mxu0 %v692
    %1814 = vmatprep.subr.bf16.mxu0 0
    %1815 = vmatpush1.bf16.msra.mxu0 %v695
    %1816 = vmatprep.subr.bf16.mxu0 0
    %1817 = vmatpush1.bf16.msra.mxu0 %v698
    %1818 = vmatprep.subr.bf16.mxu0 0
    %1819 = vmatpush1.bf16.msra.mxu0 %v701
    %1820 = vmatprep.subr.bf16.mxu0 0
    %1821 = vmatpush1.bf16.msra.mxu0 %v704
    %1822 = vmatprep.subr.bf16.mxu0 0
    %1823 = vmatpush1.bf16.msra.mxu0 0
    %1824 = vmatprep.subr.bf16.mxu0 0
    %1825 = vmatpush1.bf16.msra.mxu0 0
    %1826 = vmatprep.subr.bf16.mxu0 0
    %1827 = vmatpush1.bf16.msra.mxu0 0
    %1828 = vmatprep.subr.bf16.mxu0 0
    %1829 = vmatpush1.bf16.msra.mxu0 0
    %1830 = vmatprep.subr.bf16.mxu0 0
    %1831 = vmatpush1.bf16.msra.mxu0 0
    %1832 = vmatprep.subr.bf16.mxu0 0
    %1833 = vmatpush1.bf16.msra.mxu0 0
    %1834 = vmatprep.subr.bf16.mxu0 0
    %1835 = vmatpush1.bf16.msra.mxu0 0
    %1836 = vmatprep.subr.bf16.mxu0 0
    %1837 = vmatpush1.bf16.msra.mxu0 0
    %1838 = vmatprep.mubr.bf16.mxu0 0
    %1839 = vmatmul.mubr.bf16.gmra.mrb[0].mxu0 %v1579
    %v1840 = vpop.f32.mrb[0].mxu0
    %v1841 = vadd.f32 %v293, %v1840
    %v1842 = vpop.f32.mrb[0].mxu0
    %v1843 = vpop.f32.mrb[0].mxu0
    %v1844 = vpop.f32.mrb[0].mxu0
    %1845 = vdwg.mxu0
    %v1846 = vld [vmem:[#allocation2 + $0x48] sm:$0xff]
    %v1847 = vld [vmem:[#allocation2 + $0x50] sm:$0xff]
    %v1848 = vld [vmem:[#allocation2 + $0x58] sm:$0xff]
    %v1849 = vadd.f32 %v1846, %v1800
    %v1850 = vxor.u32 %v1849, 2147483648
    %v1851 = vmul.f32 %v1850, 1.442695
    %v1852 = vpow.pop %v1851
    %v1853 = vadd.f32 %v1852, 1.0
    %v1854 = vrcp.pop %v1853
    %v1855 = vmul.f32 1.0, %v1854
    %v1856 = vadd.f32 %v1847, %v1802
    %v1857 = vxor.u32 %v1856, 2147483648
    %v1858 = vmul.f32 %v1857, 1.442695
    %v1859 = vpow.pop %v1858
    %v1860 = vadd.f32 %v1859, 1.0
    %v1861 = vrcp.pop %v1860
    %v1862 = vmul.f32 1.0, %v1861
    %v1863 = vadd.f32 %v1848, %v302
    %v1864 = vmul.f32 %v1855, %v1841
    %v1865 = vadd.f32 %v1863, %v1864
    %v1866 = vtanh.pop %v1865
    %v1867 = vsub.f32 1.0, %v1862
    %v1868 = vmul.f32 %v1867, %v1866
    %v1869 = vmul.f32 %v1862, %v1578
    %v1870 = vadd.f32 %v1868, %v1869
    %v1871 = vpack.c.bf16 %v1870, %v1870
    %1872 = vmatprep.subr.bf16.mxu0 %v949
    %1873 = vmatpush1.bf16.msra.mxu0 %v948
    %1874 = vmatprep.subr.bf16.mxu0 %v952
    %1875 = vmatpush1.bf16.msra.mxu0 %v951
    %1876 = vmatprep.subr.bf16.mxu0 %v955
    %1877 = vmatpush1.bf16.msra.mxu0 %v954
    %1878 = vmatprep.subr.bf16.mxu0 %v958
    %1879 = vmatpush1.bf16.msra.mxu0 %v957
    %1880 = vmatprep.subr.bf16.mxu0 %v961
    %1881 = vmatpush1.bf16.msra.mxu0 %v960
    %1882 = vmatprep.subr.bf16.mxu0 %v964
    %1883 = vmatpush1.bf16.msra.mxu0 %v963
    %1884 = vmatprep.subr.bf16.mxu0 %v967
    %1885 = vmatpush1.bf16.msra.mxu0 %v966
    %1886 = vmatprep.subr.bf16.mxu0 %v970
    %1887 = vmatpush1.bf16.msra.mxu0 %v969
    %1888 = vmatprep.subr.bf16.mxu0 0
    %1889 = vmatpush1.bf16.msra.mxu0 0
    %1890 = vmatprep.subr.bf16.mxu0 0
    %1891 = vmatpush1.bf16.msra.mxu0 0
    %1892 = vmatprep.subr.bf16.mxu0 0
    %1893 = vmatpush1.bf16.msra.mxu0 0
    %1894 = vmatprep.subr.bf16.mxu0 0
    %1895 = vmatpush1.bf16.msra.mxu0 0
    %1896 = vmatprep.subr.bf16.mxu0 0
    %1897 = vmatpush1.bf16.msra.mxu0 0
    %1898 = vmatprep.subr.bf16.mxu0 0
    %1899 = vmatpush1.bf16.msra.mxu0 0
    %1900 = vmatprep.subr.bf16.mxu0 0
    %1901 = vmatpush1.bf16.msra.mxu0 0
    %1902 = vmatprep.subr.bf16.mxu0 0
    %1903 = vmatpush1.bf16.msra.mxu0 0
    %1904 = vmatprep.mubr.bf16.mxu0 0
    %1905 = vmatmul.mubr.bf16.gmra.mrb[0].mxu0 %v1871
    %v1906 = vpop.f32.mrb[0].mxu0
    %v1907 = vadd.f32 0.0, %v1906
    %v1908 = vpop.f32.mrb[0].mxu0
    %v1909 = vadd.f32 0.0, %v1908
    %v1910 = vpop.f32.mrb[0].mxu0
    %v1911 = vpop.f32.mrb[0].mxu0
    %1912 = vdwg.mxu0
    %1913 = vmatprep.subr.bf16.mxu0 0
    %1914 = vmatpush1.bf16.msra.mxu0 %v950
    %1915 = vmatprep.subr.bf16.mxu0 0
    %1916 = vmatpush1.bf16.msra.mxu0 %v953
    %1917 = vmatprep.subr.bf16.mxu0 0
    %1918 = vmatpush1.bf16.msra.mxu0 %v956
    %1919 = vmatprep.subr.bf16.mxu0 0
    %1920 = vmatpush1.bf16.msra.mxu0 %v959
    %1921 = vmatprep.subr.bf16.mxu0 0
    %1922 = vmatpush1.bf16.msra.mxu0 %v962
    %1923 = vmatprep.subr.bf16.mxu0 0
    %1924 = vmatpush1.bf16.msra.mxu0 %v965
    %1925 = vmatprep.subr.bf16.mxu0 0
    %1926 = vmatpush1.bf16.msra.mxu0 %v968
    %1927 = vmatprep.subr.bf16.mxu0 0
    %1928 = vmatpush1.bf16.msra.mxu0 %v971
    %1929 = vmatprep.subr.bf16.mxu0 0
    %1930 = vmatpush1.bf16.msra.mxu0 0
    %1931 = vmatprep.subr.bf16.mxu0 0
    %1932 = vmatpush1.bf16.msra.mxu0 0
    %1933 = vmatprep.subr.bf16.mxu0 0
    %1934 = vmatpush1.bf16.msra.mxu0 0
    %1935 = vmatprep.subr.bf16.mxu0 0
    %1936 = vmatpush1.bf16.msra.mxu0 0
    %1937 = vmatprep.subr.bf16.mxu0 0
    %1938 = vmatpush1.bf16.msra.mxu0 0
    %1939 = vmatprep.subr.bf16.mxu0 0
    %1940 = vmatpush1.bf16.msra.mxu0 0
    %1941 = vmatprep.subr.bf16.mxu0 0
    %1942 = vmatpush1.bf16.msra.mxu0 0
    %1943 = vmatprep.subr.bf16.mxu0 0
    %1944 = vmatpush1.bf16.msra.mxu0 0
    %1945 = vmatprep.mubr.bf16.mxu0 0
    %1946 = vmatmul.mubr.bf16.gmra.mrb[0].mxu0 %v1871
    %v1947 = vpop.f32.mrb[0].mxu0
    %v1948 = vadd.f32 0.0, %v1947
    %v1949 = vpop.f32.mrb[0].mxu0
    %v1950 = vpop.f32.mrb[0].mxu0
    %v1951 = vpop.f32.mrb[0].mxu0
    %1952 = vdwg.mxu0
    %v1953 = vadd.f32 %v1907, %v1719
    %v1954 = vxor.u32 %v1953, 2147483648
    %v1955 = vmul.f32 %v1954, 1.442695
    %v1956 = vpow.pop %v1955
    %v1957 = vadd.f32 %v1956, 1.0
    %v1958 = vrcp.pop %v1957
    %v1959 = vmul.f32 1.0, %v1958
    %v1960 = vadd.f32 %v1909, %v1721
    %v1961 = vxor.u32 %v1960, 2147483648
    %v1962 = vmul.f32 %v1961, 1.442695
    %v1963 = vpow.pop %v1962
    %v1964 = vadd.f32 %v1963, 1.0
    %v1965 = vrcp.pop %v1964
    %v1966 = vmul.f32 1.0, %v1965
    %v1967 = vadd.f32 %v1948, %v326
    %v1968 = vmul.f32 %v1959, %v1760
    %v1969 = vadd.f32 %v1967, %v1968
    %v1970 = vtanh.pop %v1969
    %v1971 = vsub.f32 1.0, %v1966
    %v1972 = vmul.f32 %v1971, %v1970
    %v1973 = vmul.f32 %v1966, %v1682
    %v1974 = vadd.f32 %v1972, %v1973
    %v1975 = vpack.c.bf16 %v1974, %v1974
    %1976 = vmatprep.subr.bf16.mxu0 %v441
    %1977 = vmatpush1.bf16.msra.mxu0 %v440
    %1978 = vmatprep.subr.bf16.mxu0 %v444
    %1979 = vmatpush1.bf16.msra.mxu0 %v443
    %1980 = vmatprep.subr.bf16.mxu0 %v447
    %1981 = vmatpush1.bf16.msra.mxu0 %v446
    %1982 = vmatprep.subr.bf16.mxu0 %v450
    %1983 = vmatpush1.bf16.msra.mxu0 %v449
    %1984 = vmatprep.subr.bf16.mxu0 %v453
    %1985 = vmatpush1.bf16.msra.mxu0 %v452
    %1986 = vmatprep.subr.bf16.mxu0 %v456
    %1987 = vmatpush1.bf16.msra.mxu0 %v455
    %1988 = vmatprep.subr.bf16.mxu0 %v459
    %1989 = vmatpush1.bf16.msra.mxu0 %v458
    %1990 = vmatprep.subr.bf16.mxu0 %v462
    %1991 = vmatpush1.bf16.msra.mxu0 %v461
    %1992 = vmatprep.subr.bf16.mxu0 0
    %1993 = vmatpush1.bf16.msra.mxu0 0
    %1994 = vmatprep.subr.bf16.mxu0 0
    %1995 = vmatpush1.bf16.msra.mxu0 0
    %1996 = vmatprep.subr.bf16.mxu0 0
    %1997 = vmatpush1.bf16.msra.mxu0 0
    %1998 = vmatprep.subr.bf16.mxu0 0
    %1999 = vmatpush1.bf16.msra.mxu0 0
    %2000 = vmatprep.subr.bf16.mxu0 0
    %2001 = vmatpush1.bf16.msra.mxu0 0
    %2002 = vmatprep.subr.bf16.mxu0 0
    %2003 = vmatpush1.bf16.msra.mxu0 0
    %2004 = vmatprep.subr.bf16.mxu0 0
    %2005 = vmatpush1.bf16.msra.mxu0 0
    %2006 = vmatprep.subr.bf16.mxu0 0
    %2007 = vmatpush1.bf16.msra.mxu0 0
    %2008 = vmatprep.mubr.bf16.mxu0 0
    %2009 = vmatmul.mubr.bf16.gmra.mrb[0].mxu0 %v1975
    %v2010 = vpop.f32.mrb[0].mxu0
    %v2011 = vadd.f32 %v309, %v2010
    %v2012 = vpop.f32.mrb[0].mxu0
    %v2013 = vadd.f32 %v313, %v2012
    %v2014 = vpop.f32.mrb[0].mxu0
    %v2015 = vpop.f32.mrb[0].mxu0
    %2016 = vdwg.mxu0
    %2017 = vmatprep.subr.bf16.mxu0 0
    %2018 = vmatpush1.bf16.msra.mxu0 %v442
    %2019 = vmatprep.subr.bf16.mxu0 0
    %2020 = vmatpush1.bf16.msra.mxu0 %v445
    %2021 = vmatprep.subr.bf16.mxu0 0
    %2022 = vmatpush1.bf16.msra.mxu0 %v448
    %2023 = vmatprep.subr.bf16.mxu0 0
    %2024 = vmatpush1.bf16.msra.mxu0 %v451
    %2025 = vmatprep.subr.bf16.mxu0 0
    %2026 = vmatpush1.bf16.msra.mxu0 %v454
    %2027 = vmatprep.subr.bf16.mxu0 0
    %2028 = vmatpush1.bf16.msra.mxu0 %v457
    %2029 = vmatprep.subr.bf16.mxu0 0
    %2030 = vmatpush1.bf16.msra.mxu0 %v460
    %2031 = vmatprep.subr.bf16.mxu0 0
    %2032 = vmatpush1.bf16.msra.mxu0 %v463
    %2033 = vmatprep.subr.bf16.mxu0 0
    %2034 = vmatpush1.bf16.msra.mxu0 0
    %2035 = vmatprep.subr.bf16.mxu0 0
    %2036 = vmatpush1.bf16.msra.mxu0 0
    %2037 = vmatprep.subr.bf16.mxu0 0
    %2038 = vmatpush1.bf16.msra.mxu0 0
    %2039 = vmatprep.subr.bf16.mxu0 0
    %2040 = vmatpush1.bf16.msra.mxu0 0
    %2041 = vmatprep.subr.bf16.mxu0 0
    %2042 = vmatpush1.bf16.msra.mxu0 0
    %2043 = vmatprep.subr.bf16.mxu0 0
    %2044 = vmatpush1.bf16.msra.mxu0 0
    %2045 = vmatprep.subr.bf16.mxu0 0
    %2046 = vmatpush1.bf16.msra.mxu0 0
    %2047 = vmatprep.subr.bf16.mxu0 0
    %2048 = vmatpush1.bf16.msra.mxu0 0
    %2049 = vmatprep.mubr.bf16.mxu0 0
    %2050 = vmatmul.mubr.bf16.gmra.mrb[0].mxu0 %v1975
    %v2051 = vpop.f32.mrb[0].mxu0
    %v2052 = vadd.f32 %v317, %v2051
    %v2053 = vpop.f32.mrb[0].mxu0
    %v2054 = vpop.f32.mrb[0].mxu0
    %v2055 = vpop.f32.mrb[0].mxu0
    %2056 = vdwg.mxu0
    %2057 = vmatprep.subr.bf16.mxu0 %v682
    %2058 = vmatpush1.bf16.msra.mxu0 %v681
    %2059 = vmatprep.subr.bf16.mxu0 %v685
    %2060 = vmatpush1.bf16.msra.mxu0 %v684
    %2061 = vmatprep.subr.bf16.mxu0 %v688
    %2062 = vmatpush1.bf16.msra.mxu0 %v687
    %2063 = vmatprep.subr.bf16.mxu0 %v691
    %2064 = vmatpush1.bf16.msra.mxu0 %v690
    %2065 = vmatprep.subr.bf16.mxu0 %v694
    %2066 = vmatpush1.bf16.msra.mxu0 %v693
    %2067 = vmatprep.subr.bf16.mxu0 %v697
    %2068 = vmatpush1.bf16.msra.mxu0 %v696
    %2069 = vmatprep.subr.bf16.mxu0 %v700
    %2070 = vmatpush1.bf16.msra.mxu0 %v699
    %2071 = vmatprep.subr.bf16.mxu0 %v703
    %2072 = vmatpush1.bf16.msra.mxu0 %v702
    %2073 = vmatprep.subr.bf16.mxu0 0
    %2074 = vmatpush1.bf16.msra.mxu0 0
    %2075 = vmatprep.subr.bf16.mxu0 0
    %2076 = vmatpush1.bf16.msra.mxu0 0
    %2077 = vmatprep.subr.bf16.mxu0 0
    %2078 = vmatpush1.bf16.msra.mxu0 0
    %2079 = vmatprep.subr.bf16.mxu0 0
    %2080 = vmatpush1.bf16.msra.mxu0 0
    %2081 = vmatprep.subr.bf16.mxu0 0
    %2082 = vmatpush1.bf16.msra.mxu0 0
    %2083 = vmatprep.subr.bf16.mxu0 0
    %2084 = vmatpush1.bf16.msra.mxu0 0
    %2085 = vmatprep.subr.bf16.mxu0 0
    %2086 = vmatpush1.bf16.msra.mxu0 0
    %2087 = vmatprep.subr.bf16.mxu0 0
    %2088 = vmatpush1.bf16.msra.mxu0 0
    %2089 = vmatprep.mubr.bf16.mxu0 0
    %2090 = vmatmul.mubr.bf16.gmra.mrb[0].mxu0 %v1871
    %v2091 = vpop.f32.mrb[0].mxu0
    %v2092 = vadd.f32 %v285, %v2091
    %v2093 = vpop.f32.mrb[0].mxu0
    %v2094 = vadd.f32 %v289, %v2093
    %v2095 = vpop.f32.mrb[0].mxu0
    %v2096 = vpop.f32.mrb[0].mxu0
    %2097 = vdwg.mxu0
    %2098 = vmatprep.subr.bf16.mxu0 0
    %2099 = vmatpush1.bf16.msra.mxu0 %v683
    %2100 = vmatprep.subr.bf16.mxu0 0
    %2101 = vmatpush1.bf16.msra.mxu0 %v686
    %2102 = vmatprep.subr.bf16.mxu0 0
    %2103 = vmatpush1.bf16.msra.mxu0 %v689
    %2104 = vmatprep.subr.bf16.mxu0 0
    %2105 = vmatpush1.bf16.msra.mxu0 %v692
    %2106 = vmatprep.subr.bf16.mxu0 0
    %2107 = vmatpush1.bf16.msra.mxu0 %v695
    %2108 = vmatprep.subr.bf16.mxu0 0
    %2109 = vmatpush1.bf16.msra.mxu0 %v698
    %2110 = vmatprep.subr.bf16.mxu0 0
    %2111 = vmatpush1.bf16.msra.mxu0 %v701
    %2112 = vmatprep.subr.bf16.mxu0 0
    %2113 = vmatpush1.bf16.msra.mxu0 %v704
    %2114 = vmatprep.subr.bf16.mxu0 0
    %2115 = vmatpush1.bf16.msra.mxu0 0
    %2116 = vmatprep.subr.bf16.mxu0 0
    %2117 = vmatpush1.bf16.msra.mxu0 0
    %2118 = vmatprep.subr.bf16.mxu0 0
    %2119 = vmatpush1.bf16.msra.mxu0 0
    %2120 = vmatprep.subr.bf16.mxu0 0
    %2121 = vmatpush1.bf16.msra.mxu0 0
    %2122 = vmatprep.subr.bf16.mxu0 0
    %2123 = vmatpush1.bf16.msra.mxu0 0
    %2124 = vmatprep.subr.bf16.mxu0 0
    %2125 = vmatpush1.bf16.msra.mxu0 0
    %2126 = vmatprep.subr.bf16.mxu0 0
    %2127 = vmatpush1.bf16.msra.mxu0 0
    %2128 = vmatprep.subr.bf16.mxu0 0
    %2129 = vmatpush1.bf16.msra.mxu0 0
    %2130 = vmatprep.mubr.bf16.mxu0 0
    %2131 = vmatmul.mubr.bf16.gmra.mrb[0].mxu0 %v1871
    %v2132 = vpop.f32.mrb[0].mxu0
    %v2133 = vadd.f32 %v293, %v2132
    %v2134 = vpop.f32.mrb[0].mxu0
    %v2135 = vpop.f32.mrb[0].mxu0
    %v2136 = vpop.f32.mrb[0].mxu0
    %2137 = vdwg.mxu0
    %v2138 = vld [vmem:[#allocation2 + $0x60] sm:$0xff]
    %v2139 = vld [vmem:[#allocation2 + $0x68] sm:$0xff]
    %v2140 = vld [vmem:[#allocation2 + $0x70] sm:$0xff]
    %v2141 = vadd.f32 %v2138, %v2092
    %v2142 = vxor.u32 %v2141, 2147483648
    %v2143 = vmul.f32 %v2142, 1.442695
    %v2144 = vpow.pop %v2143
    %v2145 = vadd.f32 %v2144, 1.0
    %v2146 = vrcp.pop %v2145
    %v2147 = vmul.f32 1.0, %v2146
    %v2148 = vadd.f32 %v2139, %v2094
    %v2149 = vxor.u32 %v2148, 2147483648
    %v2150 = vmul.f32 %v2149, 1.442695
    %v2151 = vpow.pop %v2150
    %v2152 = vadd.f32 %v2151, 1.0
    %v2153 = vrcp.pop %v2152
    %v2154 = vmul.f32 1.0, %v2153
    %v2155 = vadd.f32 %v2140, %v302
    %v2156 = vmul.f32 %v2147, %v2133
    %v2157 = vadd.f32 %v2155, %v2156
    %v2158 = vtanh.pop %v2157
    %v2159 = vsub.f32 1.0, %v2154
    %v2160 = vmul.f32 %v2159, %v2158
    %v2161 = vmul.f32 %v2154, %v1870
    %v2162 = vadd.f32 %v2160, %v2161
    %v2163 = vpack.c.bf16 %v2162, %v2162
    %2164 = vmatprep.subr.bf16.mxu0 %v949
    %2165 = vmatpush1.bf16.msra.mxu0 %v948
    %2166 = vmatprep.subr.bf16.mxu0 %v952
    %2167 = vmatpush1.bf16.msra.mxu0 %v951
    %2168 = vmatprep.subr.bf16.mxu0 %v955
    %2169 = vmatpush1.bf16.msra.mxu0 %v954
    %2170 = vmatprep.subr.bf16.mxu0 %v958
    %2171 = vmatpush1.bf16.msra.mxu0 %v957
    %2172 = vmatprep.subr.bf16.mxu0 %v961
    %2173 = vmatpush1.bf16.msra.mxu0 %v960
    %2174 = vmatprep.subr.bf16.mxu0 %v964
    %2175 = vmatpush1.bf16.msra.mxu0 %v963
    %2176 = vmatprep.subr.bf16.mxu0 %v967
    %2177 = vmatpush1.bf16.msra.mxu0 %v966
    %2178 = vmatprep.subr.bf16.mxu0 %v970
    %2179 = vmatpush1.bf16.msra.mxu0 %v969
    %2180 = vmatprep.subr.bf16.mxu0 0
    %2181 = vmatpush1.bf16.msra.mxu0 0
    %2182 = vmatprep.subr.bf16.mxu0 0
    %2183 = vmatpush1.bf16.msra.mxu0 0
    %2184 = vmatprep.subr.bf16.mxu0 0
    %2185 = vmatpush1.bf16.msra.mxu0 0
    %2186 = vmatprep.subr.bf16.mxu0 0
    %2187 = vmatpush1.bf16.msra.mxu0 0
    %2188 = vmatprep.subr.bf16.mxu0 0
    %2189 = vmatpush1.bf16.msra.mxu0 0
    %2190 = vmatprep.subr.bf16.mxu0 0
    %2191 = vmatpush1.bf16.msra.mxu0 0
    %2192 = vmatprep.subr.bf16.mxu0 0
    %2193 = vmatpush1.bf16.msra.mxu0 0
    %2194 = vmatprep.subr.bf16.mxu0 0
    %2195 = vmatpush1.bf16.msra.mxu0 0
    %2196 = vmatprep.mubr.bf16.mxu0 0
    %2197 = vmatmul.mubr.bf16.gmra.mrb[0].mxu0 %v2163
    %v2198 = vpop.f32.mrb[0].mxu0
    %v2199 = vadd.f32 0.0, %v2198
    %v2200 = vpop.f32.mrb[0].mxu0
    %v2201 = vadd.f32 0.0, %v2200
    %v2202 = vpop.f32.mrb[0].mxu0
    %v2203 = vpop.f32.mrb[0].mxu0
    %2204 = vdwg.mxu0
    %2205 = vmatprep.subr.bf16.mxu0 0
    %2206 = vmatpush1.bf16.msra.mxu0 %v950
    %2207 = vmatprep.subr.bf16.mxu0 0
    %2208 = vmatpush1.bf16.msra.mxu0 %v953
    %2209 = vmatprep.subr.bf16.mxu0 0
    %2210 = vmatpush1.bf16.msra.mxu0 %v956
    %2211 = vmatprep.subr.bf16.mxu0 0
    %2212 = vmatpush1.bf16.msra.mxu0 %v959
    %2213 = vmatprep.subr.bf16.mxu0 0
    %2214 = vmatpush1.bf16.msra.mxu0 %v962
    %2215 = vmatprep.subr.bf16.mxu0 0
    %2216 = vmatpush1.bf16.msra.mxu0 %v965
    %2217 = vmatprep.subr.bf16.mxu0 0
    %2218 = vmatpush1.bf16.msra.mxu0 %v968
    %2219 = vmatprep.subr.bf16.mxu0 0
    %2220 = vmatpush1.bf16.msra.mxu0 %v971
    %2221 = vmatprep.subr.bf16.mxu0 0
    %2222 = vmatpush1.bf16.msra.mxu0 0
    %2223 = vmatprep.subr.bf16.mxu0 0
    %2224 = vmatpush1.bf16.msra.mxu0 0
    %2225 = vmatprep.subr.bf16.mxu0 0
    %2226 = vmatpush1.bf16.msra.mxu0 0
    %2227 = vmatprep.subr.bf16.mxu0 0
    %2228 = vmatpush1.bf16.msra.mxu0 0
    %2229 = vmatprep.subr.bf16.mxu0 0
    %2230 = vmatpush1.bf16.msra.mxu0 0
    %2231 = vmatprep.subr.bf16.mxu0 0
    %2232 = vmatpush1.bf16.msra.mxu0 0
    %2233 = vmatprep.subr.bf16.mxu0 0
    %2234 = vmatpush1.bf16.msra.mxu0 0
    %2235 = vmatprep.subr.bf16.mxu0 0
    %2236 = vmatpush1.bf16.msra.mxu0 0
    %2237 = vmatprep.mubr.bf16.mxu0 0
    %2238 = vmatmul.mubr.bf16.gmra.mrb[0].mxu0 %v2163
    %v2239 = vpop.f32.mrb[0].mxu0
    %v2240 = vadd.f32 0.0, %v2239
    %v2241 = vpop.f32.mrb[0].mxu0
    %v2242 = vpop.f32.mrb[0].mxu0
    %v2243 = vpop.f32.mrb[0].mxu0
    %2244 = vdwg.mxu0
    %v2245 = vadd.f32 %v2199, %v2011
    %v2246 = vxor.u32 %v2245, 2147483648
    %v2247 = vmul.f32 %v2246, 1.442695
    %v2248 = vpow.pop %v2247
    %v2249 = vadd.f32 %v2248, 1.0
    %v2250 = vrcp.pop %v2249
    %v2251 = vmul.f32 1.0, %v2250
    %v2252 = vadd.f32 %v2201, %v2013
    %v2253 = vxor.u32 %v2252, 2147483648
    %v2254 = vmul.f32 %v2253, 1.442695
    %v2255 = vpow.pop %v2254
    %v2256 = vadd.f32 %v2255, 1.0
    %v2257 = vrcp.pop %v2256
    %v2258 = vmul.f32 1.0, %v2257
    %v2259 = vadd.f32 %v2240, %v326
    %v2260 = vmul.f32 %v2251, %v2052
    %v2261 = vadd.f32 %v2259, %v2260
    %v2262 = vtanh.pop %v2261
    %v2263 = vsub.f32 1.0, %v2258
    %v2264 = vmul.f32 %v2263, %v2262
    %v2265 = vmul.f32 %v2258, %v1974
    %v2266 = vadd.f32 %v2264, %v2265
    %v2267 = vpack.c.bf16 %v2266, %v2266
    %2268 = vmatprep.subr.bf16.mxu0 %v441
    %2269 = vmatpush1.bf16.msra.mxu0 %v440
    %2270 = vmatprep.subr.bf16.mxu0 %v444
    %2271 = vmatpush1.bf16.msra.mxu0 %v443
    %2272 = vmatprep.subr.bf16.mxu0 %v447
    %2273 = vmatpush1.bf16.msra.mxu0 %v446
    %2274 = vmatprep.subr.bf16.mxu0 %v450
    %2275 = vmatpush1.bf16.msra.mxu0 %v449
    %2276 = vmatprep.subr.bf16.mxu0 %v453
    %2277 = vmatpush1.bf16.msra.mxu0 %v452
    %2278 = vmatprep.subr.bf16.mxu0 %v456
    %2279 = vmatpush1.bf16.msra.mxu0 %v455
    %2280 = vmatprep.subr.bf16.mxu0 %v459
    %2281 = vmatpush1.bf16.msra.mxu0 %v458
    %2282 = vmatprep.subr.bf16.mxu0 %v462
    %2283 = vmatpush1.bf16.msra.mxu0 %v461
    %2284 = vmatprep.subr.bf16.mxu0 0
    %2285 = vmatpush1.bf16.msra.mxu0 0
    %2286 = vmatprep.subr.bf16.mxu0 0
    %2287 = vmatpush1.bf16.msra.mxu0 0
    %2288 = vmatprep.subr.bf16.mxu0 0
    %2289 = vmatpush1.bf16.msra.mxu0 0
    %2290 = vmatprep.subr.bf16.mxu0 0
    %2291 = vmatpush1.bf16.msra.mxu0 0
    %2292 = vmatprep.subr.bf16.mxu0 0
    %2293 = vmatpush1.bf16.msra.mxu0 0
    %2294 = vmatprep.subr.bf16.mxu0 0
    %2295 = vmatpush1.bf16.msra.mxu0 0
    %2296 = vmatprep.subr.bf16.mxu0 0
    %2297 = vmatpush1.bf16.msra.mxu0 0
    %2298 = vmatprep.subr.bf16.mxu0 0
    %2299 = vmatpush1.bf16.msra.mxu0 0
    %2300 = vmatprep.mubr.bf16.mxu0 0
    %2301 = vmatmul.mubr.bf16.gmra.mrb[0].mxu0 %v2267
    %v2302 = vpop.f32.mrb[0].mxu0
    %v2303 = vadd.f32 %v309, %v2302
    %v2304 = vpop.f32.mrb[0].mxu0
    %v2305 = vadd.f32 %v313, %v2304
    %v2306 = vpop.f32.mrb[0].mxu0
    %v2307 = vpop.f32.mrb[0].mxu0
    %2308 = vdwg.mxu0
    %2309 = vmatprep.subr.bf16.mxu0 0
    %2310 = vmatpush1.bf16.msra.mxu0 %v442
    %2311 = vmatprep.subr.bf16.mxu0 0
    %2312 = vmatpush1.bf16.msra.mxu0 %v445
    %2313 = vmatprep.subr.bf16.mxu0 0
    %2314 = vmatpush1.bf16.msra.mxu0 %v448
    %2315 = vmatprep.subr.bf16.mxu0 0
    %2316 = vmatpush1.bf16.msra.mxu0 %v451
    %2317 = vmatprep.subr.bf16.mxu0 0
    %2318 = vmatpush1.bf16.msra.mxu0 %v454
    %2319 = vmatprep.subr.bf16.mxu0 0
    %2320 = vmatpush1.bf16.msra.mxu0 %v457
    %2321 = vmatprep.subr.bf16.mxu0 0
    %2322 = vmatpush1.bf16.msra.mxu0 %v460
    %2323 = vmatprep.subr.bf16.mxu0 0
    %2324 = vmatpush1.bf16.msra.mxu0 %v463
    %2325 = vmatprep.subr.bf16.mxu0 0
    %2326 = vmatpush1.bf16.msra.mxu0 0
    %2327 = vmatprep.subr.bf16.mxu0 0
    %2328 = vmatpush1.bf16.msra.mxu0 0
    %2329 = vmatprep.subr.bf16.mxu0 0
    %2330 = vmatpush1.bf16.msra.mxu0 0
    %2331 = vmatprep.subr.bf16.mxu0 0
    %2332 = vmatpush1.bf16.msra.mxu0 0
    %2333 = vmatprep.subr.bf16.mxu0 0
    %2334 = vmatpush1.bf16.msra.mxu0 0
    %2335 = vmatprep.subr.bf16.mxu0 0
    %2336 = vmatpush1.bf16.msra.mxu0 0
    %2337 = vmatprep.subr.bf16.mxu0 0
    %2338 = vmatpush1.bf16.msra.mxu0 0
    %2339 = vmatprep.subr.bf16.mxu0 0
    %2340 = vmatpush1.bf16.msra.mxu0 0
    %2341 = vmatprep.mubr.bf16.mxu0 0
    %2342 = vmatmul.mubr.bf16.gmra.mrb[0].mxu0 %v2267
    %v2343 = vpop.f32.mrb[0].mxu0
    %v2344 = vadd.f32 %v317, %v2343
    %v2345 = vpop.f32.mrb[0].mxu0
    %v2346 = vpop.f32.mrb[0].mxu0
    %v2347 = vpop.f32.mrb[0].mxu0
    %2348 = vdwg.mxu0
    %2349 = vmatprep.subr.bf16.mxu0 %v682
    %2350 = vmatpush1.bf16.msra.mxu0 %v681
    %2351 = vmatprep.subr.bf16.mxu0 %v685
    %2352 = vmatpush1.bf16.msra.mxu0 %v684
    %2353 = vmatprep.subr.bf16.mxu0 %v688
    %2354 = vmatpush1.bf16.msra.mxu0 %v687
    %2355 = vmatprep.subr.bf16.mxu0 %v691
    %2356 = vmatpush1.bf16.msra.mxu0 %v690
    %2357 = vmatprep.subr.bf16.mxu0 %v694
    %2358 = vmatpush1.bf16.msra.mxu0 %v693
    %2359 = vmatprep.subr.bf16.mxu0 %v697
    %2360 = vmatpush1.bf16.msra.mxu0 %v696
    %2361 = vmatprep.subr.bf16.mxu0 %v700
    %2362 = vmatpush1.bf16.msra.mxu0 %v699
    %2363 = vmatprep.subr.bf16.mxu0 %v703
    %2364 = vmatpush1.bf16.msra.mxu0 %v702
    %2365 = vmatprep.subr.bf16.mxu0 0
    %2366 = vmatpush1.bf16.msra.mxu0 0
    %2367 = vmatprep.subr.bf16.mxu0 0
    %2368 = vmatpush1.bf16.msra.mxu0 0
    %2369 = vmatprep.subr.bf16.mxu0 0
    %2370 = vmatpush1.bf16.msra.mxu0 0
    %2371 = vmatprep.subr.bf16.mxu0 0
    %2372 = vmatpush1.bf16.msra.mxu0 0
    %2373 = vmatprep.subr.bf16.mxu0 0
    %2374 = vmatpush1.bf16.msra.mxu0 0
    %2375 = vmatprep.subr.bf16.mxu0 0
    %2376 = vmatpush1.bf16.msra.mxu0 0
    %2377 = vmatprep.subr.bf16.mxu0 0
    %2378 = vmatpush1.bf16.msra.mxu0 0
    %2379 = vmatprep.subr.bf16.mxu0 0
    %2380 = vmatpush1.bf16.msra.mxu0 0
    %2381 = vmatprep.mubr.bf16.mxu0 0
    %2382 = vmatmul.mubr.bf16.gmra.mrb[0].mxu0 %v2163
    %v2383 = vpop.f32.mrb[0].mxu0
    %v2384 = vadd.f32 %v285, %v2383
    %v2385 = vpop.f32.mrb[0].mxu0
    %v2386 = vadd.f32 %v289, %v2385
    %v2387 = vpop.f32.mrb[0].mxu0
    %v2388 = vpop.f32.mrb[0].mxu0
    %2389 = vdwg.mxu0
    %2390 = vmatprep.subr.bf16.mxu0 0
    %2391 = vmatpush1.bf16.msra.mxu0 %v683
    %2392 = vmatprep.subr.bf16.mxu0 0
    %2393 = vmatpush1.bf16.msra.mxu0 %v686
    %2394 = vmatprep.subr.bf16.mxu0 0
    %2395 = vmatpush1.bf16.msra.mxu0 %v689
    %2396 = vmatprep.subr.bf16.mxu0 0
    %2397 = vmatpush1.bf16.msra.mxu0 %v692
    %2398 = vmatprep.subr.bf16.mxu0 0
    %2399 = vmatpush1.bf16.msra.mxu0 %v695
    %2400 = vmatprep.subr.bf16.mxu0 0
    %2401 = vmatpush1.bf16.msra.mxu0 %v698
    %2402 = vmatprep.subr.bf16.mxu0 0
    %2403 = vmatpush1.bf16.msra.mxu0 %v701
    %2404 = vmatprep.subr.bf16.mxu0 0
    %2405 = vmatpush1.bf16.msra.mxu0 %v704
    %2406 = vmatprep.subr.bf16.mxu0 0
    %2407 = vmatpush1.bf16.msra.mxu0 0
    %2408 = vmatprep.subr.bf16.mxu0 0
    %2409 = vmatpush1.bf16.msra.mxu0 0
    %2410 = vmatprep.subr.bf16.mxu0 0
    %2411 = vmatpush1.bf16.msra.mxu0 0
    %2412 = vmatprep.subr.bf16.mxu0 0
    %2413 = vmatpush1.bf16.msra.mxu0 0
    %2414 = vmatprep.subr.bf16.mxu0 0
    %2415 = vmatpush1.bf16.msra.mxu0 0
    %2416 = vmatprep.subr.bf16.mxu0 0
    %2417 = vmatpush1.bf16.msra.mxu0 0
    %2418 = vmatprep.subr.bf16.mxu0 0
    %2419 = vmatpush1.bf16.msra.mxu0 0
    %2420 = vmatprep.subr.bf16.mxu0 0
    %2421 = vmatpush1.bf16.msra.mxu0 0
    %2422 = vmatprep.mubr.bf16.mxu0 0
    %2423 = vmatmul.mubr.bf16.gmra.mrb[0].mxu0 %v2163
    %v2424 = vpop.f32.mrb[0].mxu0
    %v2425 = vadd.f32 %v293, %v2424
    %v2426 = vpop.f32.mrb[0].mxu0
    %v2427 = vpop.f32.mrb[0].mxu0
    %v2428 = vpop.f32.mrb[0].mxu0
    %2429 = vdwg.mxu0
    %v2430 = vld [vmem:[#allocation2 + $0x78] sm:$0xff]
    %v2431 = vld [vmem:[#allocation2 + $0x80] sm:$0xff]
    %v2432 = vld [vmem:[#allocation2 + $0x88] sm:$0xff]
    %v2433 = vadd.f32 %v2430, %v2384
    %v2434 = vxor.u32 %v2433, 2147483648
    %v2435 = vmul.f32 %v2434, 1.442695
    %v2436 = vpow.pop %v2435
    %v2437 = vadd.f32 %v2436, 1.0
    %v2438 = vrcp.pop %v2437
    %v2439 = vmul.f32 1.0, %v2438
    %v2440 = vadd.f32 %v2431, %v2386
    %v2441 = vxor.u32 %v2440, 2147483648
    %v2442 = vmul.f32 %v2441, 1.442695
    %v2443 = vpow.pop %v2442
    %v2444 = vadd.f32 %v2443, 1.0
    %v2445 = vrcp.pop %v2444
    %v2446 = vmul.f32 1.0, %v2445
    %v2447 = vadd.f32 %v2432, %v302
    %v2448 = vmul.f32 %v2439, %v2425
    %v2449 = vadd.f32 %v2447, %v2448
    %v2450 = vtanh.pop %v2449
    %v2451 = vsub.f32 1.0, %v2446
    %v2452 = vmul.f32 %v2451, %v2450
    %v2453 = vmul.f32 %v2446, %v2162
    %v2454 = vadd.f32 %v2452, %v2453
    %v2455 = vpack.c.bf16 %v2454, %v2454
    %2456 = vmatprep.subr.bf16.mxu0 %v949
    %2457 = vmatpush1.bf16.msra.mxu0 %v948
    %2458 = vmatprep.subr.bf16.mxu0 %v952
    %2459 = vmatpush1.bf16.msra.mxu0 %v951
    %2460 = vmatprep.subr.bf16.mxu0 %v955
    %2461 = vmatpush1.bf16.msra.mxu0 %v954
    %2462 = vmatprep.subr.bf16.mxu0 %v958
    %2463 = vmatpush1.bf16.msra.mxu0 %v957
    %2464 = vmatprep.subr.bf16.mxu0 %v961
    %2465 = vmatpush1.bf16.msra.mxu0 %v960
    %2466 = vmatprep.subr.bf16.mxu0 %v964
    %2467 = vmatpush1.bf16.msra.mxu0 %v963
    %2468 = vmatprep.subr.bf16.mxu0 %v967
    %2469 = vmatpush1.bf16.msra.mxu0 %v966
    %2470 = vmatprep.subr.bf16.mxu0 %v970
    %2471 = vmatpush1.bf16.msra.mxu0 %v969
    %2472 = vmatprep.subr.bf16.mxu0 0
    %2473 = vmatpush1.bf16.msra.mxu0 0
    %2474 = vmatprep.subr.bf16.mxu0 0
    %2475 = vmatpush1.bf16.msra.mxu0 0
    %2476 = vmatprep.subr.bf16.mxu0 0
    %2477 = vmatpush1.bf16.msra.mxu0 0
    %2478 = vmatprep.subr.bf16.mxu0 0
    %2479 = vmatpush1.bf16.msra.mxu0 0
    %2480 = vmatprep.subr.bf16.mxu0 0
    %2481 = vmatpush1.bf16.msra.mxu0 0
    %2482 = vmatprep.subr.bf16.mxu0 0
    %2483 = vmatpush1.bf16.msra.mxu0 0
    %2484 = vmatprep.subr.bf16.mxu0 0
    %2485 = vmatpush1.bf16.msra.mxu0 0
    %2486 = vmatprep.subr.bf16.mxu0 0
    %2487 = vmatpush1.bf16.msra.mxu0 0
    %2488 = vmatprep.mubr.bf16.mxu0 0
    %2489 = vmatmul.mubr.bf16.gmra.mrb[0].mxu0 %v2455
    %v2490 = vpop.f32.mrb[0].mxu0
    %v2491 = vadd.f32 0.0, %v2490
    %v2492 = vpop.f32.mrb[0].mxu0
    %v2493 = vadd.f32 0.0, %v2492
    %v2494 = vpop.f32.mrb[0].mxu0
    %v2495 = vpop.f32.mrb[0].mxu0
    %2496 = vdwg.mxu0
    %2497 = vmatprep.subr.bf16.mxu0 0
    %2498 = vmatpush1.bf16.msra.mxu0 %v950
    %2499 = vmatprep.subr.bf16.mxu0 0
    %2500 = vmatpush1.bf16.msra.mxu0 %v953
    %2501 = vmatprep.subr.bf16.mxu0 0
    %2502 = vmatpush1.bf16.msra.mxu0 %v956
    %2503 = vmatprep.subr.bf16.mxu0 0
    %2504 = vmatpush1.bf16.msra.mxu0 %v959
    %2505 = vmatprep.subr.bf16.mxu0 0
    %2506 = vmatpush1.bf16.msra.mxu0 %v962
    %2507 = vmatprep.subr.bf16.mxu0 0
    %2508 = vmatpush1.bf16.msra.mxu0 %v965
    %2509 = vmatprep.subr.bf16.mxu0 0
    %2510 = vmatpush1.bf16.msra.mxu0 %v968
    %2511 = vmatprep.subr.bf16.mxu0 0
    %2512 = vmatpush1.bf16.msra.mxu0 %v971
    %2513 = vmatprep.subr.bf16.mxu0 0
    %2514 = vmatpush1.bf16.msra.mxu0 0
    %2515 = vmatprep.subr.bf16.mxu0 0
    %2516 = vmatpush1.bf16.msra.mxu0 0
    %2517 = vmatprep.subr.bf16.mxu0 0
    %2518 = vmatpush1.bf16.msra.mxu0 0
    %2519 = vmatprep.subr.bf16.mxu0 0
    %2520 = vmatpush1.bf16.msra.mxu0 0
    %2521 = vmatprep.subr.bf16.mxu0 0
    %2522 = vmatpush1.bf16.msra.mxu0 0
    %2523 = vmatprep.subr.bf16.mxu0 0
    %2524 = vmatpush1.bf16.msra.mxu0 0
    %2525 = vmatprep.subr.bf16.mxu0 0
    %2526 = vmatpush1.bf16.msra.mxu0 0
    %2527 = vmatprep.subr.bf16.mxu0 0
    %2528 = vmatpush1.bf16.msra.mxu0 0
    %2529 = vmatprep.mubr.bf16.mxu0 0
    %2530 = vmatmul.mubr.bf16.gmra.mrb[0].mxu0 %v2455
    %v2531 = vpop.f32.mrb[0].mxu0
    %v2532 = vadd.f32 0.0, %v2531
    %v2533 = vpop.f32.mrb[0].mxu0
    %v2534 = vpop.f32.mrb[0].mxu0
    %v2535 = vpop.f32.mrb[0].mxu0
    %2536 = vdwg.mxu0
    %v2537 = vadd.f32 %v2491, %v2303
    %v2538 = vxor.u32 %v2537, 2147483648
    %v2539 = vmul.f32 %v2538, 1.442695
    %v2540 = vpow.pop %v2539
    %v2541 = vadd.f32 %v2540, 1.0
    %v2542 = vrcp.pop %v2541
    %v2543 = vmul.f32 1.0, %v2542
    %v2544 = vadd.f32 %v2493, %v2305
    %v2545 = vxor.u32 %v2544, 2147483648
    %v2546 = vmul.f32 %v2545, 1.442695
    %v2547 = vpow.pop %v2546
    %v2548 = vadd.f32 %v2547, 1.0
    %v2549 = vrcp.pop %v2548
    %v2550 = vmul.f32 1.0, %v2549
    %v2551 = vadd.f32 %v2532, %v326
    %v2552 = vmul.f32 %v2543, %v2344
    %v2553 = vadd.f32 %v2551, %v2552
    %v2554 = vtanh.pop %v2553
    %v2555 = vsub.f32 1.0, %v2550
    %v2556 = vmul.f32 %v2555, %v2554
    %v2557 = vmul.f32 %v2550, %v2266
    %v2558 = vadd.f32 %v2556, %v2557
    %v2559 = vpack.c.bf16 %v2558, %v2558
    %2560 = vmatprep.subr.bf16.mxu0 %v441
    %2561 = vmatpush1.bf16.msra.mxu0 %v440
    %2562 = vmatprep.subr.bf16.mxu0 %v444
    %2563 = vmatpush1.bf16.msra.mxu0 %v443
    %2564 = vmatprep.subr.bf16.mxu0 %v447
    %2565 = vmatpush1.bf16.msra.mxu0 %v446
    %2566 = vmatprep.subr.bf16.mxu0 %v450
    %2567 = vmatpush1.bf16.msra.mxu0 %v449
    %2568 = vmatprep.subr.bf16.mxu0 %v453
    %2569 = vmatpush1.bf16.msra.mxu0 %v452
    %2570 = vmatprep.subr.bf16.mxu0 %v456
    %2571 = vmatpush1.bf16.msra.mxu0 %v455
    %2572 = vmatprep.subr.bf16.mxu0 %v459
    %2573 = vmatpush1.bf16.msra.mxu0 %v458
    %2574 = vmatprep.subr.bf16.mxu0 %v462
    %2575 = vmatpush1.bf16.msra.mxu0 %v461
    %2576 = vmatprep.subr.bf16.mxu0 0
    %2577 = vmatpush1.bf16.msra.mxu0 0
    %2578 = vmatprep.subr.bf16.mxu0 0
    %2579 = vmatpush1.bf16.msra.mxu0 0
    %2580 = vmatprep.subr.bf16.mxu0 0
    %2581 = vmatpush1.bf16.msra.mxu0 0
    %2582 = vmatprep.subr.bf16.mxu0 0
    %2583 = vmatpush1.bf16.msra.mxu0 0
    %2584 = vmatprep.subr.bf16.mxu0 0
    %2585 = vmatpush1.bf16.msra.mxu0 0
    %2586 = vmatprep.subr.bf16.mxu0 0
    %2587 = vmatpush1.bf16.msra.mxu0 0
    %2588 = vmatprep.subr.bf16.mxu0 0
    %2589 = vmatpush1.bf16.msra.mxu0 0
    %2590 = vmatprep.subr.bf16.mxu0 0
    %2591 = vmatpush1.bf16.msra.mxu0 0
    %2592 = vmatprep.mubr.bf16.mxu0 0
    %2593 = vmatmul.mubr.bf16.gmra.mrb[0].mxu0 %v2559
    %v2594 = vpop.f32.mrb[0].mxu0
    %v2595 = vadd.f32 %v309, %v2594
    %v2596 = vpop.f32.mrb[0].mxu0
    %v2597 = vadd.f32 %v313, %v2596
    %v2598 = vpop.f32.mrb[0].mxu0
    %v2599 = vpop.f32.mrb[0].mxu0
    %2600 = vdwg.mxu0
    %2601 = vmatprep.subr.bf16.mxu0 0
    %2602 = vmatpush1.bf16.msra.mxu0 %v442
    %2603 = vmatprep.subr.bf16.mxu0 0
    %2604 = vmatpush1.bf16.msra.mxu0 %v445
    %2605 = vmatprep.subr.bf16.mxu0 0
    %2606 = vmatpush1.bf16.msra.mxu0 %v448
    %2607 = vmatprep.subr.bf16.mxu0 0
    %2608 = vmatpush1.bf16.msra.mxu0 %v451
    %2609 = vmatprep.subr.bf16.mxu0 0
    %2610 = vmatpush1.bf16.msra.mxu0 %v454
    %2611 = vmatprep.subr.bf16.mxu0 0
    %2612 = vmatpush1.bf16.msra.mxu0 %v457
    %2613 = vmatprep.subr.bf16.mxu0 0
    %2614 = vmatpush1.bf16.msra.mxu0 %v460
    %2615 = vmatprep.subr.bf16.mxu0 0
    %2616 = vmatpush1.bf16.msra.mxu0 %v463
    %2617 = vmatprep.subr.bf16.mxu0 0
    %2618 = vmatpush1.bf16.msra.mxu0 0
    %2619 = vmatprep.subr.bf16.mxu0 0
    %2620 = vmatpush1.bf16.msra.mxu0 0
    %2621 = vmatprep.subr.bf16.mxu0 0
    %2622 = vmatpush1.bf16.msra.mxu0 0
    %2623 = vmatprep.subr.bf16.mxu0 0
    %2624 = vmatpush1.bf16.msra.mxu0 0
    %2625 = vmatprep.subr.bf16.mxu0 0
    %2626 = vmatpush1.bf16.msra.mxu0 0
    %2627 = vmatprep.subr.bf16.mxu0 0
    %2628 = vmatpush1.bf16.msra.mxu0 0
    %2629 = vmatprep.subr.bf16.mxu0 0
    %2630 = vmatpush1.bf16.msra.mxu0 0
    %2631 = vmatprep.subr.bf16.mxu0 0
    %2632 = vmatpush1.bf16.msra.mxu0 0
    %2633 = vmatprep.mubr.bf16.mxu0 0
    %2634 = vmatmul.mubr.bf16.gmra.mrb[0].mxu0 %v2559
    %v2635 = vpop.f32.mrb[0].mxu0
    %v2636 = vadd.f32 %v317, %v2635
    %v2637 = vpop.f32.mrb[0].mxu0
    %v2638 = vpop.f32.mrb[0].mxu0
    %v2639 = vpop.f32.mrb[0].mxu0
    %2640 = vdwg.mxu0
    %2641 = vmatprep.subr.bf16.mxu0 %v682
    %2642 = vmatpush1.bf16.msra.mxu0 %v681
    %2643 = vmatprep.subr.bf16.mxu0 %v685
    %2644 = vmatpush1.bf16.msra.mxu0 %v684
    %2645 = vmatprep.subr.bf16.mxu0 %v688
    %2646 = vmatpush1.bf16.msra.mxu0 %v687
    %2647 = vmatprep.subr.bf16.mxu0 %v691
    %2648 = vmatpush1.bf16.msra.mxu0 %v690
    %2649 = vmatprep.subr.bf16.mxu0 %v694
    %2650 = vmatpush1.bf16.msra.mxu0 %v693
    %2651 = vmatprep.subr.bf16.mxu0 %v697
    %2652 = vmatpush1.bf16.msra.mxu0 %v696
    %2653 = vmatprep.subr.bf16.mxu0 %v700
    %2654 = vmatpush1.bf16.msra.mxu0 %v699
    %2655 = vmatprep.subr.bf16.mxu0 %v703
    %2656 = vmatpush1.bf16.msra.mxu0 %v702
    %2657 = vmatprep.subr.bf16.mxu0 0
    %2658 = vmatpush1.bf16.msra.mxu0 0
    %2659 = vmatprep.subr.bf16.mxu0 0
    %2660 = vmatpush1.bf16.msra.mxu0 0
    %2661 = vmatprep.subr.bf16.mxu0 0
    %2662 = vmatpush1.bf16.msra.mxu0 0
    %2663 = vmatprep.subr.bf16.mxu0 0
    %2664 = vmatpush1.bf16.msra.mxu0 0
    %2665 = vmatprep.subr.bf16.mxu0 0
    %2666 = vmatpush1.bf16.msra.mxu0 0
    %2667 = vmatprep.subr.bf16.mxu0 0
    %2668 = vmatpush1.bf16.msra.mxu0 0
    %2669 = vmatprep.subr.bf16.mxu0 0
    %2670 = vmatpush1.bf16.msra.mxu0 0
    %2671 = vmatprep.subr.bf16.mxu0 0
    %2672 = vmatpush1.bf16.msra.mxu0 0
    %2673 = vmatprep.mubr.bf16.mxu0 0
    %2674 = vmatmul.mubr.bf16.gmra.mrb[0].mxu0 %v2455
    %v2675 = vpop.f32.mrb[0].mxu0
    %v2676 = vadd.f32 %v285, %v2675
    %v2677 = vpop.f32.mrb[0].mxu0
    %v2678 = vadd.f32 %v289, %v2677
    %v2679 = vpop.f32.mrb[0].mxu0
    %v2680 = vpop.f32.mrb[0].mxu0
    %2681 = vdwg.mxu0
    %2682 = vmatprep.subr.bf16.mxu0 0
    %2683 = vmatpush1.bf16.msra.mxu0 %v683
    %2684 = vmatprep.subr.bf16.mxu0 0
    %2685 = vmatpush1.bf16.msra.mxu0 %v686
    %2686 = vmatprep.subr.bf16.mxu0 0
    %2687 = vmatpush1.bf16.msra.mxu0 %v689
    %2688 = vmatprep.subr.bf16.mxu0 0
    %2689 = vmatpush1.bf16.msra.mxu0 %v692
    %2690 = vmatprep.subr.bf16.mxu0 0
    %2691 = vmatpush1.bf16.msra.mxu0 %v695
    %2692 = vmatprep.subr.bf16.mxu0 0
    %2693 = vmatpush1.bf16.msra.mxu0 %v698
    %2694 = vmatprep.subr.bf16.mxu0 0
    %2695 = vmatpush1.bf16.msra.mxu0 %v701
    %2696 = vmatprep.subr.bf16.mxu0 0
    %2697 = vmatpush1.bf16.msra.mxu0 %v704
    %2698 = vmatprep.subr.bf16.mxu0 0
    %2699 = vmatpush1.bf16.msra.mxu0 0
    %2700 = vmatprep.subr.bf16.mxu0 0
    %2701 = vmatpush1.bf16.msra.mxu0 0
    %2702 = vmatprep.subr.bf16.mxu0 0
    %2703 = vmatpush1.bf16.msra.mxu0 0
    %2704 = vmatprep.subr.bf16.mxu0 0
    %2705 = vmatpush1.bf16.msra.mxu0 0
    %2706 = vmatprep.subr.bf16.mxu0 0
    %2707 = vmatpush1.bf16.msra.mxu0 0
    %2708 = vmatprep.subr.bf16.mxu0 0
    %2709 = vmatpush1.bf16.msra.mxu0 0
    %2710 = vmatprep.subr.bf16.mxu0 0
    %2711 = vmatpush1.bf16.msra.mxu0 0
    %2712 = vmatprep.subr.bf16.mxu0 0
    %2713 = vmatpush1.bf16.msra.mxu0 0
    %2714 = vmatprep.mubr.bf16.mxu0 0
    %2715 = vmatmul.mubr.bf16.gmra.mrb[0].mxu0 %v2455
    %v2716 = vpop.f32.mrb[0].mxu0
    %v2717 = vadd.f32 %v293, %v2716
    %v2718 = vpop.f32.mrb[0].mxu0
    %v2719 = vpop.f32.mrb[0].mxu0
    %v2720 = vpop.f32.mrb[0].mxu0
    %2721 = vdwg.mxu0
    %v2722 = vld [vmem:[#allocation2 + $0x90] sm:$0xff]
    %v2723 = vld [vmem:[#allocation2 + $0x98] sm:$0xff]
    %v2724 = vld [vmem:[#allocation2 + $0xa0] sm:$0xff]
    %v2725 = vadd.f32 %v2722, %v2676
    %v2726 = vxor.u32 %v2725, 2147483648
    %v2727 = vmul.f32 %v2726, 1.442695
    %v2728 = vpow.pop %v2727
    %v2729 = vadd.f32 %v2728, 1.0
    %v2730 = vrcp.pop %v2729
    %v2731 = vmul.f32 1.0, %v2730
    %v2732 = vadd.f32 %v2723, %v2678
    %v2733 = vxor.u32 %v2732, 2147483648
    %v2734 = vmul.f32 %v2733, 1.442695
    %v2735 = vpow.pop %v2734
    %v2736 = vadd.f32 %v2735, 1.0
    %v2737 = vrcp.pop %v2736
    %v2738 = vmul.f32 1.0, %v2737
    %v2739 = vadd.f32 %v2724, %v302
    %v2740 = vmul.f32 %v2731, %v2717
    %v2741 = vadd.f32 %v2739, %v2740
    %v2742 = vtanh.pop %v2741
    %v2743 = vsub.f32 1.0, %v2738
    %v2744 = vmul.f32 %v2743, %v2742
    %v2745 = vmul.f32 %v2738, %v2454
    %v2746 = vadd.f32 %v2744, %v2745
    %v2747 = vpack.c.bf16 %v2746, %v2746
    %2748 = vmatprep.subr.bf16.mxu0 %v949
    %2749 = vmatpush1.bf16.msra.mxu0 %v948
    %2750 = vmatprep.subr.bf16.mxu0 %v952
    %2751 = vmatpush1.bf16.msra.mxu0 %v951
    %2752 = vmatprep.subr.bf16.mxu0 %v955
    %2753 = vmatpush1.bf16.msra.mxu0 %v954
    %2754 = vmatprep.subr.bf16.mxu0 %v958
    %2755 = vmatpush1.bf16.msra.mxu0 %v957
    %2756 = vmatprep.subr.bf16.mxu0 %v961
    %2757 = vmatpush1.bf16.msra.mxu0 %v960
    %2758 = vmatprep.subr.bf16.mxu0 %v964
    %2759 = vmatpush1.bf16.msra.mxu0 %v963
    %2760 = vmatprep.subr.bf16.mxu0 %v967
    %2761 = vmatpush1.bf16.msra.mxu0 %v966
    %2762 = vmatprep.subr.bf16.mxu0 %v970
    %2763 = vmatpush1.bf16.msra.mxu0 %v969
    %2764 = vmatprep.subr.bf16.mxu0 0
    %2765 = vmatpush1.bf16.msra.mxu0 0
    %2766 = vmatprep.subr.bf16.mxu0 0
    %2767 = vmatpush1.bf16.msra.mxu0 0
    %2768 = vmatprep.subr.bf16.mxu0 0
    %2769 = vmatpush1.bf16.msra.mxu0 0
    %2770 = vmatprep.subr.bf16.mxu0 0
    %2771 = vmatpush1.bf16.msra.mxu0 0
    %2772 = vmatprep.subr.bf16.mxu0 0
    %2773 = vmatpush1.bf16.msra.mxu0 0
    %2774 = vmatprep.subr.bf16.mxu0 0
    %2775 = vmatpush1.bf16.msra.mxu0 0
    %2776 = vmatprep.subr.bf16.mxu0 0
    %2777 = vmatpush1.bf16.msra.mxu0 0
    %2778 = vmatprep.subr.bf16.mxu0 0
    %2779 = vmatpush1.bf16.msra.mxu0 0
    %2780 = vmatprep.mubr.bf16.mxu0 0
    %2781 = vmatmul.mubr.bf16.gmra.mrb[0].mxu0 %v2747
    %v2782 = vpop.f32.mrb[0].mxu0
    %v2783 = vadd.f32 0.0, %v2782
    %v2784 = vpop.f32.mrb[0].mxu0
    %v2785 = vadd.f32 0.0, %v2784
    %v2786 = vpop.f32.mrb[0].mxu0
    %v2787 = vpop.f32.mrb[0].mxu0
    %2788 = vdwg.mxu0
    %2789 = vmatprep.subr.bf16.mxu0 0
    %2790 = vmatpush1.bf16.msra.mxu0 %v950
    %2791 = vmatprep.subr.bf16.mxu0 0
    %2792 = vmatpush1.bf16.msra.mxu0 %v953
    %2793 = vmatprep.subr.bf16.mxu0 0
    %2794 = vmatpush1.bf16.msra.mxu0 %v956
    %2795 = vmatprep.subr.bf16.mxu0 0
    %2796 = vmatpush1.bf16.msra.mxu0 %v959
    %2797 = vmatprep.subr.bf16.mxu0 0
    %2798 = vmatpush1.bf16.msra.mxu0 %v962
    %2799 = vmatprep.subr.bf16.mxu0 0
    %2800 = vmatpush1.bf16.msra.mxu0 %v965
    %2801 = vmatprep.subr.bf16.mxu0 0
    %2802 = vmatpush1.bf16.msra.mxu0 %v968
    %2803 = vmatprep.subr.bf16.mxu0 0
    %2804 = vmatpush1.bf16.msra.mxu0 %v971
    %2805 = vmatprep.subr.bf16.mxu0 0
    %2806 = vmatpush1.bf16.msra.mxu0 0
    %2807 = vmatprep.subr.bf16.mxu0 0
    %2808 = vmatpush1.bf16.msra.mxu0 0
    %2809 = vmatprep.subr.bf16.mxu0 0
    %2810 = vmatpush1.bf16.msra.mxu0 0
    %2811 = vmatprep.subr.bf16.mxu0 0
    %2812 = vmatpush1.bf16.msra.mxu0 0
    %2813 = vmatprep.subr.bf16.mxu0 0
    %2814 = vmatpush1.bf16.msra.mxu0 0
    %2815 = vmatprep.subr.bf16.mxu0 0
    %2816 = vmatpush1.bf16.msra.mxu0 0
    %2817 = vmatprep.subr.bf16.mxu0 0
    %2818 = vmatpush1.bf16.msra.mxu0 0
    %2819 = vmatprep.subr.bf16.mxu0 0
    %2820 = vmatpush1.bf16.msra.mxu0 0
    %2821 = vmatprep.mubr.bf16.mxu0 0
    %2822 = vmatmul.mubr.bf16.gmra.mrb[0].mxu0 %v2747
    %v2823 = vpop.f32.mrb[0].mxu0
    %v2824 = vadd.f32 0.0, %v2823
    %v2825 = vpop.f32.mrb[0].mxu0
    %v2826 = vpop.f32.mrb[0].mxu0
    %v2827 = vpop.f32.mrb[0].mxu0
    %2828 = vdwg.mxu0
    %v2829 = vadd.f32 %v2783, %v2595
    %v2830 = vxor.u32 %v2829, 2147483648
    %v2831 = vmul.f32 %v2830, 1.442695
    %v2832 = vpow.pop %v2831
    %v2833 = vadd.f32 %v2832, 1.0
    %v2834 = vrcp.pop %v2833
    %v2835 = vmul.f32 1.0, %v2834
    %v2836 = vadd.f32 %v2785, %v2597
    %v2837 = vxor.u32 %v2836, 2147483648
    %v2838 = vmul.f32 %v2837, 1.442695
    %v2839 = vpow.pop %v2838
    %v2840 = vadd.f32 %v2839, 1.0
    %v2841 = vrcp.pop %v2840
    %v2842 = vmul.f32 1.0, %v2841
    %v2843 = vadd.f32 %v2824, %v326
    %v2844 = vmul.f32 %v2835, %v2636
    %v2845 = vadd.f32 %v2843, %v2844
    %v2846 = vtanh.pop %v2845
    %v2847 = vsub.f32 1.0, %v2842
    %v2848 = vmul.f32 %v2847, %v2846
    %v2849 = vmul.f32 %v2842, %v2558
    %v2850 = vadd.f32 %v2848, %v2849
    %v2851 = vpack.c.bf16 %v2850, %v2850
    %2852 = vmatprep.subr.bf16.mxu0 %v441
    %2853 = vmatpush1.bf16.msra.mxu0 %v440
    %2854 = vmatprep.subr.bf16.mxu0 %v444
    %2855 = vmatpush1.bf16.msra.mxu0 %v443
    %2856 = vmatprep.subr.bf16.mxu0 %v447
    %2857 = vmatpush1.bf16.msra.mxu0 %v446
    %2858 = vmatprep.subr.bf16.mxu0 %v450
    %2859 = vmatpush1.bf16.msra.mxu0 %v449
    %2860 = vmatprep.subr.bf16.mxu0 %v453
    %2861 = vmatpush1.bf16.msra.mxu0 %v452
    %2862 = vmatprep.subr.bf16.mxu0 %v456
    %2863 = vmatpush1.bf16.msra.mxu0 %v455
    %2864 = vmatprep.subr.bf16.mxu0 %v459
    %2865 = vmatpush1.bf16.msra.mxu0 %v458
    %2866 = vmatprep.subr.bf16.mxu0 %v462
    %2867 = vmatpush1.bf16.msra.mxu0 %v461
    %2868 = vmatprep.subr.bf16.mxu0 0
    %2869 = vmatpush1.bf16.msra.mxu0 0
    %2870 = vmatprep.subr.bf16.mxu0 0
    %2871 = vmatpush1.bf16.msra.mxu0 0
    %2872 = vmatprep.subr.bf16.mxu0 0
    %2873 = vmatpush1.bf16.msra.mxu0 0
    %2874 = vmatprep.subr.bf16.mxu0 0
    %2875 = vmatpush1.bf16.msra.mxu0 0
    %2876 = vmatprep.subr.bf16.mxu0 0
    %2877 = vmatpush1.bf16.msra.mxu0 0
    %2878 = vmatprep.subr.bf16.mxu0 0
    %2879 = vmatpush1.bf16.msra.mxu0 0
    %2880 = vmatprep.subr.bf16.mxu0 0
    %2881 = vmatpush1.bf16.msra.mxu0 0
    %2882 = vmatprep.subr.bf16.mxu0 0
    %2883 = vmatpush1.bf16.msra.mxu0 0
    %2884 = vmatprep.mubr.bf16.mxu0 0
    %2885 = vmatmul.mubr.bf16.gmra.mrb[0].mxu0 %v2851
    %v2886 = vpop.f32.mrb[0].mxu0
    %v2887 = vadd.f32 %v309, %v2886
    %v2888 = vpop.f32.mrb[0].mxu0
    %v2889 = vadd.f32 %v313, %v2888
    %v2890 = vpop.f32.mrb[0].mxu0
    %v2891 = vpop.f32.mrb[0].mxu0
    %2892 = vdwg.mxu0
    %2893 = vmatprep.subr.bf16.mxu0 0
    %2894 = vmatpush1.bf16.msra.mxu0 %v442
    %2895 = vmatprep.subr.bf16.mxu0 0
    %2896 = vmatpush1.bf16.msra.mxu0 %v445
    %2897 = vmatprep.subr.bf16.mxu0 0
    %2898 = vmatpush1.bf16.msra.mxu0 %v448
    %2899 = vmatprep.subr.bf16.mxu0 0
    %2900 = vmatpush1.bf16.msra.mxu0 %v451
    %2901 = vmatprep.subr.bf16.mxu0 0
    %2902 = vmatpush1.bf16.msra.mxu0 %v454
    %2903 = vmatprep.subr.bf16.mxu0 0
    %2904 = vmatpush1.bf16.msra.mxu0 %v457
    %2905 = vmatprep.subr.bf16.mxu0 0
    %2906 = vmatpush1.bf16.msra.mxu0 %v460
    %2907 = vmatprep.subr.bf16.mxu0 0
    %2908 = vmatpush1.bf16.msra.mxu0 %v463
    %2909 = vmatprep.subr.bf16.mxu0 0
    %2910 = vmatpush1.bf16.msra.mxu0 0
    %2911 = vmatprep.subr.bf16.mxu0 0
    %2912 = vmatpush1.bf16.msra.mxu0 0
    %2913 = vmatprep.subr.bf16.mxu0 0
    %2914 = vmatpush1.bf16.msra.mxu0 0
    %2915 = vmatprep.subr.bf16.mxu0 0
    %2916 = vmatpush1.bf16.msra.mxu0 0
    %2917 = vmatprep.subr.bf16.mxu0 0
    %2918 = vmatpush1.bf16.msra.mxu0 0
    %2919 = vmatprep.subr.bf16.mxu0 0
    %2920 = vmatpush1.bf16.msra.mxu0 0
    %2921 = vmatprep.subr.bf16.mxu0 0
    %2922 = vmatpush1.bf16.msra.mxu0 0
    %2923 = vmatprep.subr.bf16.mxu0 0
    %2924 = vmatpush1.bf16.msra.mxu0 0
    %2925 = vmatprep.mubr.bf16.mxu0 0
    %2926 = vmatmul.mubr.bf16.gmra.mrb[0].mxu0 %v2851
    %v2927 = vpop.f32.mrb[0].mxu0
    %v2928 = vadd.f32 %v317, %v2927
    %v2929 = vpop.f32.mrb[0].mxu0
    %v2930 = vpop.f32.mrb[0].mxu0
    %v2931 = vpop.f32.mrb[0].mxu0
    %2932 = vdwg.mxu0
    %2933 = vmatprep.subr.bf16.mxu0 %v682
    %2934 = vmatpush1.bf16.msra.mxu0 %v681
    %2935 = vmatprep.subr.bf16.mxu0 %v685
    %2936 = vmatpush1.bf16.msra.mxu0 %v684
    %2937 = vmatprep.subr.bf16.mxu0 %v688
    %2938 = vmatpush1.bf16.msra.mxu0 %v687
    %2939 = vmatprep.subr.bf16.mxu0 %v691
    %2940 = vmatpush1.bf16.msra.mxu0 %v690
    %2941 = vmatprep.subr.bf16.mxu0 %v694
    %2942 = vmatpush1.bf16.msra.mxu0 %v693
    %2943 = vmatprep.subr.bf16.mxu0 %v697
    %2944 = vmatpush1.bf16.msra.mxu0 %v696
    %2945 = vmatprep.subr.bf16.mxu0 %v700
    %2946 = vmatpush1.bf16.msra.mxu0 %v699
    %2947 = vmatprep.subr.bf16.mxu0 %v703
    %2948 = vmatpush1.bf16.msra.mxu0 %v702
    %2949 = vmatprep.subr.bf16.mxu0 0
    %2950 = vmatpush1.bf16.msra.mxu0 0
    %2951 = vmatprep.subr.bf16.mxu0 0
    %2952 = vmatpush1.bf16.msra.mxu0 0
    %2953 = vmatprep.subr.bf16.mxu0 0
    %2954 = vmatpush1.bf16.msra.mxu0 0
    %2955 = vmatprep.subr.bf16.mxu0 0
    %2956 = vmatpush1.bf16.msra.mxu0 0
    %2957 = vmatprep.subr.bf16.mxu0 0
    %2958 = vmatpush1.bf16.msra.mxu0 0
    %2959 = vmatprep.subr.bf16.mxu0 0
    %2960 = vmatpush1.bf16.msra.mxu0 0
    %2961 = vmatprep.subr.bf16.mxu0 0
    %2962 = vmatpush1.bf16.msra.mxu0 0
    %2963 = vmatprep.subr.bf16.mxu0 0
    %2964 = vmatpush1.bf16.msra.mxu0 0
    %2965 = vmatprep.mubr.bf16.mxu0 0
    %2966 = vmatmul.mubr.bf16.gmra.mrb[0].mxu0 %v2747
    %v2967 = vpop.f32.mrb[0].mxu0
    %v2968 = vadd.f32 %v285, %v2967
    %v2969 = vpop.f32.mrb[0].mxu0
    %v2970 = vadd.f32 %v289, %v2969
    %v2971 = vpop.f32.mrb[0].mxu0
    %v2972 = vpop.f32.mrb[0].mxu0
    %2973 = vdwg.mxu0
    %2974 = vmatprep.subr.bf16.mxu0 0
    %2975 = vmatpush1.bf16.msra.mxu0 %v683
    %2976 = vmatprep.subr.bf16.mxu0 0
    %2977 = vmatpush1.bf16.msra.mxu0 %v686
    %2978 = vmatprep.subr.bf16.mxu0 0
    %2979 = vmatpush1.bf16.msra.mxu0 %v689
    %2980 = vmatprep.subr.bf16.mxu0 0
    %2981 = vmatpush1.bf16.msra.mxu0 %v692
    %2982 = vmatprep.subr.bf16.mxu0 0
    %2983 = vmatpush1.bf16.msra.mxu0 %v695
    %2984 = vmatprep.subr.bf16.mxu0 0
    %2985 = vmatpush1.bf16.msra.mxu0 %v698
    %2986 = vmatprep.subr.bf16.mxu0 0
    %2987 = vmatpush1.bf16.msra.mxu0 %v701
    %2988 = vmatprep.subr.bf16.mxu0 0
    %2989 = vmatpush1.bf16.msra.mxu0 %v704
    %2990 = vmatprep.subr.bf16.mxu0 0
    %2991 = vmatpush1.bf16.msra.mxu0 0
    %2992 = vmatprep.subr.bf16.mxu0 0
    %2993 = vmatpush1.bf16.msra.mxu0 0
    %2994 = vmatprep.subr.bf16.mxu0 0
    %2995 = vmatpush1.bf16.msra.mxu0 0
    %2996 = vmatprep.subr.bf16.mxu0 0
    %2997 = vmatpush1.bf16.msra.mxu0 0
    %2998 = vmatprep.subr.bf16.mxu0 0
    %2999 = vmatpush1.bf16.msra.mxu0 0
    %3000 = vmatprep.subr.bf16.mxu0 0
    %3001 = vmatpush1.bf16.msra.mxu0 0
    %3002 = vmatprep.subr.bf16.mxu0 0
    %3003 = vmatpush1.bf16.msra.mxu0 0
    %3004 = vmatprep.subr.bf16.mxu0 0
    %3005 = vmatpush1.bf16.msra.mxu0 0
    %3006 = vmatprep.mubr.bf16.mxu0 0
    %3007 = vmatmul.mubr.bf16.gmra.mrb[0].mxu0 %v2747
    %v3008 = vpop.f32.mrb[0].mxu0
    %v3009 = vadd.f32 %v293, %v3008
    %v3010 = vpop.f32.mrb[0].mxu0
    %v3011 = vpop.f32.mrb[0].mxu0
    %v3012 = vpop.f32.mrb[0].mxu0
    %3013 = vdwg.mxu0
    %v3014 = vld [vmem:[#allocation2 + $0xa8] sm:$0xff]
    %v3015 = vld [vmem:[#allocation2 + $0xb0] sm:$0xff]
    %v3016 = vld [vmem:[#allocation2 + $0xb8] sm:$0xff]
    %v3017 = vadd.f32 %v3014, %v2968
    %v3018 = vxor.u32 %v3017, 2147483648
    %v3019 = vmul.f32 %v3018, 1.442695
    %v3020 = vpow.pop %v3019
    %v3021 = vadd.f32 %v3020, 1.0
    %v3022 = vrcp.pop %v3021
    %v3023 = vmul.f32 1.0, %v3022
    %v3024 = vadd.f32 %v3015, %v2970
    %v3025 = vxor.u32 %v3024, 2147483648
    %v3026 = vmul.f32 %v3025, 1.442695
    %v3027 = vpow.pop %v3026
    %v3028 = vadd.f32 %v3027, 1.0
    %v3029 = vrcp.pop %v3028
    %v3030 = vmul.f32 1.0, %v3029
    %v3031 = vadd.f32 %v3016, %v302
    %v3032 = vmul.f32 %v3023, %v3009
    %v3033 = vadd.f32 %v3031, %v3032
    %v3034 = vtanh.pop %v3033
    %v3035 = vsub.f32 1.0, %v3030
    %v3036 = vmul.f32 %v3035, %v3034
    %v3037 = vmul.f32 %v3030, %v2746
    %v3038 = vadd.f32 %v3036, %v3037
    %v3039 = vpack.c.bf16 %v3038, %v3038
    %3040 = vmatprep.subr.bf16.mxu0 %v949
    %3041 = vmatpush1.bf16.msra.mxu0 %v948
    %3042 = vmatprep.subr.bf16.mxu0 %v952
    %3043 = vmatpush1.bf16.msra.mxu0 %v951
    %3044 = vmatprep.subr.bf16.mxu0 %v955
    %3045 = vmatpush1.bf16.msra.mxu0 %v954
    %3046 = vmatprep.subr.bf16.mxu0 %v958
    %3047 = vmatpush1.bf16.msra.mxu0 %v957
    %3048 = vmatprep.subr.bf16.mxu0 %v961
    %3049 = vmatpush1.bf16.msra.mxu0 %v960
    %3050 = vmatprep.subr.bf16.mxu0 %v964
    %3051 = vmatpush1.bf16.msra.mxu0 %v963
    %3052 = vmatprep.subr.bf16.mxu0 %v967
    %3053 = vmatpush1.bf16.msra.mxu0 %v966
    %3054 = vmatprep.subr.bf16.mxu0 %v970
    %3055 = vmatpush1.bf16.msra.mxu0 %v969
    %3056 = vmatprep.subr.bf16.mxu0 0
    %3057 = vmatpush1.bf16.msra.mxu0 0
    %3058 = vmatprep.subr.bf16.mxu0 0
    %3059 = vmatpush1.bf16.msra.mxu0 0
    %3060 = vmatprep.subr.bf16.mxu0 0
    %3061 = vmatpush1.bf16.msra.mxu0 0
    %3062 = vmatprep.subr.bf16.mxu0 0
    %3063 = vmatpush1.bf16.msra.mxu0 0
    %3064 = vmatprep.subr.bf16.mxu0 0
    %3065 = vmatpush1.bf16.msra.mxu0 0
    %3066 = vmatprep.subr.bf16.mxu0 0
    %3067 = vmatpush1.bf16.msra.mxu0 0
    %3068 = vmatprep.subr.bf16.mxu0 0
    %3069 = vmatpush1.bf16.msra.mxu0 0
    %3070 = vmatprep.subr.bf16.mxu0 0
    %3071 = vmatpush1.bf16.msra.mxu0 0
    %3072 = vmatprep.mubr.bf16.mxu0 0
    %3073 = vmatmul.mubr.bf16.gmra.mrb[0].mxu0 %v3039
    %v3074 = vpop.f32.mrb[0].mxu0
    %v3075 = vadd.f32 0.0, %v3074
    %v3076 = vpop.f32.mrb[0].mxu0
    %v3077 = vadd.f32 0.0, %v3076
    %v3078 = vpop.f32.mrb[0].mxu0
    %v3079 = vpop.f32.mrb[0].mxu0
    %3080 = vdwg.mxu0
    %3081 = vmatprep.subr.bf16.mxu0 0
    %3082 = vmatpush1.bf16.msra.mxu0 %v950
    %3083 = vmatprep.subr.bf16.mxu0 0
    %3084 = vmatpush1.bf16.msra.mxu0 %v953
    %3085 = vmatprep.subr.bf16.mxu0 0
    %3086 = vmatpush1.bf16.msra.mxu0 %v956
    %3087 = vmatprep.subr.bf16.mxu0 0
    %3088 = vmatpush1.bf16.msra.mxu0 %v959
    %3089 = vmatprep.subr.bf16.mxu0 0
    %3090 = vmatpush1.bf16.msra.mxu0 %v962
    %3091 = vmatprep.subr.bf16.mxu0 0
    %3092 = vmatpush1.bf16.msra.mxu0 %v965
    %3093 = vmatprep.subr.bf16.mxu0 0
    %3094 = vmatpush1.bf16.msra.mxu0 %v968
    %3095 = vmatprep.subr.bf16.mxu0 0
    %3096 = vmatpush1.bf16.msra.mxu0 %v971
    %3097 = vmatprep.subr.bf16.mxu0 0
    %3098 = vmatpush1.bf16.msra.mxu0 0
    %3099 = vmatprep.subr.bf16.mxu0 0
    %3100 = vmatpush1.bf16.msra.mxu0 0
    %3101 = vmatprep.subr.bf16.mxu0 0
    %3102 = vmatpush1.bf16.msra.mxu0 0
    %3103 = vmatprep.subr.bf16.mxu0 0
    %3104 = vmatpush1.bf16.msra.mxu0 0
    %3105 = vmatprep.subr.bf16.mxu0 0
    %3106 = vmatpush1.bf16.msra.mxu0 0
    %3107 = vmatprep.subr.bf16.mxu0 0
    %3108 = vmatpush1.bf16.msra.mxu0 0
    %3109 = vmatprep.subr.bf16.mxu0 0
    %3110 = vmatpush1.bf16.msra.mxu0 0
    %3111 = vmatprep.subr.bf16.mxu0 0
    %3112 = vmatpush1.bf16.msra.mxu0 0
    %3113 = vmatprep.mubr.bf16.mxu0 0
    %3114 = vmatmul.mubr.bf16.gmra.mrb[0].mxu0 %v3039
    %v3115 = vpop.f32.mrb[0].mxu0
    %v3116 = vadd.f32 0.0, %v3115
    %v3117 = vpop.f32.mrb[0].mxu0
    %v3118 = vpop.f32.mrb[0].mxu0
    %v3119 = vpop.f32.mrb[0].mxu0
    %3120 = vdwg.mxu0
    %v3121 = vadd.f32 %v3075, %v2887
    %v3122 = vxor.u32 %v3121, 2147483648
    %v3123 = vmul.f32 %v3122, 1.442695
    %v3124 = vpow.pop %v3123
    %v3125 = vadd.f32 %v3124, 1.0
    %v3126 = vrcp.pop %v3125
    %v3127 = vmul.f32 1.0, %v3126
    %v3128 = vadd.f32 %v3077, %v2889
    %v3129 = vxor.u32 %v3128, 2147483648
    %v3130 = vmul.f32 %v3129, 1.442695
    %v3131 = vpow.pop %v3130
    %v3132 = vadd.f32 %v3131, 1.0
    %v3133 = vrcp.pop %v3132
    %v3134 = vmul.f32 1.0, %v3133
    %v3135 = vadd.f32 %v3116, %v326
    %v3136 = vmul.f32 %v3127, %v2928
    %v3137 = vadd.f32 %v3135, %v3136
    %v3138 = vtanh.pop %v3137
    %v3139 = vsub.f32 1.0, %v3134
    %v3140 = vmul.f32 %v3139, %v3138
    %v3141 = vmul.f32 %v3134, %v2850
    %v3142 = vadd.f32 %v3140, %v3141
    %v3143 = vadd.f32 %v3038, %v3142
    %v3144 = vmul.f32 %v3143, 0.5
    %v3145 = vpack.c.bf16 %v3144, %v3144
    %v3146 = vld [vmem:[#allocation5] sm:$0xf]
    %v3147 = vld [vmem:[#allocation5 + $0x4] sm:$0xf]
    %v3148 = vld [vmem:[#allocation5 + $0x8] sm:$0xf]
    %v3149 = vld [vmem:[#allocation5 + $0xc] sm:$0xf]
    %v3150 = vld [vmem:[#allocation5 + $0x10] sm:$0xf]
    %v3151 = vld [vmem:[#allocation5 + $0x14] sm:$0xf]
    %v3152 = vld [vmem:[#allocation5 + $0x18] sm:$0xf]
    %v3153 = vld [vmem:[#allocation5 + $0x1c] sm:$0xf]
    %v3154 = vld [vmem:[#allocation5 + $0x20] sm:$0xf]
    %v3155 = vld [vmem:[#allocation5 + $0x24] sm:$0xf]
    %v3156 = vld [vmem:[#allocation5 + $0x28] sm:$0xf]
    %v3157 = vld [vmem:[#allocation5 + $0x2c] sm:$0xf]
    %v3158 = vld [vmem:[#allocation5 + $0x30] sm:$0xf]
    %v3159 = vld [vmem:[#allocation5 + $0x34] sm:$0xf]
    %v3160 = vld [vmem:[#allocation5 + $0x38] sm:$0xf]
    %v3161 = vld [vmem:[#allocation5 + $0x3c] sm:$0xf]
    %v3162 = vld [vmem:[%s4 + $0x8] sm:$0x1]
    %v3164 = vlaneseq
    %v3165 = vshrl.u32 %v3164, 7
    %v3166 = vsub.s32 0, %v3165
    %v3167 = vrot.slane %v3162, %v3166
    %v3185 = vunpack.c.l.b16 %v3146
    %v3186 = vunpack.c.l.b16 %v3147
    %v3187 = vunpack.c.l.b16 %v3148
    %v3188 = vunpack.c.l.b16 %v3149
    %v3189 = vunpack.c.l.b16 %v3150
    %v3190 = vunpack.c.l.b16 %v3151
    %v3191 = vunpack.c.l.b16 %v3152
    %v3192 = vunpack.c.l.b16 %v3153
    %v3193 = vunpack.c.l.b16 %v3154
    %v3194 = vunpack.c.l.b16 %v3155
    %v3195 = vunpack.c.l.b16 %v3156
    %v3196 = vunpack.c.l.b16 %v3157
    %v3197 = vunpack.c.l.b16 %v3158
    %v3198 = vunpack.c.l.b16 %v3159
    %v3199 = vunpack.c.l.b16 %v3160
    %v3200 = vunpack.c.l.b16 %v3161
    %v3201 = vpack.c.b16 %v3186, %v3185
    %v3202 = vpack.c.b16 %v3188, %v3187
    %v3203 = vpack.c.b16 %v3190, %v3189
    %v3204 = vpack.c.b16 %v3192, %v3191
    %v3205 = vpack.c.b16 %v3194, %v3193
    %v3206 = vpack.c.b16 %v3196, %v3195
    %v3207 = vpack.c.b16 %v3198, %v3197
    %v3208 = vpack.c.b16 %v3200, %v3199
    %3217 = vmatprep.subr.bf16.mxu0 0
    %3218 = vmatpush1.bf16.msra.mxu0 %v3201
    %3219 = vmatprep.subr.bf16.mxu0 0
    %3220 = vmatpush1.bf16.msra.mxu0 %v3202
    %3221 = vmatprep.subr.bf16.mxu0 0
    %3222 = vmatpush1.bf16.msra.mxu0 %v3203
    %3223 = vmatprep.subr.bf16.mxu0 0
    %3224 = vmatpush1.bf16.msra.mxu0 %v3204
    %3225 = vmatprep.subr.bf16.mxu0 0
    %3226 = vmatpush1.bf16.msra.mxu0 %v3205
    %3227 = vmatprep.subr.bf16.mxu0 0
    %3228 = vmatpush1.bf16.msra.mxu0 %v3206
    %3229 = vmatprep.subr.bf16.mxu0 0
    %3230 = vmatpush1.bf16.msra.mxu0 %v3207
    %3231 = vmatprep.subr.bf16.mxu0 0
    %3232 = vmatpush1.bf16.msra.mxu0 %v3208
    %3233 = vmatprep.subr.bf16.mxu0 0
    %3234 = vmatpush1.bf16.msra.mxu0 0
    %3235 = vmatprep.subr.bf16.mxu0 0
    %3236 = vmatpush1.bf16.msra.mxu0 0
    %3237 = vmatprep.subr.bf16.mxu0 0
    %3238 = vmatpush1.bf16.msra.mxu0 0
    %3239 = vmatprep.subr.bf16.mxu0 0
    %3240 = vmatpush1.bf16.msra.mxu0 0
    %3241 = vmatprep.subr.bf16.mxu0 0
    %3242 = vmatpush1.bf16.msra.mxu0 0
    %3243 = vmatprep.subr.bf16.mxu0 0
    %3244 = vmatpush1.bf16.msra.mxu0 0
    %3245 = vmatprep.subr.bf16.mxu0 0
    %3246 = vmatpush1.bf16.msra.mxu0 0
    %3247 = vmatprep.subr.bf16.mxu0 0
    %3248 = vmatpush1.bf16.msra.mxu0 0
    %3249 = vmatprep.mubr.bf16.mxu0 0
    %3250 = vmatmul.mubr.bf16.gmra.mrb[0].mxu0 %v3145
    %v3251 = vpop.f32.mrb[0].mxu0
    %v3252 = vadd.f32 %v3167, %v3251
    %v3253 = vpop.f32.mrb[0].mxu0
    %v3254 = vpop.f32.mrb[0].mxu0
    %v3255 = vpop.f32.mrb[0].mxu0
    %3256 = vdwg.mxu0
    %v3257 = vmax.f32 %v3252, 0.0
    %v3258 = vpack.c.bf16 %v3257, %v3257
    %v3259 = vld [vmem:[#allocation5 + $0x40] sm:$0xf]
    %v3260 = vld [vmem:[#allocation5 + $0x44] sm:$0xf]
    %v3261 = vld [vmem:[#allocation5 + $0x48] sm:$0xf]
    %v3262 = vld [vmem:[#allocation5 + $0x4c] sm:$0xf]
    %v3263 = vld [vmem:[#allocation5 + $0x50] sm:$0xf]
    %v3264 = vld [vmem:[#allocation5 + $0x54] sm:$0xf]
    %v3265 = vld [vmem:[#allocation5 + $0x58] sm:$0xf]
    %v3266 = vld [vmem:[#allocation5 + $0x5c] sm:$0xf]
    %v3267 = vld [vmem:[#allocation5 + $0x60] sm:$0xf]
    %v3268 = vld [vmem:[#allocation5 + $0x64] sm:$0xf]
    %v3269 = vld [vmem:[#allocation5 + $0x68] sm:$0xf]
    %v3270 = vld [vmem:[#allocation5 + $0x6c] sm:$0xf]
    %v3271 = vld [vmem:[#allocation5 + $0x70] sm:$0xf]
    %v3272 = vld [vmem:[#allocation5 + $0x74] sm:$0xf]
    %v3273 = vld [vmem:[#allocation5 + $0x78] sm:$0xf]
    %v3274 = vld [vmem:[#allocation5 + $0x7c] sm:$0xf]
    %v3275 = vld [vmem:[%s4 + $0x9] sm:$0x1]
    %v3277 = vlaneseq
    %v3278 = vshrl.u32 %v3277, 7
    %v3279 = vsub.s32 0, %v3278
    %v3280 = vrot.slane %v3275, %v3279
    %v3298 = vunpack.c.l.b16 %v3259
    %v3299 = vunpack.c.l.b16 %v3260
    %v3300 = vunpack.c.l.b16 %v3261
    %v3301 = vunpack.c.l.b16 %v3262
    %v3302 = vunpack.c.l.b16 %v3263
    %v3303 = vunpack.c.l.b16 %v3264
    %v3304 = vunpack.c.l.b16 %v3265
    %v3305 = vunpack.c.l.b16 %v3266
    %v3306 = vunpack.c.l.b16 %v3267
    %v3307 = vunpack.c.l.b16 %v3268
    %v3308 = vunpack.c.l.b16 %v3269
    %v3309 = vunpack.c.l.b16 %v3270
    %v3310 = vunpack.c.l.b16 %v3271
    %v3311 = vunpack.c.l.b16 %v3272
    %v3312 = vunpack.c.l.b16 %v3273
    %v3313 = vunpack.c.l.b16 %v3274
    %v3314 = vpack.c.b16 %v3299, %v3298
    %v3315 = vpack.c.b16 %v3301, %v3300
    %v3316 = vpack.c.b16 %v3303, %v3302
    %v3317 = vpack.c.b16 %v3305, %v3304
    %v3318 = vpack.c.b16 %v3307, %v3306
    %v3319 = vpack.c.b16 %v3309, %v3308
    %v3320 = vpack.c.b16 %v3311, %v3310
    %v3321 = vpack.c.b16 %v3313, %v3312
    %3330 = vmatprep.subr.bf16.mxu0 0
    %3331 = vmatpush1.bf16.msra.mxu0 %v3314
    %3332 = vmatprep.subr.bf16.mxu0 0
    %3333 = vmatpush1.bf16.msra.mxu0 %v3315
    %3334 = vmatprep.subr.bf16.mxu0 0
    %3335 = vmatpush1.bf16.msra.mxu0 %v3316
    %3336 = vmatprep.subr.bf16.mxu0 0
    %3337 = vmatpush1.bf16.msra.mxu0 %v3317
    %3338 = vmatprep.subr.bf16.mxu0 0
    %3339 = vmatpush1.bf16.msra.mxu0 %v3318
    %3340 = vmatprep.subr.bf16.mxu0 0
    %3341 = vmatpush1.bf16.msra.mxu0 %v3319
    %3342 = vmatprep.subr.bf16.mxu0 0
    %3343 = vmatpush1.bf16.msra.mxu0 %v3320
    %3344 = vmatprep.subr.bf16.mxu0 0
    %3345 = vmatpush1.bf16.msra.mxu0 %v3321
    %3346 = vmatprep.subr.bf16.mxu0 0
    %3347 = vmatpush1.bf16.msra.mxu0 0
    %3348 = vmatprep.subr.bf16.mxu0 0
    %3349 = vmatpush1.bf16.msra.mxu0 0
    %3350 = vmatprep.subr.bf16.mxu0 0
    %3351 = vmatpush1.bf16.msra.mxu0 0
    %3352 = vmatprep.subr.bf16.mxu0 0
    %3353 = vmatpush1.bf16.msra.mxu0 0
    %3354 = vmatprep.subr.bf16.mxu0 0
    %3355 = vmatpush1.bf16.msra.mxu0 0
    %3356 = vmatprep.subr.bf16.mxu0 0
    %3357 = vmatpush1.bf16.msra.mxu0 0
    %3358 = vmatprep.subr.bf16.mxu0 0
    %3359 = vmatpush1.bf16.msra.mxu0 0
    %3360 = vmatprep.subr.bf16.mxu0 0
    %3361 = vmatpush1.bf16.msra.mxu0 0
    %3362 = vmatprep.mubr.bf16.mxu0 0
    %3363 = vmatmul.mubr.bf16.gmra.mrb[0].mxu0 %v3258
    %v3364 = vpop.f32.mrb[0].mxu0
    %v3365 = vadd.f32 %v3280, %v3364
    %v3366 = vpop.f32.mrb[0].mxu0
    %v3367 = vpop.f32.mrb[0].mxu0
    %v3368 = vpop.f32.mrb[0].mxu0
    %3369 = vdwg.mxu0
    %v3370 = vlaneseq
    %v3371 = vand.u32 %v3370, 127
    %vm3372 = vcmp.lt.s32.totalorder %v3371, 4
    %v3373 = vsel %vm3372, %v3365, -1e+30
    %3374 = vmax.xlane.f32.xlu0 %v3373
    %v3375 = vpop.xlane.xlu0 %3374
    %v3376 = vsub.f32 %v3373, %v3375
    %v3377 = vmul.f32 %v3376, 1.442695
    %v3378 = vpow.pop %v3377
    %3379 = vadd.xlane.f32.xlu0 %v3378
    %v3380 = vpop.xlane.xlu0 %3379
    %v3381 = vrcp.pop %v3380
    %v3382 = vmul.f32 %v3378, %v3381
    %3383 = vst [vmem:[%s5] sm:$0xff] %v3382
    // Predicated region
    $region30: #{actor_forward.1} parent=1 // pred_check
      _
    $region31: #{actor_forward.1} parent=1 // pred_check_branch
      %3385 = sbr.rel (0) target = $region33
    $region32: #{actor_forward.1} parent=1 // pred_region
      _
    $region33: #{actor_forward.1} parent=1 // pred_fallthru
      _
    // Predicated region
    $region34: #{actor_forward.1} parent=1 // pred_check
      _
    $region35: #{actor_forward.1} parent=1 // pred_check_branch
      %3387 = sbr.rel (0) target = $region37
    $region36: #{actor_forward.1} parent=1 // pred_region
      _
    $region37: #{actor_forward.1} parent=1 // pred_fallthru
      _
    %3388 = vsyncpa [#allocation4], 1
    %3389 = vsyncpa [#allocation6], 1

</llo_original>
